<compile_context>
chip_gen: v6e
topology: v6e:2x2x1
jax: 0.10.0
libtpu: 0.0.40
codegen_flags: <defaults>
</compile_context>

<pallas_src>
import functools
import math

import numpy as np
import jax
import jax.numpy as jnp
from jax import lax
from jax.experimental import pallas as pl
from jax.experimental.pallas import tpu as pltpu

EPS = 1e-5

# Row indices into the stacked per-channel vector table passed to the kernel.
_BV, _GV, _BEV, _BV2, _BH, _GH, _BEH, _BH2, _GM, _BEM, _BM2, _BSK = range(12)


def _live_taps(kernel_size, mask_center):
    K = int(kernel_size)
    n_vrows = K // 2 + (0 if mask_center else 1)   # rows kept by mask_v
    n_hcols = K // 2 + (0 if mask_center else 1)   # cols kept by mask_h
    return n_vrows, n_hcols


def _make_masks(K0, K1, mask_center):
    mask_v = np.ones((K0, K1), np.float32)
    mask_v[K0 // 2 + 1:, :] = 0
    mask_h = np.ones((K1,), np.float32)
    mask_h[K1 // 2 + 1:] = 0
    if mask_center:
        mask_v[K0 // 2, :] = 0
        mask_h[K1 // 2] = 0
    return mask_v, mask_h


# ----------------------------------------------------------------------------
# Pallas kernel: one tile of TR rows x W pixels.  Column taps are applied via
# static slices of the W-padded tiles + per-tap MXU accumulation; everything
# else (norm / SiLU / bias) runs in f32 on the VPU / EUP.
# ----------------------------------------------------------------------------
def _masked_block_kernel(
    v_ref, h_ref,
    wv_ref, wh_ref, wv2_ref, wh2_ref, wm1_ref, wm2_ref,
    vec_ref, bm1_ref, *rest,
    W, PW, dil, n_vcol, n_hcol, inv_cout, skip_identity, compute_dtype):
    if skip_identity:
        (out_ref,) = rest
        wsk_ref = None
    else:
        wsk_ref, out_ref = rest

    f32 = jnp.float32
    COUT = vec_ref.shape[1]
    TR = v_ref.shape[0]
    NP = TR * W                      # pixels in this tile

    def vrow(i):                     # (1, COUT) f32 — static slice, no runtime cost
        return vec_ref[i:i + 1, :]

    def cnorm(x, g_i, b_i):
        # Two-pass (centered) variance: avoids E[x^2]-mu^2 cancellation.
        mu = jnp.sum(x, axis=-1, keepdims=True) * inv_cout
        d = x - mu
        var = jnp.sum(d * d, axis=-1, keepdims=True) * inv_cout
        return d * lax.rsqrt(var + EPS) * vrow(g_i) + vrow(b_i)

    def silu(x):
        # sigmoid via tanh: one EUP op, no VALU divide.
        return x * (0.5 * jnp.tanh(0.5 * x) + 0.5)

    def conv_taps(src_ref, w_ref, n_taps):
        # Per-column-tap matmul accumulation over the W-padded tile.
        acc = jnp.zeros((NP, COUT), f32)
        for kw in range(n_taps):
            xt = src_ref[:, kw * dil:kw * dil + W, :].reshape(NP, -1)
            acc = acc + jnp.dot(xt.astype(compute_dtype), w_ref[kw],
                                preferred_element_type=f32)
        return acc

    # ---- conv_v branch: masked conv (rows pre-gathered) -> Norm -> SiLU -> 1x1
    v = conv_taps(v_ref, wv_ref, n_vcol) + vrow(_BV)
    v = silu(cnorm(v, _GV, _BEV))
    v = jnp.dot(v.astype(compute_dtype), wv2_ref[...],
                preferred_element_type=f32) + vrow(_BV2)

    # ---- conv_h branch: masked 1xK conv -> Norm -> SiLU -> 1x1 --------------
    hb = conv_taps(h_ref, wh_ref, n_hcol) + vrow(_BH)
    hb = silu(cnorm(hb, _GH, _BEH))
    hb = jnp.dot(hb.astype(compute_dtype), wh2_ref[...],
                 preferred_element_type=f32) + vrow(_BH2)

    # ---- merge(conv_h(h)+v): Norm -> 1x1(4x) -> SiLU -> (Dropout=id) -> 1x1 -
    m = cnorm(hb + v, _GM, _BEM)
    m = jnp.dot(m.astype(compute_dtype), wm1_ref[...],
                preferred_element_type=f32) + bm1_ref[...]
    m = silu(m)
    m = jnp.dot(m.astype(compute_dtype), wm2_ref[...],
                preferred_element_type=f32) + vrow(_BM2)

    # ---- skip connection: center columns of the padded h tile ---------------
    h_c = h_ref[:, PW:PW + W, :].reshape(NP, -1)
    if skip_identity:
        h_skip = h_c.astype(f32)                 # exact residual (h stream is f32)
    else:
        h_skip = jnp.dot(h_c.astype(compute_dtype), wsk_ref[...],
                         preferred_element_type=f32) + vrow(_BSK)

    # Two static-slice stores into the single lane-dense [h_out | v_out] slab.
    out_ref[:, :COUT] = (h_skip + m).astype(out_ref.dtype)
    out_ref[:, COUT:] = v.astype(out_ref.dtype)


# ----------------------------------------------------------------------------
# One-time parameter packing (hoisted out of the per-call wrapper).
# ----------------------------------------------------------------------------
def pack_params(params, *, kernel_size=3, mask_center=False,
                compute_dtype=jnp.bfloat16):
    K = int(kernel_size)
    n_vrows, n_hcols = _live_taps(K, mask_center)
    assert n_vrows >= 1 and n_hcols >= 1
    wv, wh = params["wv"], params["wh"]            # (O,I,K,K) / (O,I,1,K)
    COUT = wv.shape[0]
    cdt = compute_dtype
    # Column tap kw -> stacked live-row weight matrix (n_vrows*CIN, COUT).
    wv_taps = jnp.stack(
        [jnp.concatenate([wv[:, :, kh, kw].T for kh in range(n_vrows)], axis=0)
         for kw in range(K)], axis=0).astype(cdt)                  # (K, NRC, COUT)
    wh_taps = jnp.stack([wh[:, :, 0, kw].T for kw in range(n_hcols)],
                        axis=0).astype(cdt)                        # (n_hcols, CIN, COUT)
    bsk = params.get("bsk", jnp.zeros((COUT,), jnp.float32))
    packed = dict(
        wv_taps=wv_taps, wh_taps=wh_taps,
        wv2=params["wv2"].T.astype(cdt), wh2=params["wh2"].T.astype(cdt),
        wm1=params["wm1"].T.astype(cdt), wm2=params["wm2"].T.astype(cdt),
        vec_rows=jnp.stack([
            params["bv"], params["gv"], params["bev"], params["bv2"],
            params["bh"], params["gh"], params["beh"], params["bh2"],
            params["gm"], params["bem"], params["bm2"], bsk], axis=0
        ).astype(jnp.float32),                                     # (12, COUT)
        bm1=params["bm1"].reshape(1, -1).astype(jnp.float32),      # (1, 4*COUT)
    )
    if "wsk" in params:
        packed["wsk"] = params["wsk"].T.astype(cdt)
    return packed


# ----------------------------------------------------------------------------
# Forward wrapper: layout, row-only im2col, tiling, VMEM budgeting.
# ----------------------------------------------------------------------------
def masked_block_forward(x, packed, *, kernel_size=3, dilation=1,
                         mask_center=False, compute_dtype=jnp.bfloat16,
                         out_dtype=None, tile_pixels=1024, data_format="NCHW"):
    assert x.ndim == 4
    if data_format == "NCHW":
        x_nhwc = jnp.transpose(x, (0, 2, 3, 1))
    else:                       # channels-last callers skip both transposes
        x_nhwc = x
    B, H, W, C = x_nhwc.shape
    assert C % 2 == 0, "TODO(synk): proj_x path for odd in_channels not implemented"
    CIN = C // 2
    COUT = packed["vec_rows"].shape[1]
    K = int(kernel_size)
    D = int(dilation)
    PH = D * (K - 1) // 2
    PW = D * (K - 1) // 2
    cdt = compute_dtype
    assert packed["wv_taps"].dtype == jnp.dtype(cdt), "pack_params dtype mismatch"
    odt = cdt if out_dtype is None else out_dtype
    skip_identity = (CIN == COUT)
    n_vrows, n_hcols = _live_taps(K, mask_center)
    NRC = n_vrows * CIN
    Wpv = W + 2 * PW
    Wph = W + PW

    # chunk(2, dim=1): first half -> h, second half -> v.
    h_nhwc = x_nhwc[..., :CIN]
    v_nhwc = x_nhwc[..., CIN:]

    # v stream: ROW-only im2col (n_vrows planes, not n_vrows*K), W padded both
    # sides; the K column taps are applied inside the kernel.
    v_padh = jnp.pad(v_nhwc, ((0, 0), (PH, 0), (0, 0), (0, 0)))
    v_rows = jnp.concatenate(
        [v_padh[:, kh * D:kh * D + H, :, :] for kh in range(n_vrows)], axis=-1)
    v_rows = jnp.pad(v_rows, ((0, 0), (0, 0), (PW, PW), (0, 0)))
    v_rows = v_rows.astype(cdt).reshape(B * H, Wpv, NRC)

    # h stream: no im2col, left-pad only; also carries the skip input (center
    # columns), so no separate h_in stream.  f32 only when the skip is identity.
    h_dt = jnp.float32 if skip_identity else cdt
    h_pad = jnp.pad(h_nhwc, ((0, 0), (0, 0), (PW, 0), (0, 0)))
    h_pad = h_pad.astype(h_dt).reshape(B * H, Wph, CIN)

    BH = B * H
    const_arrays = [packed["wv_taps"], packed["wh_taps"], packed["wv2"],
                    packed["wh2"], packed["wm1"], packed["wm2"],
                    packed["vec_rows"], packed["bm1"]]
    if not skip_identity:
        const_arrays.append(packed["wsk"])
    const_bytes = sum(int(np.prod(a.shape)) * jnp.dtype(a.dtype).itemsize
                      for a in const_arrays)

    bc = jnp.dtype(cdt).itemsize
    bhb = jnp.dtype(h_dt).itemsize
    bo = jnp.dtype(odt).itemsize

    def vmem_estimate(tr_):
        npx = tr_ * W
        tile_in = tr_ * (Wpv * NRC * bc + Wph * CIN * bhb)
        tile_out = npx * 2 * COUT * bo
        interm = npx * 16 * COUT * 4           # live f32 temporaries
        # const weights are double-buffered by default; could be halved with
        # pipeline_mode=pl.Buffered(1) on newer Pallas (kept default here).
        return 2 * (tile_in + tile_out) + 2 * const_bytes + interm

    # VMEM budget from the actual chip (v7x: 64 MiB, v5e/v6e: 128 MiB) minus
    # headroom for Mosaic internal scratch.
    try:
        cap = int(getattr(pltpu.get_tpu_info(), "vmem_capacity_bytes", 128 << 20))
    except Exception:
        cap = 128 << 20
    budget = max(cap - (12 << 20), 32 << 20)

    # Rows per tile: target ~tile_pixels pixels, keep >=2 grid steps so both
    # v7x TensorCores get work, keep tr*W a multiple of 8 (sublane-aligned
    # output block), and shrink if the VMEM estimate exceeds the budget.
    q = 8 // math.gcd(W, 8)
    tr = max(1, tile_pixels // W)
    if BH >= 2 * q:
        tr = min(tr, BH // 2)
    tr = min(tr, ((BH + q - 1) // q) * q)
    tr = max(q, (tr // q) * q)
    while tr > q and vmem_estimate(tr) + (8 << 20) > budget:
        tr = max(q, ((tr // 2) // q) * q)

    Rp = ((BH + tr - 1) // tr) * tr
    if Rp > BH:
        v_rows = jnp.pad(v_rows, ((0, Rp - BH), (0, 0), (0, 0)))
        h_pad = jnp.pad(h_pad, ((0, Rp - BH), (0, 0), (0, 0)))
    grid = (Rp // tr,)
    vmem_limit = int(min(max(vmem_estimate(tr) + (8 << 20), 32 << 20), budget))

    def const_spec(a):
        nd = a.ndim
        return pl.BlockSpec(a.shape, lambda *_: (0,) * nd)

    in_specs = [pl.BlockSpec((tr, Wpv, NRC), lambda i: (i, 0, 0)),
                pl.BlockSpec((tr, Wph, CIN), lambda i: (i, 0, 0))]
    in_specs += [const_spec(a) for a in const_arrays]
    inputs = [v_rows, h_pad] + const_arrays

    Mpx = B * H * W
    flops_px = 2 * COUT * (K * NRC + n_hcols * CIN + 2 * COUT + 8 * COUT
                           + (0 if skip_identity else CIN))
    cost = pl.CostEstimate(
        flops=int(Mpx * flops_px),
        transcendentals=int(Mpx * 6 * COUT),
        bytes_accessed=int(v_rows.size * bc + h_pad.size * bhb
                           + Rp * W * 2 * COUT * bo + const_bytes))

    kernel = functools.partial(
        _masked_block_kernel, W=W, PW=PW, dil=D, n_vcol=K, n_hcol=n_hcols,
        inv_cout=1.0 / COUT, skip_identity=skip_identity, compute_dtype=cdt)

    out = pl.pallas_call(
        kernel,
        grid=grid,
        in_specs=in_specs,
        out_specs=pl.BlockSpec((tr * W, 2 * COUT), lambda i: (i, 0)),
        out_shape=jax.ShapeDtypeStruct((Rp * W, 2 * COUT), odt),
        compiler_params=pltpu.CompilerParams(
            dimension_semantics=("parallel",),
            vmem_limit_bytes=vmem_limit),
        cost_estimate=cost,
    )(*inputs)

    out = out[:Mpx]
    hout = out[:, :COUT].reshape(B, H, W, COUT)
    vout = out[:, COUT:].reshape(B, H, W, COUT)
    out_nhwc = jnp.concatenate([hout, vout], axis=-1)
    if data_format == "NCHW":
        return jnp.transpose(out_nhwc, (0, 3, 1, 2))
    return out_nhwc


# ----------------------------------------------------------------------------
# Deterministic parameter init (shapes per MaskedBlock.__init__)
# ----------------------------------------------------------------------------
def init_params(key, in_channels, out_channels, kernel_size):
    CIN = in_channels // 2
    COUT = out_channels // 2
    K = kernel_size
    ks = jax.random.split(key, 18)

    def w(k, shape, scale=0.2):
        return scale * jax.random.normal(k, shape, jnp.float32)

    p = dict(
        wv=w(ks[0], (COUT, CIN, K, K)),  bv=w(ks[1], (COUT,)),
        gv=1.0 + w(ks[2], (COUT,), 0.1), bev=w(ks[3], (COUT,), 0.1),
        wv2=w(ks[4], (COUT, COUT)),      bv2=w(ks[5], (COUT,)),
        wh=w(ks[6], (COUT, CIN, 1, K)),  bh=w(ks[7], (COUT,)),
        gh=1.0 + w(ks[8], (COUT,), 0.1), beh=w(ks[9], (COUT,), 0.1),
        wh2=w(ks[10], (COUT, COUT)),     bh2=w(ks[11], (COUT,)),
        gm=1.0 + w(ks[12], (COUT,), 0.1), bem=w(ks[13], (COUT,), 0.1),
        wm1=w(ks[14], (4 * COUT, COUT)), bm1=w(ks[15], (4 * COUT,)),
        wm2=jnp.zeros((COUT, 4 * COUT), jnp.float32),    # zero_module
        bm2=jnp.zeros((COUT,), jnp.float32),
    )
    if CIN != COUT:                                      # 1x1 skip conv path
        p["wsk"] = w(ks[16], (COUT, CIN))
        p["bsk"] = w(ks[17], (COUT,))
    return p


# ----------------------------------------------------------------------------
# Pure-JAX reference (mirrors the PyTorch forward) for correctness checking
# ----------------------------------------------------------------------------
def ref_forward(x, p, *, K, D, mask_center):
    CIN = x.shape[1] // 2
    mask_v, mask_h = _make_masks(K, K, mask_center)
    P = D * (K - 1) // 2

    def conv(x, w, b, pad, dil):
        y = lax.conv_general_dilated(
            x, w, (1, 1), ((pad[0], pad[0]), (pad[1], pad[1])),
            rhs_dilation=(dil, dil),
            dimension_numbers=("NCHW", "OIHW", "NCHW"),
            precision=lax.Precision.HIGHEST)
        return y + b[None, :, None, None]

    def cn(x, g, b):
        mu = x.mean(axis=1, keepdims=True)
        var = ((x - mu) ** 2).mean(axis=1, keepdims=True)
        return (x - mu) / jnp.sqrt(var + EPS) * g[None, :, None, None] + \
               b[None, :, None, None]

    silu = lambda z: z * jax.nn.sigmoid(z)

    h, v = x[:, :CIN], x[:, CIN:]
    vv = conv(v, p["wv"] * mask_v[None, None], p["bv"], (P, P), D)
    vv = silu(cn(vv, p["gv"], p["bev"]))
    vv = conv(vv, p["wv2"][:, :, None, None], p["bv2"], (0, 0), 1)

    hh = conv(h, p["wh"] * mask_h[None, None, None], p["bh"], (0, P), D)
    hh = silu(cn(hh, p["gh"], p["beh"]))
    hh = conv(hh, p["wh2"][:, :, None, None], p["bh2"], (0, 0), 1)

    m = cn(hh + vv, p["gm"], p["bem"])
    m = silu(conv(m, p["wm1"][:, :, None, None], p["bm1"], (0, 0), 1))
    m = conv(m, p["wm2"][:, :, None, None], p["bm2"], (0, 0), 1)

    if CIN == p["wv"].shape[0]:
        hout = h + m
    else:
        hout = conv(h, p["wsk"][:, :, None, None], p["bsk"], (0, 0), 1) + m
    return jnp.concatenate([hout, vv], axis=1)


# ----------------------------------------------------------------------------
if __name__ == "__main__":
    key = jax.random.PRNGKey(0)
    kx, kp, km = jax.random.split(key, 3)

    B, C, H, W = 2, 16, 16, 16          # in_channels = out_channels = 16
    kernel_size, dilation, mask_center = 3, 1, False

    x = jax.random.normal(kx, (B, C, H, W), jnp.float32)
    params = init_params(kp, in_channels=C, out_channels=C,
                         kernel_size=kernel_size)
    # The module zero-inits the final merge conv (zero_module); perturb it here
    # so the test numerically exercises the merge path as well.
    km1, km2 = jax.random.split(km)
    params["wm2"] = 0.2 * jax.random.normal(km1, params["wm2"].shape, jnp.float32)
    params["bm2"] = 0.2 * jax.random.normal(km2, params["bm2"].shape, jnp.float32)

    ref = ref_forward(x, params, K=kernel_size, D=dilation,
                      mask_center=mask_center)

    # f32 compute path: tight semantic check.
    packed_f32 = pack_params(params, kernel_size=kernel_size,
                             mask_center=mask_center,
                             compute_dtype=jnp.float32)
    out_f32 = masked_block_forward(
        x, packed_f32, kernel_size=kernel_size, dilation=dilation,
        mask_center=mask_center, compute_dtype=jnp.float32,
        out_dtype=jnp.float32, tile_pixels=1024)
    out_f32 = jax.block_until_ready(out_f32)
    assert out_f32.shape == (B, C, H, W)
    np.testing.assert_allclose(np.asarray(out_f32), np.asarray(ref),
                               rtol=2e-3, atol=2e-3)

    # bf16 MXU fast path (default): bf16 weights/activations/output.
    packed_bf16 = pack_params(params, kernel_size=kernel_size,
                              mask_center=mask_center,
                              compute_dtype=jnp.bfloat16)
    out_bf16 = masked_block_forward(
        x, packed_bf16, kernel_size=kernel_size, dilation=dilation,
        mask_center=mask_center, compute_dtype=jnp.bfloat16,
        tile_pixels=1024)
    out_bf16 = jax.block_until_ready(out_bf16)
    np.testing.assert_allclose(np.asarray(out_bf16).astype(np.float32),
                               np.asarray(ref), rtol=5e-2, atol=5e-2)

    print("KERNEL_OK")
</pallas_src>

<mosaic_0001>
module attributes {stable_mosaic.version = 11 : i64} {
  func.func @_masked_block_kernel(%arg0: i32, %arg1: memref<16x18x16xf32, #tpu.memory_space<vmem>>, %arg2: memref<16x17x8xf32, #tpu.memory_space<vmem>>, %arg3: memref<3x16x8xf32, #tpu.memory_space<vmem>>, %arg4: memref<2x8x8xf32, #tpu.memory_space<vmem>>, %arg5: memref<8x8xf32, #tpu.memory_space<vmem>>, %arg6: memref<8x8xf32, #tpu.memory_space<vmem>>, %arg7: memref<8x32xf32, #tpu.memory_space<vmem>>, %arg8: memref<32x8xf32, #tpu.memory_space<vmem>>, %arg9: memref<12x8xf32, #tpu.memory_space<vmem>>, %arg10: memref<1x32xf32, #tpu.memory_space<vmem>>, %arg11: memref<256x16xf32, #tpu.memory_space<vmem>>) attributes {dimension_semantics = [#tpu.dimension_semantics<parallel>], iteration_bounds = array<i64: 2>, scalar_prefetch = 0 : i64, scratch_operands = 0 : i64, tpu.core_type = #tpu.core_type<tc>, window_params = [{transform_indices = @transform_0, window_bounds = array<i64: 16, 18, 16>}, {transform_indices = @transform_1, window_bounds = array<i64: 16, 17, 8>}, {pipeline_mode = #tpu.pipeline_mode<synchronous>, transform_indices = @transform_2, window_bounds = array<i64: 3, 16, 8>}, {pipeline_mode = #tpu.pipeline_mode<synchronous>, transform_indices = @transform_3, window_bounds = array<i64: 2, 8, 8>}, {pipeline_mode = #tpu.pipeline_mode<synchronous>, transform_indices = @transform_4, window_bounds = array<i64: 8, 8>}, {pipeline_mode = #tpu.pipeline_mode<synchronous>, transform_indices = @transform_5, window_bounds = array<i64: 8, 8>}, {pipeline_mode = #tpu.pipeline_mode<synchronous>, transform_indices = @transform_6, window_bounds = array<i64: 8, 32>}, {pipeline_mode = #tpu.pipeline_mode<synchronous>, transform_indices = @transform_7, window_bounds = array<i64: 32, 8>}, {pipeline_mode = #tpu.pipeline_mode<synchronous>, transform_indices = @transform_8, window_bounds = array<i64: 12, 8>}, {pipeline_mode = #tpu.pipeline_mode<synchronous>, transform_indices = @transform_9, window_bounds = array<i64: 1, 32>}, {transform_indices = @transform_10, window_bounds = array<i64: 256, 16>}]} {
    %cst = arith.constant 0.000000e+00 : f32
    %0 = vector.broadcast %cst : f32 to vector<256x8xf32>
    %c0 = arith.constant 0 : index
    %c0_0 = arith.constant 0 : index
    %c0_1 = arith.constant 0 : index
    %1 = vector.load %arg1[%c0, %c0_0, %c0_1] : memref<16x18x16xf32, #tpu.memory_space<vmem>>, vector<16x16x16xf32>
    %2 = vector.shape_cast %1 : vector<16x16x16xf32> to vector<256x16xf32>
    %c0_2 = arith.constant 0 : index
    %c0_3 = arith.constant 0 : index
    %c0_4 = arith.constant 0 : index
    %3 = vector.load %arg3[%c0_2, %c0_3, %c0_4] : memref<3x16x8xf32, #tpu.memory_space<vmem>>, vector<1x16x8xf32>
    %4 = vector.shape_cast %3 : vector<1x16x8xf32> to vector<16x8xf32>
    %cst_5 = arith.constant dense<0.000000e+00> : vector<256x8xf32>
    %5 = tpu.matmul %2, %4, %cst_5 {dimension_numbers = #tpu.dot_dimension_numbers<[1], [0], [0], [1], [0, 0, 1, 1], [], []>} : vector<256x16xf32>, vector<16x8xf32>, vector<256x8xf32> -> vector<256x8xf32>
    %6 = arith.addf %0, %5 : vector<256x8xf32>
    %c0_6 = arith.constant 0 : index
    %c1 = arith.constant 1 : index
    %c0_7 = arith.constant 0 : index
    %7 = vector.load %arg1[%c0_6, %c1, %c0_7] : memref<16x18x16xf32, #tpu.memory_space<vmem>>, vector<16x16x16xf32>
    %8 = vector.shape_cast %7 : vector<16x16x16xf32> to vector<256x16xf32>
    %c1_8 = arith.constant 1 : index
    %c0_9 = arith.constant 0 : index
    %c0_10 = arith.constant 0 : index
    %9 = vector.load %arg3[%c1_8, %c0_9, %c0_10] : memref<3x16x8xf32, #tpu.memory_space<vmem>>, vector<1x16x8xf32>
    %10 = vector.shape_cast %9 : vector<1x16x8xf32> to vector<16x8xf32>
    %cst_11 = arith.constant dense<0.000000e+00> : vector<256x8xf32>
    %11 = tpu.matmul %8, %10, %cst_11 {dimension_numbers = #tpu.dot_dimension_numbers<[1], [0], [0], [1], [0, 0, 1, 1], [], []>} : vector<256x16xf32>, vector<16x8xf32>, vector<256x8xf32> -> vector<256x8xf32>
    %12 = arith.addf %6, %11 : vector<256x8xf32>
    %c0_12 = arith.constant 0 : index
    %c2 = arith.constant 2 : index
    %c0_13 = arith.constant 0 : index
    %13 = vector.load %arg1[%c0_12, %c2, %c0_13] : memref<16x18x16xf32, #tpu.memory_space<vmem>>, vector<16x16x16xf32>
    %14 = vector.shape_cast %13 : vector<16x16x16xf32> to vector<256x16xf32>
    %c2_14 = arith.constant 2 : index
    %c0_15 = arith.constant 0 : index
    %c0_16 = arith.constant 0 : index
    %15 = vector.load %arg3[%c2_14, %c0_15, %c0_16] : memref<3x16x8xf32, #tpu.memory_space<vmem>>, vector<1x16x8xf32>
    %16 = vector.shape_cast %15 : vector<1x16x8xf32> to vector<16x8xf32>
    %cst_17 = arith.constant dense<0.000000e+00> : vector<256x8xf32>
    %17 = tpu.matmul %14, %16, %cst_17 {dimension_numbers = #tpu.dot_dimension_numbers<[1], [0], [0], [1], [0, 0, 1, 1], [], []>} : vector<256x16xf32>, vector<16x8xf32>, vector<256x8xf32> -> vector<256x8xf32>
    %18 = arith.addf %12, %17 : vector<256x8xf32>
    %c0_18 = arith.constant 0 : index
    %c0_19 = arith.constant 0 : index
    %19 = vector.load %arg9[%c0_18, %c0_19] : memref<12x8xf32, #tpu.memory_space<vmem>>, vector<1x8xf32>
    %20 = vector.broadcast %19 : vector<1x8xf32> to vector<256x8xf32>
    %21 = arith.addf %18, %20 : vector<256x8xf32>
    %cst_20 = arith.constant dense<0.000000e+00> : vector<256xf32>
    %22 = vector.multi_reduction <add>, %21, %cst_20 [1] : vector<256x8xf32> to vector<256xf32>
    %23 = vector.shape_cast %22 : vector<256xf32> to vector<256x1xf32>
    %cst_21 = arith.constant 1.250000e-01 : f32
    %24 = vector.broadcast %cst_21 : f32 to vector<256x1xf32>
    %25 = arith.mulf %23, %24 : vector<256x1xf32>
    %26 = vector.broadcast %25 : vector<256x1xf32> to vector<256x8xf32>
    %27 = arith.subf %21, %26 : vector<256x8xf32>
    %28 = arith.mulf %27, %27 : vector<256x8xf32>
    %cst_22 = arith.constant dense<0.000000e+00> : vector<256xf32>
    %29 = vector.multi_reduction <add>, %28, %cst_22 [1] : vector<256x8xf32> to vector<256xf32>
    %30 = vector.shape_cast %29 : vector<256xf32> to vector<256x1xf32>
    %cst_23 = arith.constant 1.250000e-01 : f32
    %31 = vector.broadcast %cst_23 : f32 to vector<256x1xf32>
    %32 = arith.mulf %30, %31 : vector<256x1xf32>
    %cst_24 = arith.constant 9.99999974E-6 : f32
    %33 = vector.broadcast %cst_24 : f32 to vector<256x1xf32>
    %34 = arith.addf %32, %33 : vector<256x1xf32>
    %35 = math.rsqrt %34 : vector<256x1xf32>
    %36 = vector.broadcast %35 : vector<256x1xf32> to vector<256x8xf32>
    %37 = arith.mulf %27, %36 : vector<256x8xf32>
    %c1_25 = arith.constant 1 : index
    %c0_26 = arith.constant 0 : index
    %38 = vector.load %arg9[%c1_25, %c0_26] : memref<12x8xf32, #tpu.memory_space<vmem>>, vector<1x8xf32>
    %39 = vector.broadcast %38 : vector<1x8xf32> to vector<256x8xf32>
    %40 = arith.mulf %37, %39 : vector<256x8xf32>
    %c2_27 = arith.constant 2 : index
    %c0_28 = arith.constant 0 : index
    %41 = vector.load %arg9[%c2_27, %c0_28] : memref<12x8xf32, #tpu.memory_space<vmem>>, vector<1x8xf32>
    %42 = vector.broadcast %41 : vector<1x8xf32> to vector<256x8xf32>
    %43 = arith.addf %40, %42 : vector<256x8xf32>
    %cst_29 = arith.constant 5.000000e-01 : f32
    %44 = vector.broadcast %cst_29 : f32 to vector<256x8xf32>
    %45 = arith.mulf %44, %43 : vector<256x8xf32>
    %46 = math.tanh %45 : vector<256x8xf32>
    %cst_30 = arith.constant 5.000000e-01 : f32
    %47 = vector.broadcast %cst_30 : f32 to vector<256x8xf32>
    %48 = arith.mulf %47, %46 : vector<256x8xf32>
    %cst_31 = arith.constant 5.000000e-01 : f32
    %49 = vector.broadcast %cst_31 : f32 to vector<256x8xf32>
    %50 = arith.addf %48, %49 : vector<256x8xf32>
    %51 = arith.mulf %43, %50 : vector<256x8xf32>
    %c0_32 = arith.constant 0 : index
    %c0_33 = arith.constant 0 : index
    %52 = vector.load %arg5[%c0_32, %c0_33] : memref<8x8xf32, #tpu.memory_space<vmem>>, vector<8x8xf32>
    %cst_34 = arith.constant dense<0.000000e+00> : vector<256x8xf32>
    %53 = tpu.matmul %51, %52, %cst_34 {dimension_numbers = #tpu.dot_dimension_numbers<[1], [0], [0], [1], [0, 0, 1, 1], [], []>} : vector<256x8xf32>, vector<8x8xf32>, vector<256x8xf32> -> vector<256x8xf32>
    %c3 = arith.constant 3 : index
    %c0_35 = arith.constant 0 : index
    %54 = vector.load %arg9[%c3, %c0_35] : memref<12x8xf32, #tpu.memory_space<vmem>>, vector<1x8xf32>
    %55 = vector.broadcast %54 : vector<1x8xf32> to vector<256x8xf32>
    %56 = arith.addf %53, %55 : vector<256x8xf32>
    %cst_36 = arith.constant 0.000000e+00 : f32
    %57 = vector.broadcast %cst_36 : f32 to vector<256x8xf32>
    %c0_37 = arith.constant 0 : index
    %c0_38 = arith.constant 0 : index
    %c0_39 = arith.constant 0 : index
    %58 = vector.load %arg2[%c0_37, %c0_38, %c0_39] : memref<16x17x8xf32, #tpu.memory_space<vmem>>, vector<16x16x8xf32>
    %59 = vector.shape_cast %58 : vector<16x16x8xf32> to vector<256x8xf32>
    %c0_40 = arith.constant 0 : index
    %c0_41 = arith.constant 0 : index
    %c0_42 = arith.constant 0 : index
    %60 = vector.load %arg4[%c0_40, %c0_41, %c0_42] : memref<2x8x8xf32, #tpu.memory_space<vmem>>, vector<1x8x8xf32>
    %61 = vector.shape_cast %60 : vector<1x8x8xf32> to vector<8x8xf32>
    %cst_43 = arith.constant dense<0.000000e+00> : vector<256x8xf32>
    %62 = tpu.matmul %59, %61, %cst_43 {dimension_numbers = #tpu.dot_dimension_numbers<[1], [0], [0], [1], [0, 0, 1, 1], [], []>} : vector<256x8xf32>, vector<8x8xf32>, vector<256x8xf32> -> vector<256x8xf32>
    %63 = arith.addf %57, %62 : vector<256x8xf32>
    %c0_44 = arith.constant 0 : index
    %c1_45 = arith.constant 1 : index
    %c0_46 = arith.constant 0 : index
    %64 = vector.load %arg2[%c0_44, %c1_45, %c0_46] : memref<16x17x8xf32, #tpu.memory_space<vmem>>, vector<16x16x8xf32>
    %65 = vector.shape_cast %64 : vector<16x16x8xf32> to vector<256x8xf32>
    %c1_47 = arith.constant 1 : index
    %c0_48 = arith.constant 0 : index
    %c0_49 = arith.constant 0 : index
    %66 = vector.load %arg4[%c1_47, %c0_48, %c0_49] : memref<2x8x8xf32, #tpu.memory_space<vmem>>, vector<1x8x8xf32>
    %67 = vector.shape_cast %66 : vector<1x8x8xf32> to vector<8x8xf32>
    %cst_50 = arith.constant dense<0.000000e+00> : vector<256x8xf32>
    %68 = tpu.matmul %65, %67, %cst_50 {dimension_numbers = #tpu.dot_dimension_numbers<[1], [0], [0], [1], [0, 0, 1, 1], [], []>} : vector<256x8xf32>, vector<8x8xf32>, vector<256x8xf32> -> vector<256x8xf32>
    %69 = arith.addf %63, %68 : vector<256x8xf32>
    %c4 = arith.constant 4 : index
    %c0_51 = arith.constant 0 : index
    %70 = vector.load %arg9[%c4, %c0_51] : memref<12x8xf32, #tpu.memory_space<vmem>>, vector<1x8xf32>
    %71 = vector.broadcast %70 : vector<1x8xf32> to vector<256x8xf32>
    %72 = arith.addf %69, %71 : vector<256x8xf32>
    %cst_52 = arith.constant dense<0.000000e+00> : vector<256xf32>
    %73 = vector.multi_reduction <add>, %72, %cst_52 [1] : vector<256x8xf32> to vector<256xf32>
    %74 = vector.shape_cast %73 : vector<256xf32> to vector<256x1xf32>
    %cst_53 = arith.constant 1.250000e-01 : f32
    %75 = vector.broadcast %cst_53 : f32 to vector<256x1xf32>
    %76 = arith.mulf %74, %75 : vector<256x1xf32>
    %77 = vector.broadcast %76 : vector<256x1xf32> to vector<256x8xf32>
    %78 = arith.subf %72, %77 : vector<256x8xf32>
    %79 = arith.mulf %78, %78 : vector<256x8xf32>
    %cst_54 = arith.constant dense<0.000000e+00> : vector<256xf32>
    %80 = vector.multi_reduction <add>, %79, %cst_54 [1] : vector<256x8xf32> to vector<256xf32>
    %81 = vector.shape_cast %80 : vector<256xf32> to vector<256x1xf32>
    %cst_55 = arith.constant 1.250000e-01 : f32
    %82 = vector.broadcast %cst_55 : f32 to vector<256x1xf32>
    %83 = arith.mulf %81, %82 : vector<256x1xf32>
    %cst_56 = arith.constant 9.99999974E-6 : f32
    %84 = vector.broadcast %cst_56 : f32 to vector<256x1xf32>
    %85 = arith.addf %83, %84 : vector<256x1xf32>
    %86 = math.rsqrt %85 : vector<256x1xf32>
    %87 = vector.broadcast %86 : vector<256x1xf32> to vector<256x8xf32>
    %88 = arith.mulf %78, %87 : vector<256x8xf32>
    %c5 = arith.constant 5 : index
    %c0_57 = arith.constant 0 : index
    %89 = vector.load %arg9[%c5, %c0_57] : memref<12x8xf32, #tpu.memory_space<vmem>>, vector<1x8xf32>
    %90 = vector.broadcast %89 : vector<1x8xf32> to vector<256x8xf32>
    %91 = arith.mulf %88, %90 : vector<256x8xf32>
    %c6 = arith.constant 6 : index
    %c0_58 = arith.constant 0 : index
    %92 = vector.load %arg9[%c6, %c0_58] : memref<12x8xf32, #tpu.memory_space<vmem>>, vector<1x8xf32>
    %93 = vector.broadcast %92 : vector<1x8xf32> to vector<256x8xf32>
    %94 = arith.addf %91, %93 : vector<256x8xf32>
    %cst_59 = arith.constant 5.000000e-01 : f32
    %95 = vector.broadcast %cst_59 : f32 to vector<256x8xf32>
    %96 = arith.mulf %95, %94 : vector<256x8xf32>
    %97 = math.tanh %96 : vector<256x8xf32>
    %cst_60 = arith.constant 5.000000e-01 : f32
    %98 = vector.broadcast %cst_60 : f32 to vector<256x8xf32>
    %99 = arith.mulf %98, %97 : vector<256x8xf32>
    %cst_61 = arith.constant 5.000000e-01 : f32
    %100 = vector.broadcast %cst_61 : f32 to vector<256x8xf32>
    %101 = arith.addf %99, %100 : vector<256x8xf32>
    %102 = arith.mulf %94, %101 : vector<256x8xf32>
    %c0_62 = arith.constant 0 : index
    %c0_63 = arith.constant 0 : index
    %103 = vector.load %arg6[%c0_62, %c0_63] : memref<8x8xf32, #tpu.memory_space<vmem>>, vector<8x8xf32>
    %cst_64 = arith.constant dense<0.000000e+00> : vector<256x8xf32>
    %104 = tpu.matmul %102, %103, %cst_64 {dimension_numbers = #tpu.dot_dimension_numbers<[1], [0], [0], [1], [0, 0, 1, 1], [], []>} : vector<256x8xf32>, vector<8x8xf32>, vector<256x8xf32> -> vector<256x8xf32>
    %c7 = arith.constant 7 : index
    %c0_65 = arith.constant 0 : index
    %105 = vector.load %arg9[%c7, %c0_65] : memref<12x8xf32, #tpu.memory_space<vmem>>, vector<1x8xf32>
    %106 = vector.broadcast %105 : vector<1x8xf32> to vector<256x8xf32>
    %107 = arith.addf %104, %106 : vector<256x8xf32>
    %108 = arith.addf %107, %56 : vector<256x8xf32>
    %cst_66 = arith.constant dense<0.000000e+00> : vector<256xf32>
    %109 = vector.multi_reduction <add>, %108, %cst_66 [1] : vector<256x8xf32> to vector<256xf32>
    %110 = vector.shape_cast %109 : vector<256xf32> to vector<256x1xf32>
    %cst_67 = arith.constant 1.250000e-01 : f32
    %111 = vector.broadcast %cst_67 : f32 to vector<256x1xf32>
    %112 = arith.mulf %110, %111 : vector<256x1xf32>
    %113 = vector.broadcast %112 : vector<256x1xf32> to vector<256x8xf32>
    %114 = arith.subf %108, %113 : vector<256x8xf32>
    %115 = arith.mulf %114, %114 : vector<256x8xf32>
    %cst_68 = arith.constant dense<0.000000e+00> : vector<256xf32>
    %116 = vector.multi_reduction <add>, %115, %cst_68 [1] : vector<256x8xf32> to vector<256xf32>
    %117 = vector.shape_cast %116 : vector<256xf32> to vector<256x1xf32>
    %cst_69 = arith.constant 1.250000e-01 : f32
    %118 = vector.broadcast %cst_69 : f32 to vector<256x1xf32>
    %119 = arith.mulf %117, %118 : vector<256x1xf32>
    %cst_70 = arith.constant 9.99999974E-6 : f32
    %120 = vector.broadcast %cst_70 : f32 to vector<256x1xf32>
    %121 = arith.addf %119, %120 : vector<256x1xf32>
    %122 = math.rsqrt %121 : vector<256x1xf32>
    %123 = vector.broadcast %122 : vector<256x1xf32> to vector<256x8xf32>
    %124 = arith.mulf %114, %123 : vector<256x8xf32>
    %c8 = arith.constant 8 : index
    %c0_71 = arith.constant 0 : index
    %125 = vector.load %arg9[%c8, %c0_71] : memref<12x8xf32, #tpu.memory_space<vmem>>, vector<1x8xf32>
    %126 = vector.broadcast %125 : vector<1x8xf32> to vector<256x8xf32>
    %127 = arith.mulf %124, %126 : vector<256x8xf32>
    %c9 = arith.constant 9 : index
    %c0_72 = arith.constant 0 : index
    %128 = vector.load %arg9[%c9, %c0_72] : memref<12x8xf32, #tpu.memory_space<vmem>>, vector<1x8xf32>
    %129 = vector.broadcast %128 : vector<1x8xf32> to vector<256x8xf32>
    %130 = arith.addf %127, %129 : vector<256x8xf32>
    %c0_73 = arith.constant 0 : index
    %c0_74 = arith.constant 0 : index
    %131 = vector.load %arg7[%c0_73, %c0_74] : memref<8x32xf32, #tpu.memory_space<vmem>>, vector<8x32xf32>
    %cst_75 = arith.constant dense<0.000000e+00> : vector<256x32xf32>
    %132 = tpu.matmul %130, %131, %cst_75 {dimension_numbers = #tpu.dot_dimension_numbers<[1], [0], [0], [1], [0, 0, 1, 1], [], []>} : vector<256x8xf32>, vector<8x32xf32>, vector<256x32xf32> -> vector<256x32xf32>
    %c0_76 = arith.constant 0 : index
    %c0_77 = arith.constant 0 : index
    %133 = vector.load %arg10[%c0_76, %c0_77] : memref<1x32xf32, #tpu.memory_space<vmem>>, vector<1x32xf32>
    %134 = vector.broadcast %133 : vector<1x32xf32> to vector<256x32xf32>
    %135 = arith.addf %132, %134 : vector<256x32xf32>
    %cst_78 = arith.constant 5.000000e-01 : f32
    %136 = vector.broadcast %cst_78 : f32 to vector<256x32xf32>
    %137 = arith.mulf %136, %135 : vector<256x32xf32>
    %138 = math.tanh %137 : vector<256x32xf32>
    %cst_79 = arith.constant 5.000000e-01 : f32
    %139 = vector.broadcast %cst_79 : f32 to vector<256x32xf32>
    %140 = arith.mulf %139, %138 : vector<256x32xf32>
    %cst_80 = arith.constant 5.000000e-01 : f32
    %141 = vector.broadcast %cst_80 : f32 to vector<256x32xf32>
    %142 = arith.addf %140, %141 : vector<256x32xf32>
    %143 = arith.mulf %135, %142 : vector<256x32xf32>
    %c0_81 = arith.constant 0 : index
    %c0_82 = arith.constant 0 : index
    %144 = vector.load %arg8[%c0_81, %c0_82] : memref<32x8xf32, #tpu.memory_space<vmem>>, vector<32x8xf32>
    %cst_83 = arith.constant dense<0.000000e+00> : vector<256x8xf32>
    %145 = tpu.matmul %143, %144, %cst_83 {dimension_numbers = #tpu.dot_dimension_numbers<[1], [0], [0], [1], [0, 0, 1, 1], [], []>} : vector<256x32xf32>, vector<32x8xf32>, vector<256x8xf32> -> vector<256x8xf32>
    %c10 = arith.constant 10 : index
    %c0_84 = arith.constant 0 : index
    %146 = vector.load %arg9[%c10, %c0_84] : memref<12x8xf32, #tpu.memory_space<vmem>>, vector<1x8xf32>
    %147 = vector.broadcast %146 : vector<1x8xf32> to vector<256x8xf32>
    %148 = arith.addf %145, %147 : vector<256x8xf32>
    %c0_85 = arith.constant 0 : index
    %c1_86 = arith.constant 1 : index
    %c0_87 = arith.constant 0 : index
    %149 = vector.load %arg2[%c0_85, %c1_86, %c0_87] : memref<16x17x8xf32, #tpu.memory_space<vmem>>, vector<16x16x8xf32>
    %150 = vector.shape_cast %149 : vector<16x16x8xf32> to vector<256x8xf32>
    %151 = arith.addf %150, %148 : vector<256x8xf32>
    %c0_88 = arith.constant 0 : index
    %c0_89 = arith.constant 0 : index
    %152 = vector.load %arg11[%c0_88, %c0_89] : memref<256x16xf32, #tpu.memory_space<vmem>>, vector<256x8xf32>
    tpu.vector_store %arg11[%c0_88, %c0_89], %151 {strides = array<i32>} : memref<256x16xf32, #tpu.memory_space<vmem>>, vector<256x8xf32>,
    %c0_90 = arith.constant 0 : index
    %c8_91 = arith.constant 8 : index
    %153 = vector.load %arg11[%c0_90, %c8_91] : memref<256x16xf32, #tpu.memory_space<vmem>>, vector<256x8xf32>
    tpu.vector_store %arg11[%c0_90, %c8_91], %56 {strides = array<i32>} : memref<256x16xf32, #tpu.memory_space<vmem>>, vector<256x8xf32>,
    return
  }
  func.func @transform_0(%arg0: i32) -> (i32, i32, i32) {
    %c0_i32 = arith.constant 0 : i32
    %c0_i32_0 = arith.constant 0 : i32
    %c0_i32_1 = arith.constant 0 : i32
    return %arg0, %c0_i32, %c0_i32_0 : i32, i32, i32
  }
  func.func @transform_1(%arg0: i32) -> (i32, i32, i32) {
    %c0_i32 = arith.constant 0 : i32
    %c0_i32_0 = arith.constant 0 : i32
    %c0_i32_1 = arith.constant 0 : i32
    return %arg0, %c0_i32, %c0_i32_0 : i32, i32, i32
  }
  func.func @transform_2(%arg0: i32) -> (i32, i32, i32) {
    %c0_i32 = arith.constant 0 : i32
    %c0_i32_0 = arith.constant 0 : i32
    %c0_i32_1 = arith.constant 0 : i32
    %c0_i32_2 = arith.constant 0 : i32
    return %c0_i32, %c0_i32_0, %c0_i32_1 : i32, i32, i32
  }
  func.func @transform_3(%arg0: i32) -> (i32, i32, i32) {
    %c0_i32 = arith.constant 0 : i32
    %c0_i32_0 = arith.constant 0 : i32
    %c0_i32_1 = arith.constant 0 : i32
    %c0_i32_2 = arith.constant 0 : i32
    return %c0_i32, %c0_i32_0, %c0_i32_1 : i32, i32, i32
  }
  func.func @transform_4(%arg0: i32) -> (i32, i32) {
    %c0_i32 = arith.constant 0 : i32
    %c0_i32_0 = arith.constant 0 : i32
    %c0_i32_1 = arith.constant 0 : i32
    return %c0_i32, %c0_i32_0 : i32, i32
  }
  func.func @transform_5(%arg0: i32) -> (i32, i32) {
    %c0_i32 = arith.constant 0 : i32
    %c0_i32_0 = arith.constant 0 : i32
    %c0_i32_1 = arith.constant 0 : i32
    return %c0_i32, %c0_i32_0 : i32, i32
  }
  func.func @transform_6(%arg0: i32) -> (i32, i32) {
    %c0_i32 = arith.constant 0 : i32
    %c0_i32_0 = arith.constant 0 : i32
    %c0_i32_1 = arith.constant 0 : i32
    return %c0_i32, %c0_i32_0 : i32, i32
  }
  func.func @transform_7(%arg0: i32) -> (i32, i32) {
    %c0_i32 = arith.constant 0 : i32
    %c0_i32_0 = arith.constant 0 : i32
    %c0_i32_1 = arith.constant 0 : i32
    return %c0_i32, %c0_i32_0 : i32, i32
  }
  func.func @transform_8(%arg0: i32) -> (i32, i32) {
    %c0_i32 = arith.constant 0 : i32
    %c0_i32_0 = arith.constant 0 : i32
    %c0_i32_1 = arith.constant 0 : i32
    return %c0_i32, %c0_i32_0 : i32, i32
  }
  func.func @transform_9(%arg0: i32) -> (i32, i32) {
    %c0_i32 = arith.constant 0 : i32
    %c0_i32_0 = arith.constant 0 : i32
    %c0_i32_1 = arith.constant 0 : i32
    return %c0_i32, %c0_i32_0 : i32, i32
  }
  func.func @transform_10(%arg0: i32) -> (i32, i32) {
    %c0_i32 = arith.constant 0 : i32
    %c0_i32_0 = arith.constant 0 : i32
    return %arg0, %c0_i32 : i32, i32
  }
}

</mosaic_0001>

<llo_original>
// kernel: tpu_custom_call.1
$region0: #{tpu_custom_call.1}
  #allocation0 [shape = 'u32[]', space=smem, size = 0x4, offset = 0x4, fixed_abs, tag = 'smem constant byte address 0x4 - core index']
  #allocation1 [shape = 'u32[144,128]{1,0:T(1,128)}', space=vmem, size = 0x12000, scoped, tag = 'internal scratch']
  %s0 = inlined_call_operand.vmem [shape: f32[32,18,16], index: 0, kind: input, shape index: {}]
  %s1 = inlined_call_operand.vmem [shape: f32[32,17,8], index: 1, kind: input, shape index: {}]
  %s2 = inlined_call_operand.vmem [shape: f32[3,16,8], index: 2, kind: input, shape index: {}]
  %s3 = inlined_call_operand.vmem [shape: f32[2,8,8], index: 3, kind: input, shape index: {}]
  %s4 = inlined_call_operand.vmem [shape: f32[8,8], index: 4, kind: input, shape index: {}]
  %s5 = inlined_call_operand.vmem [shape: f32[8,8], index: 5, kind: input, shape index: {}]
  %s6 = inlined_call_operand.vmem [shape: f32[8,32], index: 6, kind: input, shape index: {}]
  %s7 = inlined_call_operand.vmem [shape: f32[32,8], index: 7, kind: input, shape index: {}]
  %s8 = inlined_call_operand.vmem [shape: f32[12,8], index: 8, kind: input, shape index: {}]
  %s9 = inlined_call_operand.vmem [shape: f32[1,32], index: 9, kind: input, shape index: {}]
  %s10 = inlined_call_operand.vmem [shape: f32[512,16], index: 10, kind: output, shape index: {}]
  %s11 = sld [smem:[#allocation0]]
  $region73: #{tpu_custom_call.1} parent=0
    _
  %s13 = ssub.s32 1, %s11
  %s14 = scalar_select 0, %s13, %s11
  loop: start=0, step=1, limit=4
  $region2: #{tpu_custom_call.1} parent=0 // loop_pre_header
    _
  $region3: #{tpu_custom_call.1} parent=0 // loop_header
    %s16 = sphi 0, %s20
    %p17 = scmp.ge.s32.totalorder %s16, 4
    %s26 = sphi 0, %s28
    %s29 = sphi 0, %s26
    %s30 = sphi 0, %s29
    %s46 = sphi 0, %s30
    %s52 = sphi 0, %s54
    %s55 = sphi 0, %s52
    %s56 = sphi 0, %s55
    %s72 = sphi 0, %s56
    %s76 = sphi 0, %s76
    %s78 = sphi 0, %s76
    %s79 = sphi 0, %s78
    %s93 = sphi 0, %s79
    %s97 = sphi 0, %s97
    %s99 = sphi 0, %s97
    %s100 = sphi 0, %s99
    %s114 = sphi 0, %s100
    %s118 = sphi 0, %s118
    %s120 = sphi 0, %s118
    %s121 = sphi 0, %s120
    %s135 = sphi 0, %s121
    %s139 = sphi 0, %s139
    %s141 = sphi 0, %s139
    %s142 = sphi 0, %s141
    %s156 = sphi 0, %s142
    %s160 = sphi 0, %s160
    %s162 = sphi 0, %s160
    %s163 = sphi 0, %s162
    %s177 = sphi 0, %s163
    %s181 = sphi 0, %s181
    %s183 = sphi 0, %s181
    %s184 = sphi 0, %s183
    %s198 = sphi 0, %s184
    %s202 = sphi 0, %s202
    %s204 = sphi 0, %s202
    %s205 = sphi 0, %s204
    %s219 = sphi 0, %s205
    %s223 = sphi 0, %s223
    %s225 = sphi 0, %s223
    %s226 = sphi 0, %s225
    %s240 = sphi 0, %s226
    %s246 = sphi 0, %s248
    %s249 = sphi 0, %s246
    %s250 = sphi 0, %s249
    %s266 = sphi 0, %s250
  $region4: #{tpu_custom_call.1} parent=0 // loop_header_branch
    %19 = sbr.rel (%p17) target = $region8
  $region5: #{tpu_custom_call.1} parent=0 // loop_body
    %s21 = ssub.s32 %s16, 1
    %s22 = ssub.s32 %s16, 2
    %s23 = sadd.s32 %s16, 1
    %s24 = ssub.s32 %s16, %s23
    %p25 = scmp.eq.s32.totalorder %s24, 0
    %s27 = sadd.s32 %s26, 1
    %s28 = scalar_select %p25, %s26, %s27
    %p31 = pneg %p25
    %p32 = scmp.eq.s32.totalorder %s16, 1
    %p33 = por %p31, %p32
    %p34 = scmp.ne.s32.totalorder %s26, %s29
    %p35 = scmp.eq.s32.totalorder %s16, 0
    %p36 = por %p34, %p35
    %p37 = scmp.ne.s32.totalorder %s26, %s29
    %p38 = scmp.eq.s32.totalorder %s21, 1
    %p39 = por %p37, %p38
    %p40 = scmp.ne.s32.totalorder %s29, %s30
    %p41 = scmp.eq.s32.totalorder %s21, 0
    %p42 = por %p40, %p41
    %p43 = scmp.ne.s32.totalorder %s29, %s30
    %p44 = scmp.eq.s32.totalorder %s22, 1
    %p45 = por %p43, %p44
    %p47 = scmp.ne.s32.totalorder %s30, %s46
    %p48 = scmp.eq.s32.totalorder %s22, 0
    %p49 = por %p47, %p48
    %s50 = ssub.s32 %s16, %s23
    %p51 = scmp.eq.s32.totalorder %s50, 0
    %s53 = sadd.s32 %s52, 1
    %s54 = scalar_select %p51, %s52, %s53
    %p57 = pneg %p51
    %p58 = scmp.eq.s32.totalorder %s16, 1
    %p59 = por %p57, %p58
    %p60 = scmp.ne.s32.totalorder %s52, %s55
    %p61 = scmp.eq.s32.totalorder %s16, 0
    %p62 = por %p60, %p61
    %p63 = scmp.ne.s32.totalorder %s52, %s55
    %p64 = scmp.eq.s32.totalorder %s21, 1
    %p65 = por %p63, %p64
    %p66 = scmp.ne.s32.totalorder %s55, %s56
    %p67 = scmp.eq.s32.totalorder %s21, 0
    %p68 = por %p66, %p67
    %p69 = scmp.ne.s32.totalorder %s55, %s56
    %p70 = scmp.eq.s32.totalorder %s22, 1
    %p71 = por %p69, %p70
    %p73 = scmp.ne.s32.totalorder %s56, %s72
    %p74 = scmp.eq.s32.totalorder %s22, 0
    %p75 = por %p73, %p74
    %s77 = sadd.s32 %s76, 1
    %p80 = scmp.eq.s32.totalorder %s16, 1
    %p81 = scmp.ne.s32.totalorder %s76, %s78
    %p82 = scmp.eq.s32.totalorder %s16, 0
    %p83 = por %p81, %p82
    %p84 = scmp.ne.s32.totalorder %s76, %s78
    %p85 = scmp.eq.s32.totalorder %s21, 1
    %p86 = por %p84, %p85
    %p87 = scmp.ne.s32.totalorder %s78, %s79
    %p88 = scmp.eq.s32.totalorder %s21, 0
    %p89 = por %p87, %p88
    %p90 = scmp.ne.s32.totalorder %s78, %s79
    %p91 = scmp.eq.s32.totalorder %s22, 1
    %p92 = por %p90, %p91
    %p94 = scmp.ne.s32.totalorder %s79, %s93
    %p95 = scmp.eq.s32.totalorder %s22, 0
    %p96 = por %p94, %p95
    %s98 = sadd.s32 %s97, 1
    %p101 = scmp.eq.s32.totalorder %s16, 1
    %p102 = scmp.ne.s32.totalorder %s97, %s99
    %p103 = scmp.eq.s32.totalorder %s16, 0
    %p104 = por %p102, %p103
    %p105 = scmp.ne.s32.totalorder %s97, %s99
    %p106 = scmp.eq.s32.totalorder %s21, 1
    %p107 = por %p105, %p106
    %p108 = scmp.ne.s32.totalorder %s99, %s100
    %p109 = scmp.eq.s32.totalorder %s21, 0
    %p110 = por %p108, %p109
    %p111 = scmp.ne.s32.totalorder %s99, %s100
    %p112 = scmp.eq.s32.totalorder %s22, 1
    %p113 = por %p111, %p112
    %p115 = scmp.ne.s32.totalorder %s100, %s114
    %p116 = scmp.eq.s32.totalorder %s22, 0
    %p117 = por %p115, %p116
    %s119 = sadd.s32 %s118, 1
    %p122 = scmp.eq.s32.totalorder %s16, 1
    %p123 = scmp.ne.s32.totalorder %s118, %s120
    %p124 = scmp.eq.s32.totalorder %s16, 0
    %p125 = por %p123, %p124
    %p126 = scmp.ne.s32.totalorder %s118, %s120
    %p127 = scmp.eq.s32.totalorder %s21, 1
    %p128 = por %p126, %p127
    %p129 = scmp.ne.s32.totalorder %s120, %s121
    %p130 = scmp.eq.s32.totalorder %s21, 0
    %p131 = por %p129, %p130
    %p132 = scmp.ne.s32.totalorder %s120, %s121
    %p133 = scmp.eq.s32.totalorder %s22, 1
    %p134 = por %p132, %p133
    %p136 = scmp.ne.s32.totalorder %s121, %s135
    %p137 = scmp.eq.s32.totalorder %s22, 0
    %p138 = por %p136, %p137
    %s140 = sadd.s32 %s139, 1
    %p143 = scmp.eq.s32.totalorder %s16, 1
    %p144 = scmp.ne.s32.totalorder %s139, %s141
    %p145 = scmp.eq.s32.totalorder %s16, 0
    %p146 = por %p144, %p145
    %p147 = scmp.ne.s32.totalorder %s139, %s141
    %p148 = scmp.eq.s32.totalorder %s21, 1
    %p149 = por %p147, %p148
    %p150 = scmp.ne.s32.totalorder %s141, %s142
    %p151 = scmp.eq.s32.totalorder %s21, 0
    %p152 = por %p150, %p151
    %p153 = scmp.ne.s32.totalorder %s141, %s142
    %p154 = scmp.eq.s32.totalorder %s22, 1
    %p155 = por %p153, %p154
    %p157 = scmp.ne.s32.totalorder %s142, %s156
    %p158 = scmp.eq.s32.totalorder %s22, 0
    %p159 = por %p157, %p158
    %s161 = sadd.s32 %s160, 1
    %p164 = scmp.eq.s32.totalorder %s16, 1
    %p165 = scmp.ne.s32.totalorder %s160, %s162
    %p166 = scmp.eq.s32.totalorder %s16, 0
    %p167 = por %p165, %p166
    %p168 = scmp.ne.s32.totalorder %s160, %s162
    %p169 = scmp.eq.s32.totalorder %s21, 1
    %p170 = por %p168, %p169
    %p171 = scmp.ne.s32.totalorder %s162, %s163
    %p172 = scmp.eq.s32.totalorder %s21, 0
    %p173 = por %p171, %p172
    %p174 = scmp.ne.s32.totalorder %s162, %s163
    %p175 = scmp.eq.s32.totalorder %s22, 1
    %p176 = por %p174, %p175
    %p178 = scmp.ne.s32.totalorder %s163, %s177
    %p179 = scmp.eq.s32.totalorder %s22, 0
    %p180 = por %p178, %p179
    %s182 = sadd.s32 %s181, 1
    %p185 = scmp.eq.s32.totalorder %s16, 1
    %p186 = scmp.ne.s32.totalorder %s181, %s183
    %p187 = scmp.eq.s32.totalorder %s16, 0
    %p188 = por %p186, %p187
    %p189 = scmp.ne.s32.totalorder %s181, %s183
    %p190 = scmp.eq.s32.totalorder %s21, 1
    %p191 = por %p189, %p190
    %p192 = scmp.ne.s32.totalorder %s183, %s184
    %p193 = scmp.eq.s32.totalorder %s21, 0
    %p194 = por %p192, %p193
    %p195 = scmp.ne.s32.totalorder %s183, %s184
    %p196 = scmp.eq.s32.totalorder %s22, 1
    %p197 = por %p195, %p196
    %p199 = scmp.ne.s32.totalorder %s184, %s198
    %p200 = scmp.eq.s32.totalorder %s22, 0
    %p201 = por %p199, %p200
    %s203 = sadd.s32 %s202, 1
    %p206 = scmp.eq.s32.totalorder %s16, 1
    %p207 = scmp.ne.s32.totalorder %s202, %s204
    %p208 = scmp.eq.s32.totalorder %s16, 0
    %p209 = por %p207, %p208
    %p210 = scmp.ne.s32.totalorder %s202, %s204
    %p211 = scmp.eq.s32.totalorder %s21, 1
    %p212 = por %p210, %p211
    %p213 = scmp.ne.s32.totalorder %s204, %s205
    %p214 = scmp.eq.s32.totalorder %s21, 0
    %p215 = por %p213, %p214
    %p216 = scmp.ne.s32.totalorder %s204, %s205
    %p217 = scmp.eq.s32.totalorder %s22, 1
    %p218 = por %p216, %p217
    %p220 = scmp.ne.s32.totalorder %s205, %s219
    %p221 = scmp.eq.s32.totalorder %s22, 0
    %p222 = por %p220, %p221
    %s224 = sadd.s32 %s223, 1
    %p227 = scmp.eq.s32.totalorder %s16, 1
    %p228 = scmp.ne.s32.totalorder %s223, %s225
    %p229 = scmp.eq.s32.totalorder %s16, 0
    %p230 = por %p228, %p229
    %p231 = scmp.ne.s32.totalorder %s223, %s225
    %p232 = scmp.eq.s32.totalorder %s21, 1
    %p233 = por %p231, %p232
    %p234 = scmp.ne.s32.totalorder %s225, %s226
    %p235 = scmp.eq.s32.totalorder %s21, 0
    %p236 = por %p234, %p235
    %p237 = scmp.ne.s32.totalorder %s225, %s226
    %p238 = scmp.eq.s32.totalorder %s22, 1
    %p239 = por %p237, %p238
    %p241 = scmp.ne.s32.totalorder %s226, %s240
    %p242 = scmp.eq.s32.totalorder %s22, 0
    %p243 = por %p241, %p242
    %s244 = ssub.s32 %s16, %s23
    %p245 = scmp.eq.s32.totalorder %s244, 0
    %s247 = sadd.s32 %s246, 1
    %s248 = scalar_select %p245, %s246, %s247
    %p251 = pneg %p245
    %p252 = scmp.eq.s32.totalorder %s16, 1
    %p253 = por %p251, %p252
    %p254 = scmp.ne.s32.totalorder %s246, %s249
    %p255 = scmp.eq.s32.totalorder %s16, 0
    %p256 = por %p254, %p255
    %p257 = scmp.ne.s32.totalorder %s246, %s249
    %p258 = scmp.eq.s32.totalorder %s21, 1
    %p259 = por %p257, %p258
    %p260 = scmp.ne.s32.totalorder %s249, %s250
    %p261 = scmp.eq.s32.totalorder %s21, 0
    %p262 = por %p260, %p261
    %p263 = scmp.ne.s32.totalorder %s249, %s250
    %p264 = scmp.eq.s32.totalorder %s22, 1
    %p265 = por %p263, %p264
    %p267 = scmp.ne.s32.totalorder %s250, %s266
    %p268 = scmp.eq.s32.totalorder %s22, 0
    %p269 = por %p267, %p268
    %p270 = scmp.le.s32.totalorder 1, %s16
    %p271 = scmp.lt.s32.totalorder %s16, 3
    %p272 = pnand %p270, %p271
    %p273 = pneg %p272
    // Predicated region
    $region9: #{tpu_custom_call.1} parent=5 // pred_check
      _
    $region10: #{tpu_custom_call.1} parent=5 // pred_check_branch
      %275 = sbr.rel (%p272) target = $region12
    $region11: #{tpu_custom_call.1} parent=5 // pred_region
      %s276 = ssub.s32 %s16, 1
      // Predicated region
      $region13: #{tpu_custom_call.1} parent=11 // pred_check
        %p277 = pneg %p89
      $region14: #{tpu_custom_call.1} parent=11 // pred_check_branch
        %279 = sbr.rel (%p277) target = $region16
      $region15: #{tpu_custom_call.1} parent=11 // pred_region
        _
      $region16: #{tpu_custom_call.1} parent=11 // pred_fallthru
        _
      // Predicated region
      $region17: #{tpu_custom_call.1} parent=11 // pred_check
        %p280 = pneg %p110
      $region18: #{tpu_custom_call.1} parent=11 // pred_check_branch
        %282 = sbr.rel (%p280) target = $region20
      $region19: #{tpu_custom_call.1} parent=11 // pred_region
        _
      $region20: #{tpu_custom_call.1} parent=11 // pred_fallthru
        _
      // Predicated region
      $region21: #{tpu_custom_call.1} parent=11 // pred_check
        %p283 = pneg %p131
      $region22: #{tpu_custom_call.1} parent=11 // pred_check_branch
        %285 = sbr.rel (%p283) target = $region24
      $region23: #{tpu_custom_call.1} parent=11 // pred_region
        _
      $region24: #{tpu_custom_call.1} parent=11 // pred_fallthru
        _
      // Predicated region
      $region25: #{tpu_custom_call.1} parent=11 // pred_check
        %p286 = pneg %p152
      $region26: #{tpu_custom_call.1} parent=11 // pred_check_branch
        %288 = sbr.rel (%p286) target = $region28
      $region27: #{tpu_custom_call.1} parent=11 // pred_region
        _
      $region28: #{tpu_custom_call.1} parent=11 // pred_fallthru
        _
      // Predicated region
      $region29: #{tpu_custom_call.1} parent=11 // pred_check
        %p289 = pneg %p173
      $region30: #{tpu_custom_call.1} parent=11 // pred_check_branch
        %291 = sbr.rel (%p289) target = $region32
      $region31: #{tpu_custom_call.1} parent=11 // pred_region
        _
      $region32: #{tpu_custom_call.1} parent=11 // pred_fallthru
        _
      // Predicated region
      $region33: #{tpu_custom_call.1} parent=11 // pred_check
        %p292 = pneg %p194
      $region34: #{tpu_custom_call.1} parent=11 // pred_check_branch
        %294 = sbr.rel (%p292) target = $region36
      $region35: #{tpu_custom_call.1} parent=11 // pred_region
        _
      $region36: #{tpu_custom_call.1} parent=11 // pred_fallthru
        _
      // Predicated region
      $region37: #{tpu_custom_call.1} parent=11 // pred_check
        %p295 = pneg %p215
      $region38: #{tpu_custom_call.1} parent=11 // pred_check_branch
        %297 = sbr.rel (%p295) target = $region40
      $region39: #{tpu_custom_call.1} parent=11 // pred_region
        _
      $region40: #{tpu_custom_call.1} parent=11 // pred_fallthru
        _
      // Predicated region
      $region41: #{tpu_custom_call.1} parent=11 // pred_check
        %p298 = pneg %p236
      $region42: #{tpu_custom_call.1} parent=11 // pred_check_branch
        %300 = sbr.rel (%p298) target = $region44
      $region43: #{tpu_custom_call.1} parent=11 // pred_region
        _
      $region44: #{tpu_custom_call.1} parent=11 // pred_fallthru
        _
    $region12: #{tpu_custom_call.1} parent=5 // pred_fallthru
      _
    %p301 = scmp.lt.s32.totalorder %s16, 2
    // Predicated region
    $region45: #{tpu_custom_call.1} parent=5 // pred_check
      %p302 = pneg %p301
    $region46: #{tpu_custom_call.1} parent=5 // pred_check_branch
      %304 = sbr.rel (%p302) target = $region48
    $region47: #{tpu_custom_call.1} parent=5 // pred_region
      // Predicated region
      $region49: #{tpu_custom_call.1} parent=47 // pred_check
        %p305 = pneg %p36
      $region50: #{tpu_custom_call.1} parent=47 // pred_check_branch
        %307 = sbr.rel (%p305) target = $region52
      $region51: #{tpu_custom_call.1} parent=47 // pred_region
        %s308 = smul.u32 16, %s16
        %p309 = scmp.lt.s32.totalorder %s308, 31
        %s310 = scalar_select %p309, %s308, 31
        %s311 = smul.addr %s310, 3
        %s312 = smul.addr %s311, 8
        %s313 = scalar_lea.vmem %s0, %s312
        %s314 = smul.u32 16, %s16
      $region52: #{tpu_custom_call.1} parent=47 // pred_fallthru
        _
      // Predicated region
      $region53: #{tpu_custom_call.1} parent=47 // pred_check
        %p315 = pneg %p62
      $region54: #{tpu_custom_call.1} parent=47 // pred_check_branch
        %317 = sbr.rel (%p315) target = $region56
      $region55: #{tpu_custom_call.1} parent=47 // pred_region
        %s318 = smul.u32 16, %s16
        %p319 = scmp.lt.s32.totalorder %s318, 31
        %s320 = scalar_select %p319, %s318, 31
        %s321 = smul.addr %s320, 3
        %s322 = smul.addr %s321, 8
        %s323 = scalar_lea.vmem %s1, %s322
        %s324 = smul.u32 16, %s16
      $region56: #{tpu_custom_call.1} parent=47 // pred_fallthru
        _
    $region48: #{tpu_custom_call.1} parent=5 // pred_fallthru
      _
    %p325 = scmp.le.s32.totalorder 1, %s16
    %p326 = scmp.lt.s32.totalorder %s16, 3
    %p327 = pnand %p325, %p326
    %p328 = pneg %p327
    // Predicated region
    $region57: #{tpu_custom_call.1} parent=5 // pred_check
      _
    $region58: #{tpu_custom_call.1} parent=5 // pred_check_branch
      %330 = sbr.rel (%p327) target = $region60
    $region59: #{tpu_custom_call.1} parent=5 // pred_region
      %s331 = ssub.s32 %s16, 1
      %s332 = smul.u32 16, %s21
      %p333 = scmp.lt.s32.totalorder %s332, 31
      %s334 = scalar_select %p333, %s332, 31
      %s335 = smul.addr %s334, 3
      %s336 = smul.addr %s335, 8
      %s337 = scalar_lea.vmem %s0, %s336
      %p338 = pneg %p42
      %p339 = pneg %p39
      %s340 = smul.u32 16, %s21
      %p341 = scmp.lt.s32.totalorder %s340, 31
      %s342 = scalar_select %p341, %s340, 31
      %s343 = smul.addr %s342, 3
      %s344 = smul.addr %s343, 8
      %s345 = scalar_lea.vmem %s1, %s344
      %p346 = pneg %p68
      %p347 = pneg %p65
      %p348 = pneg %p89
      %p349 = pneg %p86
      %p350 = pneg %p110
      %p351 = pneg %p107
      %p352 = pneg %p131
      %p353 = pneg %p128
      %p354 = pneg %p152
      %p355 = pneg %p149
      %p356 = pneg %p173
      %p357 = pneg %p170
      %p358 = pneg %p194
      %p359 = pneg %p191
      %p360 = pneg %p215
      %p361 = pneg %p212
      %p362 = pneg %p236
      %p363 = pneg %p233
      %p364 = pneg %p262
      %p365 = pneg %p259
      %s366 = smul.u32 32, %s21
      %p367 = scmp.lt.s32.totalorder %s366, 63
      %s368 = scalar_select %p367, %s366, 63
      %s369 = smul.addr %s368, 8
      %s370 = scalar_lea.vmem %s10, %s369
      %s371 = smul.u32 16, %s21
      %p372 = scmp.lt.s32.totalorder %s371, 31
      %s373 = scalar_select %p372, %s371, 31
      %s374 = smul.addr %s373, 3
      %s375 = smul.addr %s374, 8
      %s376 = scalar_lea.vmem %s0, %s375
      %s377 = smul.u32 16, %s21
      %s378 = smul.u32 16, %s21
      %p379 = scmp.lt.s32.totalorder %s378, 31
      %s380 = scalar_select %p379, %s378, 31
      %s381 = smul.addr %s380, 3
      %s382 = smul.addr %s381, 8
      %s383 = scalar_lea.vmem %s1, %s382
      %s384 = smul.u32 16, %s21
      %s385 = smul.u32 32, %s21
      %p386 = scmp.lt.s32.totalorder %s385, 63
      %s387 = scalar_select %p386, %s385, 63
      %s388 = smul.addr %s387, 8
      %s389 = scalar_lea.vmem %s10, %s388
      %s390 = smul.u32 32, %s21
      %v391 = vld [vmem:[%s376] sm:$0xff]
      %v392 = vld [vmem:[%s376 + $0x8] sm:$0xff]
      %v393 = vld [vmem:[%s376 + $0x18] sm:$0xff]
      %v394 = vld [vmem:[%s376 + $0x20] sm:$0xff]
      %v395 = vld [vmem:[%s376 + $0x30] sm:$0xff]
      %v396 = vld [vmem:[%s376 + $0x38] sm:$0xff]
      %v397 = vld [vmem:[%s376 + $0x48] sm:$0xff]
      %v398 = vld [vmem:[%s376 + $0x50] sm:$0xff]
      %v399 = vld [vmem:[%s376 + $0x60] sm:$0xff]
      %v400 = vld [vmem:[%s376 + $0x68] sm:$0xff]
      %v401 = vld [vmem:[%s376 + $0x78] sm:$0xff]
      %v402 = vld [vmem:[%s376 + $0x80] sm:$0xff]
      %v403 = vld [vmem:[%s376 + $0x90] sm:$0xff]
      %v404 = vld [vmem:[%s376 + $0x98] sm:$0xff]
      %v405 = vld [vmem:[%s376 + $0xa8] sm:$0xff]
      %v406 = vld [vmem:[%s376 + $0xb0] sm:$0xff]
      %v407 = vld [vmem:[%s376 + $0xc0] sm:$0xff]
      %v408 = vld [vmem:[%s376 + $0xc8] sm:$0xff]
      %v409 = vld [vmem:[%s376 + $0xd8] sm:$0xff]
      %v410 = vld [vmem:[%s376 + $0xe0] sm:$0xff]
      %v411 = vld [vmem:[%s376 + $0xf0] sm:$0xff]
      %v412 = vld [vmem:[%s376 + $0xf8] sm:$0xff]
      %v413 = vld [vmem:[%s376 + $0x108] sm:$0xff]
      %v414 = vld [vmem:[%s376 + $0x110] sm:$0xff]
      %v415 = vld [vmem:[%s376 + $0x120] sm:$0xff]
      %v416 = vld [vmem:[%s376 + $0x128] sm:$0xff]
      %v417 = vld [vmem:[%s376 + $0x138] sm:$0xff]
      %v418 = vld [vmem:[%s376 + $0x140] sm:$0xff]
      %v419 = vld [vmem:[%s376 + $0x150] sm:$0xff]
      %v420 = vld [vmem:[%s376 + $0x158] sm:$0xff]
      %v421 = vld [vmem:[%s376 + $0x168] sm:$0xff]
      %v422 = vld [vmem:[%s376 + $0x170] sm:$0xff]
      %v423 = vld [vmem:[%s2] sm:$0xff]
      %v424 = vld [vmem:[%s2 + $0x8] sm:$0xff]
      %v425 = vld [vmem:[%s376 + $0x1] sm:$0xff]
      %v426 = vld [vmem:[%s376 + $0x9] sm:$0xff]
      %v427 = vld [vmem:[%s376 + $0x19] sm:$0xff]
      %v428 = vld [vmem:[%s376 + $0x21] sm:$0xff]
      %v429 = vld [vmem:[%s376 + $0x31] sm:$0xff]
      %v430 = vld [vmem:[%s376 + $0x39] sm:$0xff]
      %v431 = vld [vmem:[%s376 + $0x49] sm:$0xff]
      %v432 = vld [vmem:[%s376 + $0x51] sm:$0xff]
      %v433 = vld [vmem:[%s376 + $0x61] sm:$0xff]
      %v434 = vld [vmem:[%s376 + $0x69] sm:$0xff]
      %v435 = vld [vmem:[%s376 + $0x79] sm:$0xff]
      %v436 = vld [vmem:[%s376 + $0x81] sm:$0xff]
      %v437 = vld [vmem:[%s376 + $0x91] sm:$0xff]
      %v438 = vld [vmem:[%s376 + $0x99] sm:$0xff]
      %v439 = vld [vmem:[%s376 + $0xa9] sm:$0xff]
      %v440 = vld [vmem:[%s376 + $0xb1] sm:$0xff]
      %v441 = vld [vmem:[%s376 + $0xc1] sm:$0xff]
      %v442 = vld [vmem:[%s376 + $0xc9] sm:$0xff]
      %v443 = vld [vmem:[%s376 + $0xd9] sm:$0xff]
      %v444 = vld [vmem:[%s376 + $0xe1] sm:$0xff]
      %v445 = vld [vmem:[%s376 + $0xf1] sm:$0xff]
      %v446 = vld [vmem:[%s376 + $0xf9] sm:$0xff]
      %v447 = vld [vmem:[%s376 + $0x109] sm:$0xff]
      %v448 = vld [vmem:[%s376 + $0x111] sm:$0xff]
      %v449 = vld [vmem:[%s376 + $0x121] sm:$0xff]
      %v450 = vld [vmem:[%s376 + $0x129] sm:$0xff]
      %v451 = vld [vmem:[%s376 + $0x139] sm:$0xff]
      %v452 = vld [vmem:[%s376 + $0x141] sm:$0xff]
      %v453 = vld [vmem:[%s376 + $0x151] sm:$0xff]
      %v454 = vld [vmem:[%s376 + $0x159] sm:$0xff]
      %v455 = vld [vmem:[%s376 + $0x169] sm:$0xff]
      %v456 = vld [vmem:[%s376 + $0x171] sm:$0xff]
      %s457 = scalar_lea.vmem %s2, 16
      %v458 = vld [vmem:[%s457] sm:$0xff]
      %v459 = vld [vmem:[%s457 + $0x8] sm:$0xff]
      %vm460 = vcmask 130048
      %v462 = vsel %vm460, %v425, 0
      %v465 = vsel %vm460, %v426, 0
      %v468 = vsel %vm460, %v427, 0
      %v471 = vsel %vm460, %v428, 0
      %v474 = vsel %vm460, %v429, 0
      %v477 = vsel %vm460, %v430, 0
      %v480 = vsel %vm460, %v431, 0
      %v483 = vsel %vm460, %v432, 0
      %v486 = vsel %vm460, %v433, 0
      %v489 = vsel %vm460, %v434, 0
      %v492 = vsel %vm460, %v435, 0
      %v495 = vsel %vm460, %v436, 0
      %v498 = vsel %vm460, %v437, 0
      %v501 = vsel %vm460, %v438, 0
      %v504 = vsel %vm460, %v439, 0
      %v507 = vsel %vm460, %v440, 0
      %v510 = vsel %vm460, %v441, 0
      %v513 = vsel %vm460, %v442, 0
      %v516 = vsel %vm460, %v443, 0
      %v519 = vsel %vm460, %v444, 0
      %v522 = vsel %vm460, %v445, 0
      %v525 = vsel %vm460, %v446, 0
      %v528 = vsel %vm460, %v447, 0
      %v531 = vsel %vm460, %v448, 0
      %v534 = vsel %vm460, %v449, 0
      %v537 = vsel %vm460, %v450, 0
      %v540 = vsel %vm460, %v451, 0
      %v543 = vsel %vm460, %v452, 0
      %v546 = vsel %vm460, %v453, 0
      %v549 = vsel %vm460, %v454, 0
      %v552 = vsel %vm460, %v455, 0
      %v555 = vsel %vm460, %v456, 0
      %557 = vmatprep.subr.mxu0 0.0
      %558 = vmatpush1.msra.mxu0 0.0
      %559 = vmatprep.subr.mxu0 0.0
      %560 = vmatpush1.msra.mxu0 0.0
      %561 = vmatprep.subr.mxu0 0.0
      %562 = vmatpush1.msra.mxu0 0.0
      %563 = vmatprep.subr.mxu0 0.0
      %564 = vmatpush1.msra.mxu0 0.0
      %565 = vmatprep.subr.mxu0 0.0
      %566 = vmatpush1.msra.mxu0 0.0
      %567 = vmatprep.subr.mxu0 0.0
      %568 = vmatpush1.msra.mxu0 0.0
      %569 = vmatprep.subr.mxu0 0.0
      %570 = vmatpush1.msra.mxu0 0.0
      %571 = vmatprep.subr.mxu0 0.0
      %572 = vmatpush1.msra.mxu0 0.0
      %573 = vmatprep.subr.mxu0 0.0
      %574 = vmatpush1.msra.mxu0 0.0
      %575 = vmatprep.subr.mxu0 0.0
      %576 = vmatpush1.msra.mxu0 0.0
      %577 = vmatprep.subr.mxu0 0.0
      %578 = vmatpush1.msra.mxu0 0.0
      %579 = vmatprep.subr.mxu0 0.0
      %580 = vmatpush1.msra.mxu0 0.0
      %581 = vmatprep.subr.mxu0 0.0
      %582 = vmatpush1.msra.mxu0 0.0
      %583 = vmatprep.subr.mxu0 0.0
      %584 = vmatpush1.msra.mxu0 0.0
      %585 = vmatprep.subr.mxu0 0.0
      %586 = vmatpush1.msra.mxu0 %v459
      %587 = vmatprep.subr.mxu0 0.0
      %588 = vmatpush1.msra.mxu0 %v458
      %589 = vmatprep.subr.mxu0 0.0
      %590 = vmatpush2.msra.mxu0 0.0
      %591 = vmatprep.subr.mxu0 0.0
      %592 = vmatpush2.msra.mxu0 0.0
      %593 = vmatprep.subr.mxu0 0.0
      %594 = vmatpush2.msra.mxu0 0.0
      %595 = vmatprep.subr.mxu0 0.0
      %596 = vmatpush2.msra.mxu0 0.0
      %597 = vmatprep.subr.mxu0 0.0
      %598 = vmatpush2.msra.mxu0 0.0
      %599 = vmatprep.subr.mxu0 0.0
      %600 = vmatpush2.msra.mxu0 0.0
      %601 = vmatprep.subr.mxu0 0.0
      %602 = vmatpush2.msra.mxu0 0.0
      %603 = vmatprep.subr.mxu0 0.0
      %604 = vmatpush2.msra.mxu0 0.0
      %605 = vmatprep.subr.mxu0 0.0
      %606 = vmatpush2.msra.mxu0 0.0
      %607 = vmatprep.subr.mxu0 0.0
      %608 = vmatpush2.msra.mxu0 0.0
      %609 = vmatprep.subr.mxu0 0.0
      %610 = vmatpush2.msra.mxu0 0.0
      %611 = vmatprep.subr.mxu0 0.0
      %612 = vmatpush2.msra.mxu0 0.0
      %613 = vmatprep.subr.mxu0 0.0
      %614 = vmatpush2.msra.mxu0 0.0
      %615 = vmatprep.subr.mxu0 0.0
      %616 = vmatpush2.msra.mxu0 0.0
      %617 = vmatprep.subr.mxu0 0.0
      %618 = vmatpush2.msra.mxu0 0.0
      %619 = vmatprep.subr.mxu0 0.0
      %620 = vmatpush2.msra.mxu0 0.0
      %621 = vmatprep.mubr.f32.mxu0 0.0
      %622 = vmatmul.mubr.f32.gmra.mxu0 %v462
      %v623 = vpop.f32.mrf.mxu0
      %v624 = vadd.f32 0.0, %v623
      %v625 = vpop.f32.mrf.mxu0
      %626 = vmatprep.mubr.f32.mxu0 0.0
      %627 = vmatmul.mubr.f32.gmra.mxu0 %v465
      %v628 = vpop.f32.mrf.mxu0
      %v629 = vadd.f32 0.0, %v628
      %v630 = vpop.f32.mrf.mxu0
      %631 = vmatprep.mubr.f32.mxu0 0.0
      %632 = vmatmul.mubr.f32.gmra.mxu0 %v468
      %v633 = vpop.f32.mrf.mxu0
      %v634 = vadd.f32 0.0, %v633
      %v635 = vpop.f32.mrf.mxu0
      %636 = vmatprep.mubr.f32.mxu0 0.0
      %637 = vmatmul.mubr.f32.gmra.mxu0 %v471
      %v638 = vpop.f32.mrf.mxu0
      %v639 = vadd.f32 0.0, %v638
      %v640 = vpop.f32.mrf.mxu0
      %641 = vmatprep.mubr.f32.mxu0 0.0
      %642 = vmatmul.mubr.f32.gmra.mxu0 %v474
      %v643 = vpop.f32.mrf.mxu0
      %v644 = vadd.f32 0.0, %v643
      %v645 = vpop.f32.mrf.mxu0
      %646 = vmatprep.mubr.f32.mxu0 0.0
      %647 = vmatmul.mubr.f32.gmra.mxu0 %v477
      %v648 = vpop.f32.mrf.mxu0
      %v649 = vadd.f32 0.0, %v648
      %v650 = vpop.f32.mrf.mxu0
      %651 = vmatprep.mubr.f32.mxu0 0.0
      %652 = vmatmul.mubr.f32.gmra.mxu0 %v480
      %v653 = vpop.f32.mrf.mxu0
      %v654 = vadd.f32 0.0, %v653
      %v655 = vpop.f32.mrf.mxu0
      %656 = vmatprep.mubr.f32.mxu0 0.0
      %657 = vmatmul.mubr.f32.gmra.mxu0 %v483
      %v658 = vpop.f32.mrf.mxu0
      %v659 = vadd.f32 0.0, %v658
      %v660 = vpop.f32.mrf.mxu0
      %661 = vmatprep.mubr.f32.mxu0 0.0
      %662 = vmatmul.mubr.f32.gmra.mxu0 %v486
      %v663 = vpop.f32.mrf.mxu0
      %v664 = vadd.f32 0.0, %v663
      %v665 = vpop.f32.mrf.mxu0
      %666 = vmatprep.mubr.f32.mxu0 0.0
      %667 = vmatmul.mubr.f32.gmra.mxu0 %v489
      %v668 = vpop.f32.mrf.mxu0
      %v669 = vadd.f32 0.0, %v668
      %v670 = vpop.f32.mrf.mxu0
      %671 = vmatprep.mubr.f32.mxu0 0.0
      %672 = vmatmul.mubr.f32.gmra.mxu0 %v492
      %v673 = vpop.f32.mrf.mxu0
      %v674 = vadd.f32 0.0, %v673
      %v675 = vpop.f32.mrf.mxu0
      %676 = vmatprep.mubr.f32.mxu0 0.0
      %677 = vmatmul.mubr.f32.gmra.mxu0 %v495
      %v678 = vpop.f32.mrf.mxu0
      %v679 = vadd.f32 0.0, %v678
      %v680 = vpop.f32.mrf.mxu0
      %681 = vmatprep.mubr.f32.mxu0 0.0
      %682 = vmatmul.mubr.f32.gmra.mxu0 %v498
      %v683 = vpop.f32.mrf.mxu0
      %v684 = vadd.f32 0.0, %v683
      %v685 = vpop.f32.mrf.mxu0
      %686 = vmatprep.mubr.f32.mxu0 0.0
      %687 = vmatmul.mubr.f32.gmra.mxu0 %v501
      %v688 = vpop.f32.mrf.mxu0
      %v689 = vadd.f32 0.0, %v688
      %v690 = vpop.f32.mrf.mxu0
      %691 = vmatprep.mubr.f32.mxu0 0.0
      %692 = vmatmul.mubr.f32.gmra.mxu0 %v504
      %v693 = vpop.f32.mrf.mxu0
      %v694 = vadd.f32 0.0, %v693
      %v695 = vpop.f32.mrf.mxu0
      %696 = vmatprep.mubr.f32.mxu0 0.0
      %697 = vmatmul.mubr.f32.gmra.mxu0 %v507
      %v698 = vpop.f32.mrf.mxu0
      %v699 = vadd.f32 0.0, %v698
      %v700 = vpop.f32.mrf.mxu0
      %701 = vmatprep.mubr.f32.mxu0 0.0
      %702 = vmatmul.mubr.f32.gmra.mxu0 %v510
      %v703 = vpop.f32.mrf.mxu0
      %v704 = vadd.f32 0.0, %v703
      %v705 = vpop.f32.mrf.mxu0
      %706 = vmatprep.mubr.f32.mxu0 0.0
      %707 = vmatmul.mubr.f32.gmra.mxu0 %v513
      %v708 = vpop.f32.mrf.mxu0
      %v709 = vadd.f32 0.0, %v708
      %v710 = vpop.f32.mrf.mxu0
      %711 = vmatprep.mubr.f32.mxu0 0.0
      %712 = vmatmul.mubr.f32.gmra.mxu0 %v516
      %v713 = vpop.f32.mrf.mxu0
      %v714 = vadd.f32 0.0, %v713
      %v715 = vpop.f32.mrf.mxu0
      %716 = vmatprep.mubr.f32.mxu0 0.0
      %717 = vmatmul.mubr.f32.gmra.mxu0 %v519
      %v718 = vpop.f32.mrf.mxu0
      %v719 = vadd.f32 0.0, %v718
      %v720 = vpop.f32.mrf.mxu0
      %721 = vmatprep.mubr.f32.mxu0 0.0
      %722 = vmatmul.mubr.f32.gmra.mxu0 %v522
      %v723 = vpop.f32.mrf.mxu0
      %v724 = vadd.f32 0.0, %v723
      %v725 = vpop.f32.mrf.mxu0
      %726 = vmatprep.mubr.f32.mxu0 0.0
      %727 = vmatmul.mubr.f32.gmra.mxu0 %v525
      %v728 = vpop.f32.mrf.mxu0
      %v729 = vadd.f32 0.0, %v728
      %v730 = vpop.f32.mrf.mxu0
      %731 = vmatprep.mubr.f32.mxu0 0.0
      %732 = vmatmul.mubr.f32.gmra.mxu0 %v528
      %v733 = vpop.f32.mrf.mxu0
      %v734 = vadd.f32 0.0, %v733
      %v735 = vpop.f32.mrf.mxu0
      %736 = vmatprep.mubr.f32.mxu0 0.0
      %737 = vmatmul.mubr.f32.gmra.mxu0 %v531
      %v738 = vpop.f32.mrf.mxu0
      %v739 = vadd.f32 0.0, %v738
      %v740 = vpop.f32.mrf.mxu0
      %741 = vmatprep.mubr.f32.mxu0 0.0
      %742 = vmatmul.mubr.f32.gmra.mxu0 %v534
      %v743 = vpop.f32.mrf.mxu0
      %v744 = vadd.f32 0.0, %v743
      %v745 = vpop.f32.mrf.mxu0
      %746 = vmatprep.mubr.f32.mxu0 0.0
      %747 = vmatmul.mubr.f32.gmra.mxu0 %v537
      %v748 = vpop.f32.mrf.mxu0
      %v749 = vadd.f32 0.0, %v748
      %v750 = vpop.f32.mrf.mxu0
      %751 = vmatprep.mubr.f32.mxu0 0.0
      %752 = vmatmul.mubr.f32.gmra.mxu0 %v540
      %v753 = vpop.f32.mrf.mxu0
      %v754 = vadd.f32 0.0, %v753
      %v755 = vpop.f32.mrf.mxu0
      %756 = vmatprep.mubr.f32.mxu0 0.0
      %757 = vmatmul.mubr.f32.gmra.mxu0 %v543
      %v758 = vpop.f32.mrf.mxu0
      %v759 = vadd.f32 0.0, %v758
      %v760 = vpop.f32.mrf.mxu0
      %761 = vmatprep.mubr.f32.mxu0 0.0
      %762 = vmatmul.mubr.f32.gmra.mxu0 %v546
      %v763 = vpop.f32.mrf.mxu0
      %v764 = vadd.f32 0.0, %v763
      %v765 = vpop.f32.mrf.mxu0
      %766 = vmatprep.mubr.f32.mxu0 0.0
      %767 = vmatmul.mubr.f32.gmra.mxu0 %v549
      %v768 = vpop.f32.mrf.mxu0
      %v769 = vadd.f32 0.0, %v768
      %v770 = vpop.f32.mrf.mxu0
      %771 = vmatprep.mubr.f32.mxu0 0.0
      %772 = vmatmul.mubr.f32.gmra.mxu0 %v552
      %v773 = vpop.f32.mrf.mxu0
      %v774 = vadd.f32 0.0, %v773
      %v775 = vpop.f32.mrf.mxu0
      %776 = vmatprep.mubr.f32.mxu0 0.0
      %777 = vmatmul.mubr.f32.gmra.mxu0 %v555
      %v778 = vpop.f32.mrf.mxu0
      %v779 = vadd.f32 0.0, %v778
      %v780 = vpop.f32.mrf.mxu0
      %781 = vdwg.mxu0
      %v783 = vsel %vm460, %v391, 0
      %v786 = vsel %vm460, %v392, 0
      %v789 = vsel %vm460, %v393, 0
      %v792 = vsel %vm460, %v394, 0
      %v795 = vsel %vm460, %v395, 0
      %v798 = vsel %vm460, %v396, 0
      %v801 = vsel %vm460, %v397, 0
      %v804 = vsel %vm460, %v398, 0
      %v807 = vsel %vm460, %v399, 0
      %v810 = vsel %vm460, %v400, 0
      %v813 = vsel %vm460, %v401, 0
      %v816 = vsel %vm460, %v402, 0
      %v819 = vsel %vm460, %v403, 0
      %v822 = vsel %vm460, %v404, 0
      %v825 = vsel %vm460, %v405, 0
      %v828 = vsel %vm460, %v406, 0
      %v831 = vsel %vm460, %v407, 0
      %v834 = vsel %vm460, %v408, 0
      %v837 = vsel %vm460, %v409, 0
      %v840 = vsel %vm460, %v410, 0
      %v843 = vsel %vm460, %v411, 0
      %v846 = vsel %vm460, %v412, 0
      %v849 = vsel %vm460, %v413, 0
      %v852 = vsel %vm460, %v414, 0
      %v855 = vsel %vm460, %v415, 0
      %v858 = vsel %vm460, %v416, 0
      %v861 = vsel %vm460, %v417, 0
      %v864 = vsel %vm460, %v418, 0
      %v867 = vsel %vm460, %v419, 0
      %v870 = vsel %vm460, %v420, 0
      %v873 = vsel %vm460, %v421, 0
      %v876 = vsel %vm460, %v422, 0
      %878 = vmatprep.subr.mxu0 0.0
      %879 = vmatpush1.msra.mxu0 0.0
      %880 = vmatprep.subr.mxu0 0.0
      %881 = vmatpush1.msra.mxu0 0.0
      %882 = vmatprep.subr.mxu0 0.0
      %883 = vmatpush1.msra.mxu0 0.0
      %884 = vmatprep.subr.mxu0 0.0
      %885 = vmatpush1.msra.mxu0 0.0
      %886 = vmatprep.subr.mxu0 0.0
      %887 = vmatpush1.msra.mxu0 0.0
      %888 = vmatprep.subr.mxu0 0.0
      %889 = vmatpush1.msra.mxu0 0.0
      %890 = vmatprep.subr.mxu0 0.0
      %891 = vmatpush1.msra.mxu0 0.0
      %892 = vmatprep.subr.mxu0 0.0
      %893 = vmatpush1.msra.mxu0 0.0
      %894 = vmatprep.subr.mxu0 0.0
      %895 = vmatpush1.msra.mxu0 0.0
      %896 = vmatprep.subr.mxu0 0.0
      %897 = vmatpush1.msra.mxu0 0.0
      %898 = vmatprep.subr.mxu0 0.0
      %899 = vmatpush1.msra.mxu0 0.0
      %900 = vmatprep.subr.mxu0 0.0
      %901 = vmatpush1.msra.mxu0 0.0
      %902 = vmatprep.subr.mxu0 0.0
      %903 = vmatpush1.msra.mxu0 0.0
      %904 = vmatprep.subr.mxu0 0.0
      %905 = vmatpush1.msra.mxu0 0.0
      %906 = vmatprep.subr.mxu0 0.0
      %907 = vmatpush1.msra.mxu0 %v424
      %908 = vmatprep.subr.mxu0 0.0
      %909 = vmatpush1.msra.mxu0 %v423
      %910 = vmatprep.subr.mxu0 0.0
      %911 = vmatpush2.msra.mxu0 0.0
      %912 = vmatprep.subr.mxu0 0.0
      %913 = vmatpush2.msra.mxu0 0.0
      %914 = vmatprep.subr.mxu0 0.0
      %915 = vmatpush2.msra.mxu0 0.0
      %916 = vmatprep.subr.mxu0 0.0
      %917 = vmatpush2.msra.mxu0 0.0
      %918 = vmatprep.subr.mxu0 0.0
      %919 = vmatpush2.msra.mxu0 0.0
      %920 = vmatprep.subr.mxu0 0.0
      %921 = vmatpush2.msra.mxu0 0.0
      %922 = vmatprep.subr.mxu0 0.0
      %923 = vmatpush2.msra.mxu0 0.0
      %924 = vmatprep.subr.mxu0 0.0
      %925 = vmatpush2.msra.mxu0 0.0
      %926 = vmatprep.subr.mxu0 0.0
      %927 = vmatpush2.msra.mxu0 0.0
      %928 = vmatprep.subr.mxu0 0.0
      %929 = vmatpush2.msra.mxu0 0.0
      %930 = vmatprep.subr.mxu0 0.0
      %931 = vmatpush2.msra.mxu0 0.0
      %932 = vmatprep.subr.mxu0 0.0
      %933 = vmatpush2.msra.mxu0 0.0
      %934 = vmatprep.subr.mxu0 0.0
      %935 = vmatpush2.msra.mxu0 0.0
      %936 = vmatprep.subr.mxu0 0.0
      %937 = vmatpush2.msra.mxu0 0.0
      %938 = vmatprep.subr.mxu0 0.0
      %939 = vmatpush2.msra.mxu0 0.0
      %940 = vmatprep.subr.mxu0 0.0
      %941 = vmatpush2.msra.mxu0 0.0
      %942 = vmatprep.mubr.f32.mxu0 0.0
      %943 = vmatmul.mubr.f32.gmra.mxu0 %v783
      %v944 = vpop.f32.mrf.mxu0
      %v945 = vadd.f32 %v624, %v944
      %v946 = vpop.f32.mrf.mxu0
      %947 = vmatprep.mubr.f32.mxu0 0.0
      %948 = vmatmul.mubr.f32.gmra.mxu0 %v786
      %v949 = vpop.f32.mrf.mxu0
      %v950 = vadd.f32 %v629, %v949
      %v951 = vpop.f32.mrf.mxu0
      %952 = vmatprep.mubr.f32.mxu0 0.0
      %953 = vmatmul.mubr.f32.gmra.mxu0 %v789
      %v954 = vpop.f32.mrf.mxu0
      %v955 = vadd.f32 %v634, %v954
      %v956 = vpop.f32.mrf.mxu0
      %957 = vmatprep.mubr.f32.mxu0 0.0
      %958 = vmatmul.mubr.f32.gmra.mxu0 %v792
      %v959 = vpop.f32.mrf.mxu0
      %v960 = vadd.f32 %v639, %v959
      %v961 = vpop.f32.mrf.mxu0
      %962 = vmatprep.mubr.f32.mxu0 0.0
      %963 = vmatmul.mubr.f32.gmra.mxu0 %v795
      %v964 = vpop.f32.mrf.mxu0
      %v965 = vadd.f32 %v644, %v964
      %v966 = vpop.f32.mrf.mxu0
      %967 = vmatprep.mubr.f32.mxu0 0.0
      %968 = vmatmul.mubr.f32.gmra.mxu0 %v798
      %v969 = vpop.f32.mrf.mxu0
      %v970 = vadd.f32 %v649, %v969
      %v971 = vpop.f32.mrf.mxu0
      %972 = vmatprep.mubr.f32.mxu0 0.0
      %973 = vmatmul.mubr.f32.gmra.mxu0 %v801
      %v974 = vpop.f32.mrf.mxu0
      %v975 = vadd.f32 %v654, %v974
      %v976 = vpop.f32.mrf.mxu0
      %977 = vmatprep.mubr.f32.mxu0 0.0
      %978 = vmatmul.mubr.f32.gmra.mxu0 %v804
      %v979 = vpop.f32.mrf.mxu0
      %v980 = vadd.f32 %v659, %v979
      %v981 = vpop.f32.mrf.mxu0
      %982 = vmatprep.mubr.f32.mxu0 0.0
      %983 = vmatmul.mubr.f32.gmra.mxu0 %v807
      %v984 = vpop.f32.mrf.mxu0
      %v985 = vadd.f32 %v664, %v984
      %v986 = vpop.f32.mrf.mxu0
      %987 = vmatprep.mubr.f32.mxu0 0.0
      %988 = vmatmul.mubr.f32.gmra.mxu0 %v810
      %v989 = vpop.f32.mrf.mxu0
      %v990 = vadd.f32 %v669, %v989
      %v991 = vpop.f32.mrf.mxu0
      %992 = vmatprep.mubr.f32.mxu0 0.0
      %993 = vmatmul.mubr.f32.gmra.mxu0 %v813
      %v994 = vpop.f32.mrf.mxu0
      %v995 = vadd.f32 %v674, %v994
      %v996 = vpop.f32.mrf.mxu0
      %997 = vmatprep.mubr.f32.mxu0 0.0
      %998 = vmatmul.mubr.f32.gmra.mxu0 %v816
      %v999 = vpop.f32.mrf.mxu0
      %v1000 = vadd.f32 %v679, %v999
      %v1001 = vpop.f32.mrf.mxu0
      %1002 = vmatprep.mubr.f32.mxu0 0.0
      %1003 = vmatmul.mubr.f32.gmra.mxu0 %v819
      %v1004 = vpop.f32.mrf.mxu0
      %v1005 = vadd.f32 %v684, %v1004
      %v1006 = vpop.f32.mrf.mxu0
      %1007 = vmatprep.mubr.f32.mxu0 0.0
      %1008 = vmatmul.mubr.f32.gmra.mxu0 %v822
      %v1009 = vpop.f32.mrf.mxu0
      %v1010 = vadd.f32 %v689, %v1009
      %v1011 = vpop.f32.mrf.mxu0
      %1012 = vmatprep.mubr.f32.mxu0 0.0
      %1013 = vmatmul.mubr.f32.gmra.mxu0 %v825
      %v1014 = vpop.f32.mrf.mxu0
      %v1015 = vadd.f32 %v694, %v1014
      %v1016 = vpop.f32.mrf.mxu0
      %1017 = vmatprep.mubr.f32.mxu0 0.0
      %1018 = vmatmul.mubr.f32.gmra.mxu0 %v828
      %v1019 = vpop.f32.mrf.mxu0
      %v1020 = vadd.f32 %v699, %v1019
      %v1021 = vpop.f32.mrf.mxu0
      %1022 = vmatprep.mubr.f32.mxu0 0.0
      %1023 = vmatmul.mubr.f32.gmra.mxu0 %v831
      %v1024 = vpop.f32.mrf.mxu0
      %v1025 = vadd.f32 %v704, %v1024
      %v1026 = vpop.f32.mrf.mxu0
      %1027 = vmatprep.mubr.f32.mxu0 0.0
      %1028 = vmatmul.mubr.f32.gmra.mxu0 %v834
      %v1029 = vpop.f32.mrf.mxu0
      %v1030 = vadd.f32 %v709, %v1029
      %v1031 = vpop.f32.mrf.mxu0
      %1032 = vmatprep.mubr.f32.mxu0 0.0
      %1033 = vmatmul.mubr.f32.gmra.mxu0 %v837
      %v1034 = vpop.f32.mrf.mxu0
      %v1035 = vadd.f32 %v714, %v1034
      %v1036 = vpop.f32.mrf.mxu0
      %1037 = vmatprep.mubr.f32.mxu0 0.0
      %1038 = vmatmul.mubr.f32.gmra.mxu0 %v840
      %v1039 = vpop.f32.mrf.mxu0
      %v1040 = vadd.f32 %v719, %v1039
      %v1041 = vpop.f32.mrf.mxu0
      %1042 = vmatprep.mubr.f32.mxu0 0.0
      %1043 = vmatmul.mubr.f32.gmra.mxu0 %v843
      %v1044 = vpop.f32.mrf.mxu0
      %v1045 = vadd.f32 %v724, %v1044
      %v1046 = vpop.f32.mrf.mxu0
      %1047 = vmatprep.mubr.f32.mxu0 0.0
      %1048 = vmatmul.mubr.f32.gmra.mxu0 %v846
      %v1049 = vpop.f32.mrf.mxu0
      %v1050 = vadd.f32 %v729, %v1049
      %v1051 = vpop.f32.mrf.mxu0
      %1052 = vmatprep.mubr.f32.mxu0 0.0
      %1053 = vmatmul.mubr.f32.gmra.mxu0 %v849
      %v1054 = vpop.f32.mrf.mxu0
      %v1055 = vadd.f32 %v734, %v1054
      %v1056 = vpop.f32.mrf.mxu0
      %1057 = vmatprep.mubr.f32.mxu0 0.0
      %1058 = vmatmul.mubr.f32.gmra.mxu0 %v852
      %v1059 = vpop.f32.mrf.mxu0
      %v1060 = vadd.f32 %v739, %v1059
      %v1061 = vpop.f32.mrf.mxu0
      %1062 = vmatprep.mubr.f32.mxu0 0.0
      %1063 = vmatmul.mubr.f32.gmra.mxu0 %v855
      %v1064 = vpop.f32.mrf.mxu0
      %v1065 = vadd.f32 %v744, %v1064
      %v1066 = vpop.f32.mrf.mxu0
      %1067 = vmatprep.mubr.f32.mxu0 0.0
      %1068 = vmatmul.mubr.f32.gmra.mxu0 %v858
      %v1069 = vpop.f32.mrf.mxu0
      %v1070 = vadd.f32 %v749, %v1069
      %v1071 = vpop.f32.mrf.mxu0
      %1072 = vmatprep.mubr.f32.mxu0 0.0
      %1073 = vmatmul.mubr.f32.gmra.mxu0 %v861
      %v1074 = vpop.f32.mrf.mxu0
      %v1075 = vadd.f32 %v754, %v1074
      %v1076 = vpop.f32.mrf.mxu0
      %1077 = vmatprep.mubr.f32.mxu0 0.0
      %1078 = vmatmul.mubr.f32.gmra.mxu0 %v864
      %v1079 = vpop.f32.mrf.mxu0
      %v1080 = vadd.f32 %v759, %v1079
      %v1081 = vpop.f32.mrf.mxu0
      %1082 = vmatprep.mubr.f32.mxu0 0.0
      %1083 = vmatmul.mubr.f32.gmra.mxu0 %v867
      %v1084 = vpop.f32.mrf.mxu0
      %v1085 = vadd.f32 %v764, %v1084
      %v1086 = vpop.f32.mrf.mxu0
      %1087 = vmatprep.mubr.f32.mxu0 0.0
      %1088 = vmatmul.mubr.f32.gmra.mxu0 %v870
      %v1089 = vpop.f32.mrf.mxu0
      %v1090 = vadd.f32 %v769, %v1089
      %v1091 = vpop.f32.mrf.mxu0
      %1092 = vmatprep.mubr.f32.mxu0 0.0
      %1093 = vmatmul.mubr.f32.gmra.mxu0 %v873
      %v1094 = vpop.f32.mrf.mxu0
      %v1095 = vadd.f32 %v774, %v1094
      %v1096 = vpop.f32.mrf.mxu0
      %1097 = vmatprep.mubr.f32.mxu0 0.0
      %1098 = vmatmul.mubr.f32.gmra.mxu0 %v876
      %v1099 = vpop.f32.mrf.mxu0
      %v1100 = vadd.f32 %v779, %v1099
      %v1101 = vpop.f32.mrf.mxu0
      %1102 = vdwg.mxu0
      %v1103 = vld [vmem:[%s376 + $0x2] sm:$0xff]
      %v1104 = vld [vmem:[%s376 + $0xa] sm:$0xff]
      %v1105 = vld [vmem:[%s376 + $0x1a] sm:$0xff]
      %v1106 = vld [vmem:[%s376 + $0x22] sm:$0xff]
      %v1107 = vld [vmem:[%s376 + $0x32] sm:$0xff]
      %v1108 = vld [vmem:[%s376 + $0x3a] sm:$0xff]
      %v1109 = vld [vmem:[%s376 + $0x4a] sm:$0xff]
      %v1110 = vld [vmem:[%s376 + $0x52] sm:$0xff]
      %v1111 = vld [vmem:[%s376 + $0x62] sm:$0xff]
      %v1112 = vld [vmem:[%s376 + $0x6a] sm:$0xff]
      %v1113 = vld [vmem:[%s376 + $0x7a] sm:$0xff]
      %v1114 = vld [vmem:[%s376 + $0x82] sm:$0xff]
      %v1115 = vld [vmem:[%s376 + $0x92] sm:$0xff]
      %v1116 = vld [vmem:[%s376 + $0x9a] sm:$0xff]
      %v1117 = vld [vmem:[%s376 + $0xaa] sm:$0xff]
      %v1118 = vld [vmem:[%s376 + $0xb2] sm:$0xff]
      %v1119 = vld [vmem:[%s376 + $0xc2] sm:$0xff]
      %v1120 = vld [vmem:[%s376 + $0xca] sm:$0xff]
      %v1121 = vld [vmem:[%s376 + $0xda] sm:$0xff]
      %v1122 = vld [vmem:[%s376 + $0xe2] sm:$0xff]
      %v1123 = vld [vmem:[%s376 + $0xf2] sm:$0xff]
      %v1124 = vld [vmem:[%s376 + $0xfa] sm:$0xff]
      %v1125 = vld [vmem:[%s376 + $0x10a] sm:$0xff]
      %v1126 = vld [vmem:[%s376 + $0x112] sm:$0xff]
      %v1127 = vld [vmem:[%s376 + $0x122] sm:$0xff]
      %v1128 = vld [vmem:[%s376 + $0x12a] sm:$0xff]
      %v1129 = vld [vmem:[%s376 + $0x13a] sm:$0xff]
      %v1130 = vld [vmem:[%s376 + $0x142] sm:$0xff]
      %v1131 = vld [vmem:[%s376 + $0x152] sm:$0xff]
      %v1132 = vld [vmem:[%s376 + $0x15a] sm:$0xff]
      %v1133 = vld [vmem:[%s376 + $0x16a] sm:$0xff]
      %v1134 = vld [vmem:[%s376 + $0x172] sm:$0xff]
      %s1135 = scalar_lea.vmem %s2, 32
      %v1136 = vld [vmem:[%s1135] sm:$0xff]
      %v1137 = vld [vmem:[%s1135 + $0x8] sm:$0xff]
      %v1139 = vsel %vm460, %v1103, 0
      %v1142 = vsel %vm460, %v1104, 0
      %v1145 = vsel %vm460, %v1105, 0
      %v1148 = vsel %vm460, %v1106, 0
      %v1151 = vsel %vm460, %v1107, 0
      %v1154 = vsel %vm460, %v1108, 0
      %v1157 = vsel %vm460, %v1109, 0
      %v1160 = vsel %vm460, %v1110, 0
      %v1163 = vsel %vm460, %v1111, 0
      %v1166 = vsel %vm460, %v1112, 0
      %v1169 = vsel %vm460, %v1113, 0
      %v1172 = vsel %vm460, %v1114, 0
      %v1175 = vsel %vm460, %v1115, 0
      %v1178 = vsel %vm460, %v1116, 0
      %v1181 = vsel %vm460, %v1117, 0
      %v1184 = vsel %vm460, %v1118, 0
      %v1187 = vsel %vm460, %v1119, 0
      %v1190 = vsel %vm460, %v1120, 0
      %v1193 = vsel %vm460, %v1121, 0
      %v1196 = vsel %vm460, %v1122, 0
      %v1199 = vsel %vm460, %v1123, 0
      %v1202 = vsel %vm460, %v1124, 0
      %v1205 = vsel %vm460, %v1125, 0
      %v1208 = vsel %vm460, %v1126, 0
      %v1211 = vsel %vm460, %v1127, 0
      %v1214 = vsel %vm460, %v1128, 0
      %v1217 = vsel %vm460, %v1129, 0
      %v1220 = vsel %vm460, %v1130, 0
      %v1223 = vsel %vm460, %v1131, 0
      %v1226 = vsel %vm460, %v1132, 0
      %v1229 = vsel %vm460, %v1133, 0
      %v1232 = vsel %vm460, %v1134, 0
      %1234 = vmatprep.subr.mxu0 0.0
      %1235 = vmatpush1.msra.mxu0 0.0
      %1236 = vmatprep.subr.mxu0 0.0
      %1237 = vmatpush1.msra.mxu0 0.0
      %1238 = vmatprep.subr.mxu0 0.0
      %1239 = vmatpush1.msra.mxu0 0.0
      %1240 = vmatprep.subr.mxu0 0.0
      %1241 = vmatpush1.msra.mxu0 0.0
      %1242 = vmatprep.subr.mxu0 0.0
      %1243 = vmatpush1.msra.mxu0 0.0
      %1244 = vmatprep.subr.mxu0 0.0
      %1245 = vmatpush1.msra.mxu0 0.0
      %1246 = vmatprep.subr.mxu0 0.0
      %1247 = vmatpush1.msra.mxu0 0.0
      %1248 = vmatprep.subr.mxu0 0.0
      %1249 = vmatpush1.msra.mxu0 0.0
      %1250 = vmatprep.subr.mxu0 0.0
      %1251 = vmatpush1.msra.mxu0 0.0
      %1252 = vmatprep.subr.mxu0 0.0
      %1253 = vmatpush1.msra.mxu0 0.0
      %1254 = vmatprep.subr.mxu0 0.0
      %1255 = vmatpush1.msra.mxu0 0.0
      %1256 = vmatprep.subr.mxu0 0.0
      %1257 = vmatpush1.msra.mxu0 0.0
      %1258 = vmatprep.subr.mxu0 0.0
      %1259 = vmatpush1.msra.mxu0 0.0
      %1260 = vmatprep.subr.mxu0 0.0
      %1261 = vmatpush1.msra.mxu0 0.0
      %1262 = vmatprep.subr.mxu0 0.0
      %1263 = vmatpush1.msra.mxu0 %v1137
      %1264 = vmatprep.subr.mxu0 0.0
      %1265 = vmatpush1.msra.mxu0 %v1136
      %1266 = vmatprep.subr.mxu0 0.0
      %1267 = vmatpush2.msra.mxu0 0.0
      %1268 = vmatprep.subr.mxu0 0.0
      %1269 = vmatpush2.msra.mxu0 0.0
      %1270 = vmatprep.subr.mxu0 0.0
      %1271 = vmatpush2.msra.mxu0 0.0
      %1272 = vmatprep.subr.mxu0 0.0
      %1273 = vmatpush2.msra.mxu0 0.0
      %1274 = vmatprep.subr.mxu0 0.0
      %1275 = vmatpush2.msra.mxu0 0.0
      %1276 = vmatprep.subr.mxu0 0.0
      %1277 = vmatpush2.msra.mxu0 0.0
      %1278 = vmatprep.subr.mxu0 0.0
      %1279 = vmatpush2.msra.mxu0 0.0
      %1280 = vmatprep.subr.mxu0 0.0
      %1281 = vmatpush2.msra.mxu0 0.0
      %1282 = vmatprep.subr.mxu0 0.0
      %1283 = vmatpush2.msra.mxu0 0.0
      %1284 = vmatprep.subr.mxu0 0.0
      %1285 = vmatpush2.msra.mxu0 0.0
      %1286 = vmatprep.subr.mxu0 0.0
      %1287 = vmatpush2.msra.mxu0 0.0
      %1288 = vmatprep.subr.mxu0 0.0
      %1289 = vmatpush2.msra.mxu0 0.0
      %1290 = vmatprep.subr.mxu0 0.0
      %1291 = vmatpush2.msra.mxu0 0.0
      %1292 = vmatprep.subr.mxu0 0.0
      %1293 = vmatpush2.msra.mxu0 0.0
      %1294 = vmatprep.subr.mxu0 0.0
      %1295 = vmatpush2.msra.mxu0 0.0
      %1296 = vmatprep.subr.mxu0 0.0
      %1297 = vmatpush2.msra.mxu0 0.0
      %1298 = vmatprep.mubr.f32.mxu0 0.0
      %1299 = vmatmul.mubr.f32.gmra.mxu0 %v1139
      %v1300 = vpop.f32.mrf.mxu0
      %v1301 = vadd.f32 0.0, %v1300
      %v1302 = vpop.f32.mrf.mxu0
      %1303 = vmatprep.mubr.f32.mxu0 0.0
      %1304 = vmatmul.mubr.f32.gmra.mxu0 %v1142
      %v1305 = vpop.f32.mrf.mxu0
      %v1306 = vadd.f32 0.0, %v1305
      %v1307 = vpop.f32.mrf.mxu0
      %1308 = vmatprep.mubr.f32.mxu0 0.0
      %1309 = vmatmul.mubr.f32.gmra.mxu0 %v1145
      %v1310 = vpop.f32.mrf.mxu0
      %v1311 = vadd.f32 0.0, %v1310
      %v1312 = vpop.f32.mrf.mxu0
      %1313 = vmatprep.mubr.f32.mxu0 0.0
      %1314 = vmatmul.mubr.f32.gmra.mxu0 %v1148
      %v1315 = vpop.f32.mrf.mxu0
      %v1316 = vadd.f32 0.0, %v1315
      %v1317 = vpop.f32.mrf.mxu0
      %1318 = vmatprep.mubr.f32.mxu0 0.0
      %1319 = vmatmul.mubr.f32.gmra.mxu0 %v1151
      %v1320 = vpop.f32.mrf.mxu0
      %v1321 = vadd.f32 0.0, %v1320
      %v1322 = vpop.f32.mrf.mxu0
      %1323 = vmatprep.mubr.f32.mxu0 0.0
      %1324 = vmatmul.mubr.f32.gmra.mxu0 %v1154
      %v1325 = vpop.f32.mrf.mxu0
      %v1326 = vadd.f32 0.0, %v1325
      %v1327 = vpop.f32.mrf.mxu0
      %1328 = vmatprep.mubr.f32.mxu0 0.0
      %1329 = vmatmul.mubr.f32.gmra.mxu0 %v1157
      %v1330 = vpop.f32.mrf.mxu0
      %v1331 = vadd.f32 0.0, %v1330
      %v1332 = vpop.f32.mrf.mxu0
      %1333 = vmatprep.mubr.f32.mxu0 0.0
      %1334 = vmatmul.mubr.f32.gmra.mxu0 %v1160
      %v1335 = vpop.f32.mrf.mxu0
      %v1336 = vadd.f32 0.0, %v1335
      %v1337 = vpop.f32.mrf.mxu0
      %1338 = vmatprep.mubr.f32.mxu0 0.0
      %1339 = vmatmul.mubr.f32.gmra.mxu0 %v1163
      %v1340 = vpop.f32.mrf.mxu0
      %v1341 = vadd.f32 0.0, %v1340
      %v1342 = vpop.f32.mrf.mxu0
      %1343 = vmatprep.mubr.f32.mxu0 0.0
      %1344 = vmatmul.mubr.f32.gmra.mxu0 %v1166
      %v1345 = vpop.f32.mrf.mxu0
      %v1346 = vadd.f32 0.0, %v1345
      %v1347 = vpop.f32.mrf.mxu0
      %1348 = vmatprep.mubr.f32.mxu0 0.0
      %1349 = vmatmul.mubr.f32.gmra.mxu0 %v1169
      %v1350 = vpop.f32.mrf.mxu0
      %v1351 = vadd.f32 0.0, %v1350
      %v1352 = vpop.f32.mrf.mxu0
      %1353 = vmatprep.mubr.f32.mxu0 0.0
      %1354 = vmatmul.mubr.f32.gmra.mxu0 %v1172
      %v1355 = vpop.f32.mrf.mxu0
      %v1356 = vadd.f32 0.0, %v1355
      %v1357 = vpop.f32.mrf.mxu0
      %1358 = vmatprep.mubr.f32.mxu0 0.0
      %1359 = vmatmul.mubr.f32.gmra.mxu0 %v1175
      %v1360 = vpop.f32.mrf.mxu0
      %v1361 = vadd.f32 0.0, %v1360
      %v1362 = vpop.f32.mrf.mxu0
      %1363 = vmatprep.mubr.f32.mxu0 0.0
      %1364 = vmatmul.mubr.f32.gmra.mxu0 %v1178
      %v1365 = vpop.f32.mrf.mxu0
      %v1366 = vadd.f32 0.0, %v1365
      %v1367 = vpop.f32.mrf.mxu0
      %1368 = vmatprep.mubr.f32.mxu0 0.0
      %1369 = vmatmul.mubr.f32.gmra.mxu0 %v1181
      %v1370 = vpop.f32.mrf.mxu0
      %v1371 = vadd.f32 0.0, %v1370
      %v1372 = vpop.f32.mrf.mxu0
      %1373 = vmatprep.mubr.f32.mxu0 0.0
      %1374 = vmatmul.mubr.f32.gmra.mxu0 %v1184
      %v1375 = vpop.f32.mrf.mxu0
      %v1376 = vadd.f32 0.0, %v1375
      %v1377 = vpop.f32.mrf.mxu0
      %1378 = vmatprep.mubr.f32.mxu0 0.0
      %1379 = vmatmul.mubr.f32.gmra.mxu0 %v1187
      %v1380 = vpop.f32.mrf.mxu0
      %v1381 = vadd.f32 0.0, %v1380
      %v1382 = vpop.f32.mrf.mxu0
      %1383 = vmatprep.mubr.f32.mxu0 0.0
      %1384 = vmatmul.mubr.f32.gmra.mxu0 %v1190
      %v1385 = vpop.f32.mrf.mxu0
      %v1386 = vadd.f32 0.0, %v1385
      %v1387 = vpop.f32.mrf.mxu0
      %1388 = vmatprep.mubr.f32.mxu0 0.0
      %1389 = vmatmul.mubr.f32.gmra.mxu0 %v1193
      %v1390 = vpop.f32.mrf.mxu0
      %v1391 = vadd.f32 0.0, %v1390
      %v1392 = vpop.f32.mrf.mxu0
      %1393 = vmatprep.mubr.f32.mxu0 0.0
      %1394 = vmatmul.mubr.f32.gmra.mxu0 %v1196
      %v1395 = vpop.f32.mrf.mxu0
      %v1396 = vadd.f32 0.0, %v1395
      %v1397 = vpop.f32.mrf.mxu0
      %1398 = vmatprep.mubr.f32.mxu0 0.0
      %1399 = vmatmul.mubr.f32.gmra.mxu0 %v1199
      %v1400 = vpop.f32.mrf.mxu0
      %v1401 = vadd.f32 0.0, %v1400
      %v1402 = vpop.f32.mrf.mxu0
      %1403 = vmatprep.mubr.f32.mxu0 0.0
      %1404 = vmatmul.mubr.f32.gmra.mxu0 %v1202
      %v1405 = vpop.f32.mrf.mxu0
      %v1406 = vadd.f32 0.0, %v1405
      %v1407 = vpop.f32.mrf.mxu0
      %1408 = vmatprep.mubr.f32.mxu0 0.0
      %1409 = vmatmul.mubr.f32.gmra.mxu0 %v1205
      %v1410 = vpop.f32.mrf.mxu0
      %v1411 = vadd.f32 0.0, %v1410
      %v1412 = vpop.f32.mrf.mxu0
      %1413 = vmatprep.mubr.f32.mxu0 0.0
      %1414 = vmatmul.mubr.f32.gmra.mxu0 %v1208
      %v1415 = vpop.f32.mrf.mxu0
      %v1416 = vadd.f32 0.0, %v1415
      %v1417 = vpop.f32.mrf.mxu0
      %1418 = vmatprep.mubr.f32.mxu0 0.0
      %1419 = vmatmul.mubr.f32.gmra.mxu0 %v1211
      %v1420 = vpop.f32.mrf.mxu0
      %v1421 = vadd.f32 0.0, %v1420
      %v1422 = vpop.f32.mrf.mxu0
      %1423 = vmatprep.mubr.f32.mxu0 0.0
      %1424 = vmatmul.mubr.f32.gmra.mxu0 %v1214
      %v1425 = vpop.f32.mrf.mxu0
      %v1426 = vadd.f32 0.0, %v1425
      %v1427 = vpop.f32.mrf.mxu0
      %1428 = vmatprep.mubr.f32.mxu0 0.0
      %1429 = vmatmul.mubr.f32.gmra.mxu0 %v1217
      %v1430 = vpop.f32.mrf.mxu0
      %v1431 = vadd.f32 0.0, %v1430
      %v1432 = vpop.f32.mrf.mxu0
      %1433 = vmatprep.mubr.f32.mxu0 0.0
      %1434 = vmatmul.mubr.f32.gmra.mxu0 %v1220
      %v1435 = vpop.f32.mrf.mxu0
      %v1436 = vadd.f32 0.0, %v1435
      %v1437 = vpop.f32.mrf.mxu0
      %1438 = vmatprep.mubr.f32.mxu0 0.0
      %1439 = vmatmul.mubr.f32.gmra.mxu0 %v1223
      %v1440 = vpop.f32.mrf.mxu0
      %v1441 = vadd.f32 0.0, %v1440
      %v1442 = vpop.f32.mrf.mxu0
      %1443 = vmatprep.mubr.f32.mxu0 0.0
      %1444 = vmatmul.mubr.f32.gmra.mxu0 %v1226
      %v1445 = vpop.f32.mrf.mxu0
      %v1446 = vadd.f32 0.0, %v1445
      %v1447 = vpop.f32.mrf.mxu0
      %1448 = vmatprep.mubr.f32.mxu0 0.0
      %1449 = vmatmul.mubr.f32.gmra.mxu0 %v1229
      %v1450 = vpop.f32.mrf.mxu0
      %v1451 = vadd.f32 0.0, %v1450
      %v1452 = vpop.f32.mrf.mxu0
      %1453 = vmatprep.mubr.f32.mxu0 0.0
      %1454 = vmatmul.mubr.f32.gmra.mxu0 %v1232
      %v1455 = vpop.f32.mrf.mxu0
      %v1456 = vadd.f32 0.0, %v1455
      %v1457 = vpop.f32.mrf.mxu0
      %1458 = vdwg.mxu0
      %v1459 = vadd.f32 %v945, %v1301
      %v1460 = vadd.f32 %v950, %v1306
      %v1461 = vadd.f32 %v955, %v1311
      %v1462 = vadd.f32 %v960, %v1316
      %v1463 = vadd.f32 %v965, %v1321
      %v1464 = vadd.f32 %v970, %v1326
      %v1465 = vadd.f32 %v975, %v1331
      %v1466 = vadd.f32 %v980, %v1336
      %v1467 = vadd.f32 %v985, %v1341
      %v1468 = vadd.f32 %v990, %v1346
      %v1469 = vadd.f32 %v995, %v1351
      %v1470 = vadd.f32 %v1000, %v1356
      %v1471 = vadd.f32 %v1005, %v1361
      %v1472 = vadd.f32 %v1010, %v1366
      %v1473 = vadd.f32 %v1015, %v1371
      %v1474 = vadd.f32 %v1020, %v1376
      %v1475 = vadd.f32 %v1025, %v1381
      %v1476 = vadd.f32 %v1030, %v1386
      %v1477 = vadd.f32 %v1035, %v1391
      %v1478 = vadd.f32 %v1040, %v1396
      %v1479 = vadd.f32 %v1045, %v1401
      %v1480 = vadd.f32 %v1050, %v1406
      %v1481 = vadd.f32 %v1055, %v1411
      %v1482 = vadd.f32 %v1060, %v1416
      %v1483 = vadd.f32 %v1065, %v1421
      %v1484 = vadd.f32 %v1070, %v1426
      %v1485 = vadd.f32 %v1075, %v1431
      %v1486 = vadd.f32 %v1080, %v1436
      %v1487 = vadd.f32 %v1085, %v1441
      %v1488 = vadd.f32 %v1090, %v1446
      %v1489 = vadd.f32 %v1095, %v1451
      %v1490 = vadd.f32 %v1100, %v1456
      %v1491 = vld [vmem:[%s8] sm:$0x1]
      %v1492 = vlaneseq
      %v1493 = vshrl.u32 %v1492, 7
      %v1494 = vsub.s32 0, %v1493
      %v1495 = vrot.slane %v1491, %v1494
      %v1496 = vadd.f32 %v1459, %v1495
      %v1497 = vadd.f32 %v1460, %v1495
      %v1498 = vadd.f32 %v1461, %v1495
      %v1499 = vadd.f32 %v1462, %v1495
      %v1500 = vadd.f32 %v1463, %v1495
      %v1501 = vadd.f32 %v1464, %v1495
      %v1502 = vadd.f32 %v1465, %v1495
      %v1503 = vadd.f32 %v1466, %v1495
      %v1504 = vadd.f32 %v1467, %v1495
      %v1505 = vadd.f32 %v1468, %v1495
      %v1506 = vadd.f32 %v1469, %v1495
      %v1507 = vadd.f32 %v1470, %v1495
      %v1508 = vadd.f32 %v1471, %v1495
      %v1509 = vadd.f32 %v1472, %v1495
      %v1510 = vadd.f32 %v1473, %v1495
      %v1511 = vadd.f32 %v1474, %v1495
      %v1512 = vadd.f32 %v1475, %v1495
      %v1513 = vadd.f32 %v1476, %v1495
      %v1514 = vadd.f32 %v1477, %v1495
      %v1515 = vadd.f32 %v1478, %v1495
      %v1516 = vadd.f32 %v1479, %v1495
      %v1517 = vadd.f32 %v1480, %v1495
      %v1518 = vadd.f32 %v1481, %v1495
      %v1519 = vadd.f32 %v1482, %v1495
      %v1520 = vadd.f32 %v1483, %v1495
      %v1521 = vadd.f32 %v1484, %v1495
      %v1522 = vadd.f32 %v1485, %v1495
      %v1523 = vadd.f32 %v1486, %v1495
      %v1524 = vadd.f32 %v1487, %v1495
      %v1525 = vadd.f32 %v1488, %v1495
      %v1526 = vadd.f32 %v1489, %v1495
      %v1527 = vadd.f32 %v1490, %v1495
      %vm1528 = vcmask 64512
      %v1529 = vsel %vm1528, %v1496, 0.0
      %1530 = vadd.xlane.f32.xlu0 %v1529
      %v1531 = vpop.xlane.xlu0 %1530
      %v1532 = vsel %vm1528, %v1497, 0.0
      %1533 = vadd.xlane.f32.xlu0 %v1532
      %v1534 = vpop.xlane.xlu0 %1533
      %v1535 = vsel %vm1528, %v1498, 0.0
      %1536 = vadd.xlane.f32.xlu0 %v1535
      %v1537 = vpop.xlane.xlu0 %1536
      %v1538 = vsel %vm1528, %v1499, 0.0
      %1539 = vadd.xlane.f32.xlu0 %v1538
      %v1540 = vpop.xlane.xlu0 %1539
      %v1541 = vsel %vm1528, %v1500, 0.0
      %1542 = vadd.xlane.f32.xlu0 %v1541
      %v1543 = vpop.xlane.xlu0 %1542
      %v1544 = vsel %vm1528, %v1501, 0.0
      %1545 = vadd.xlane.f32.xlu0 %v1544
      %v1546 = vpop.xlane.xlu0 %1545
      %v1547 = vsel %vm1528, %v1502, 0.0
      %1548 = vadd.xlane.f32.xlu0 %v1547
      %v1549 = vpop.xlane.xlu0 %1548
      %v1550 = vsel %vm1528, %v1503, 0.0
      %1551 = vadd.xlane.f32.xlu0 %v1550
      %v1552 = vpop.xlane.xlu0 %1551
      %v1553 = vsel %vm1528, %v1504, 0.0
      %1554 = vadd.xlane.f32.xlu0 %v1553
      %v1555 = vpop.xlane.xlu0 %1554
      %v1556 = vsel %vm1528, %v1505, 0.0
      %1557 = vadd.xlane.f32.xlu0 %v1556
      %v1558 = vpop.xlane.xlu0 %1557
      %v1559 = vsel %vm1528, %v1506, 0.0
      %1560 = vadd.xlane.f32.xlu0 %v1559
      %v1561 = vpop.xlane.xlu0 %1560
      %v1562 = vsel %vm1528, %v1507, 0.0
      %1563 = vadd.xlane.f32.xlu0 %v1562
      %v1564 = vpop.xlane.xlu0 %1563
      %v1565 = vsel %vm1528, %v1508, 0.0
      %1566 = vadd.xlane.f32.xlu0 %v1565
      %v1567 = vpop.xlane.xlu0 %1566
      %v1568 = vsel %vm1528, %v1509, 0.0
      %1569 = vadd.xlane.f32.xlu0 %v1568
      %v1570 = vpop.xlane.xlu0 %1569
      %v1571 = vsel %vm1528, %v1510, 0.0
      %1572 = vadd.xlane.f32.xlu0 %v1571
      %v1573 = vpop.xlane.xlu0 %1572
      %v1574 = vsel %vm1528, %v1511, 0.0
      %1575 = vadd.xlane.f32.xlu0 %v1574
      %v1576 = vpop.xlane.xlu0 %1575
      %v1577 = vsel %vm1528, %v1512, 0.0
      %1578 = vadd.xlane.f32.xlu0 %v1577
      %v1579 = vpop.xlane.xlu0 %1578
      %v1580 = vsel %vm1528, %v1513, 0.0
      %1581 = vadd.xlane.f32.xlu0 %v1580
      %v1582 = vpop.xlane.xlu0 %1581
      %v1583 = vsel %vm1528, %v1514, 0.0
      %1584 = vadd.xlane.f32.xlu0 %v1583
      %v1585 = vpop.xlane.xlu0 %1584
      %v1586 = vsel %vm1528, %v1515, 0.0
      %1587 = vadd.xlane.f32.xlu0 %v1586
      %v1588 = vpop.xlane.xlu0 %1587
      %v1589 = vsel %vm1528, %v1516, 0.0
      %1590 = vadd.xlane.f32.xlu0 %v1589
      %v1591 = vpop.xlane.xlu0 %1590
      %v1592 = vsel %vm1528, %v1517, 0.0
      %1593 = vadd.xlane.f32.xlu0 %v1592
      %v1594 = vpop.xlane.xlu0 %1593
      %v1595 = vsel %vm1528, %v1518, 0.0
      %1596 = vadd.xlane.f32.xlu0 %v1595
      %v1597 = vpop.xlane.xlu0 %1596
      %v1598 = vsel %vm1528, %v1519, 0.0
      %1599 = vadd.xlane.f32.xlu0 %v1598
      %v1600 = vpop.xlane.xlu0 %1599
      %v1601 = vsel %vm1528, %v1520, 0.0
      %1602 = vadd.xlane.f32.xlu0 %v1601
      %v1603 = vpop.xlane.xlu0 %1602
      %v1604 = vsel %vm1528, %v1521, 0.0
      %1605 = vadd.xlane.f32.xlu0 %v1604
      %v1606 = vpop.xlane.xlu0 %1605
      %v1607 = vsel %vm1528, %v1522, 0.0
      %1608 = vadd.xlane.f32.xlu0 %v1607
      %v1609 = vpop.xlane.xlu0 %1608
      %v1610 = vsel %vm1528, %v1523, 0.0
      %1611 = vadd.xlane.f32.xlu0 %v1610
      %v1612 = vpop.xlane.xlu0 %1611
      %v1613 = vsel %vm1528, %v1524, 0.0
      %1614 = vadd.xlane.f32.xlu0 %v1613
      %v1615 = vpop.xlane.xlu0 %1614
      %v1616 = vsel %vm1528, %v1525, 0.0
      %1617 = vadd.xlane.f32.xlu0 %v1616
      %v1618 = vpop.xlane.xlu0 %1617
      %v1619 = vsel %vm1528, %v1526, 0.0
      %1620 = vadd.xlane.f32.xlu0 %v1619
      %v1621 = vpop.xlane.xlu0 %1620
      %v1622 = vsel %vm1528, %v1527, 0.0
      %1623 = vadd.xlane.f32.xlu0 %v1622
      %v1624 = vpop.xlane.xlu0 %1623
      %v1625 = vmul.f32 %v1531, 0.125
      %v1626 = vmul.f32 %v1534, 0.125
      %v1627 = vmul.f32 %v1537, 0.125
      %v1628 = vmul.f32 %v1540, 0.125
      %v1629 = vmul.f32 %v1543, 0.125
      %v1630 = vmul.f32 %v1546, 0.125
      %v1631 = vmul.f32 %v1549, 0.125
      %v1632 = vmul.f32 %v1552, 0.125
      %v1633 = vmul.f32 %v1555, 0.125
      %v1634 = vmul.f32 %v1558, 0.125
      %v1635 = vmul.f32 %v1561, 0.125
      %v1636 = vmul.f32 %v1564, 0.125
      %v1637 = vmul.f32 %v1567, 0.125
      %v1638 = vmul.f32 %v1570, 0.125
      %v1639 = vmul.f32 %v1573, 0.125
      %v1640 = vmul.f32 %v1576, 0.125
      %v1641 = vmul.f32 %v1579, 0.125
      %v1642 = vmul.f32 %v1582, 0.125
      %v1643 = vmul.f32 %v1585, 0.125
      %v1644 = vmul.f32 %v1588, 0.125
      %v1645 = vmul.f32 %v1591, 0.125
      %v1646 = vmul.f32 %v1594, 0.125
      %v1647 = vmul.f32 %v1597, 0.125
      %v1648 = vmul.f32 %v1600, 0.125
      %v1649 = vmul.f32 %v1603, 0.125
      %v1650 = vmul.f32 %v1606, 0.125
      %v1651 = vmul.f32 %v1609, 0.125
      %v1652 = vmul.f32 %v1612, 0.125
      %v1653 = vmul.f32 %v1615, 0.125
      %v1654 = vmul.f32 %v1618, 0.125
      %v1655 = vmul.f32 %v1621, 0.125
      %v1656 = vmul.f32 %v1624, 0.125
      %v1657 = vsub.f32 %v1496, %v1625
      %v1658 = vsub.f32 %v1497, %v1626
      %v1659 = vsub.f32 %v1498, %v1627
      %v1660 = vsub.f32 %v1499, %v1628
      %v1661 = vsub.f32 %v1500, %v1629
      %v1662 = vsub.f32 %v1501, %v1630
      %v1663 = vsub.f32 %v1502, %v1631
      %v1664 = vsub.f32 %v1503, %v1632
      %v1665 = vsub.f32 %v1504, %v1633
      %v1666 = vsub.f32 %v1505, %v1634
      %v1667 = vsub.f32 %v1506, %v1635
      %v1668 = vsub.f32 %v1507, %v1636
      %v1669 = vsub.f32 %v1508, %v1637
      %v1670 = vsub.f32 %v1509, %v1638
      %v1671 = vsub.f32 %v1510, %v1639
      %v1672 = vsub.f32 %v1511, %v1640
      %v1673 = vsub.f32 %v1512, %v1641
      %v1674 = vsub.f32 %v1513, %v1642
      %v1675 = vsub.f32 %v1514, %v1643
      %v1676 = vsub.f32 %v1515, %v1644
      %v1677 = vsub.f32 %v1516, %v1645
      %v1678 = vsub.f32 %v1517, %v1646
      %v1679 = vsub.f32 %v1518, %v1647
      %v1680 = vsub.f32 %v1519, %v1648
      %v1681 = vsub.f32 %v1520, %v1649
      %v1682 = vsub.f32 %v1521, %v1650
      %v1683 = vsub.f32 %v1522, %v1651
      %v1684 = vsub.f32 %v1523, %v1652
      %v1685 = vsub.f32 %v1524, %v1653
      %v1686 = vsub.f32 %v1525, %v1654
      %v1687 = vsub.f32 %v1526, %v1655
      %v1688 = vsub.f32 %v1527, %v1656
      %v1689 = vmul.f32 %v1657, %v1657
      %v1690 = vmul.f32 %v1658, %v1658
      %v1691 = vmul.f32 %v1659, %v1659
      %v1692 = vmul.f32 %v1660, %v1660
      %v1693 = vmul.f32 %v1661, %v1661
      %v1694 = vmul.f32 %v1662, %v1662
      %v1695 = vmul.f32 %v1663, %v1663
      %v1696 = vmul.f32 %v1664, %v1664
      %v1697 = vmul.f32 %v1665, %v1665
      %v1698 = vmul.f32 %v1666, %v1666
      %v1699 = vmul.f32 %v1667, %v1667
      %v1700 = vmul.f32 %v1668, %v1668
      %v1701 = vmul.f32 %v1669, %v1669
      %v1702 = vmul.f32 %v1670, %v1670
      %v1703 = vmul.f32 %v1671, %v1671
      %v1704 = vmul.f32 %v1672, %v1672
      %v1705 = vmul.f32 %v1673, %v1673
      %v1706 = vmul.f32 %v1674, %v1674
      %v1707 = vmul.f32 %v1675, %v1675
      %v1708 = vmul.f32 %v1676, %v1676
      %v1709 = vmul.f32 %v1677, %v1677
      %v1710 = vmul.f32 %v1678, %v1678
      %v1711 = vmul.f32 %v1679, %v1679
      %v1712 = vmul.f32 %v1680, %v1680
      %v1713 = vmul.f32 %v1681, %v1681
      %v1714 = vmul.f32 %v1682, %v1682
      %v1715 = vmul.f32 %v1683, %v1683
      %v1716 = vmul.f32 %v1684, %v1684
      %v1717 = vmul.f32 %v1685, %v1685
      %v1718 = vmul.f32 %v1686, %v1686
      %v1719 = vmul.f32 %v1687, %v1687
      %v1720 = vmul.f32 %v1688, %v1688
      %v1721 = vsel %vm1528, %v1689, 0.0
      %1722 = vadd.xlane.f32.xlu0 %v1721
      %v1723 = vpop.xlane.xlu0 %1722
      %v1724 = vsel %vm1528, %v1690, 0.0
      %1725 = vadd.xlane.f32.xlu0 %v1724
      %v1726 = vpop.xlane.xlu0 %1725
      %v1727 = vsel %vm1528, %v1691, 0.0
      %1728 = vadd.xlane.f32.xlu0 %v1727
      %v1729 = vpop.xlane.xlu0 %1728
      %v1730 = vsel %vm1528, %v1692, 0.0
      %1731 = vadd.xlane.f32.xlu0 %v1730
      %v1732 = vpop.xlane.xlu0 %1731
      %v1733 = vsel %vm1528, %v1693, 0.0
      %1734 = vadd.xlane.f32.xlu0 %v1733
      %v1735 = vpop.xlane.xlu0 %1734
      %v1736 = vsel %vm1528, %v1694, 0.0
      %1737 = vadd.xlane.f32.xlu0 %v1736
      %v1738 = vpop.xlane.xlu0 %1737
      %v1739 = vsel %vm1528, %v1695, 0.0
      %1740 = vadd.xlane.f32.xlu0 %v1739
      %v1741 = vpop.xlane.xlu0 %1740
      %v1742 = vsel %vm1528, %v1696, 0.0
      %1743 = vadd.xlane.f32.xlu0 %v1742
      %v1744 = vpop.xlane.xlu0 %1743
      %v1745 = vsel %vm1528, %v1697, 0.0
      %1746 = vadd.xlane.f32.xlu0 %v1745
      %v1747 = vpop.xlane.xlu0 %1746
      %v1748 = vsel %vm1528, %v1698, 0.0
      %1749 = vadd.xlane.f32.xlu0 %v1748
      %v1750 = vpop.xlane.xlu0 %1749
      %v1751 = vsel %vm1528, %v1699, 0.0
      %1752 = vadd.xlane.f32.xlu0 %v1751
      %v1753 = vpop.xlane.xlu0 %1752
      %v1754 = vsel %vm1528, %v1700, 0.0
      %1755 = vadd.xlane.f32.xlu0 %v1754
      %v1756 = vpop.xlane.xlu0 %1755
      %v1757 = vsel %vm1528, %v1701, 0.0
      %1758 = vadd.xlane.f32.xlu0 %v1757
      %v1759 = vpop.xlane.xlu0 %1758
      %v1760 = vsel %vm1528, %v1702, 0.0
      %1761 = vadd.xlane.f32.xlu0 %v1760
      %v1762 = vpop.xlane.xlu0 %1761
      %v1763 = vsel %vm1528, %v1703, 0.0
      %1764 = vadd.xlane.f32.xlu0 %v1763
      %v1765 = vpop.xlane.xlu0 %1764
      %v1766 = vsel %vm1528, %v1704, 0.0
      %1767 = vadd.xlane.f32.xlu0 %v1766
      %v1768 = vpop.xlane.xlu0 %1767
      %v1769 = vsel %vm1528, %v1705, 0.0
      %1770 = vadd.xlane.f32.xlu0 %v1769
      %v1771 = vpop.xlane.xlu0 %1770
      %v1772 = vsel %vm1528, %v1706, 0.0
      %1773 = vadd.xlane.f32.xlu0 %v1772
      %v1774 = vpop.xlane.xlu0 %1773
      %v1775 = vsel %vm1528, %v1707, 0.0
      %1776 = vadd.xlane.f32.xlu0 %v1775
      %v1777 = vpop.xlane.xlu0 %1776
      %v1778 = vsel %vm1528, %v1708, 0.0
      %1779 = vadd.xlane.f32.xlu0 %v1778
      %v1780 = vpop.xlane.xlu0 %1779
      %v1781 = vsel %vm1528, %v1709, 0.0
      %1782 = vadd.xlane.f32.xlu0 %v1781
      %v1783 = vpop.xlane.xlu0 %1782
      %v1784 = vsel %vm1528, %v1710, 0.0
      %1785 = vadd.xlane.f32.xlu0 %v1784
      %v1786 = vpop.xlane.xlu0 %1785
      %v1787 = vsel %vm1528, %v1711, 0.0
      %1788 = vadd.xlane.f32.xlu0 %v1787
      %v1789 = vpop.xlane.xlu0 %1788
      %v1790 = vsel %vm1528, %v1712, 0.0
      %1791 = vadd.xlane.f32.xlu0 %v1790
      %v1792 = vpop.xlane.xlu0 %1791
      %v1793 = vsel %vm1528, %v1713, 0.0
      %1794 = vadd.xlane.f32.xlu0 %v1793
      %v1795 = vpop.xlane.xlu0 %1794
      %v1796 = vsel %vm1528, %v1714, 0.0
      %1797 = vadd.xlane.f32.xlu0 %v1796
      %v1798 = vpop.xlane.xlu0 %1797
      %v1799 = vsel %vm1528, %v1715, 0.0
      %1800 = vadd.xlane.f32.xlu0 %v1799
      %v1801 = vpop.xlane.xlu0 %1800
      %v1802 = vsel %vm1528, %v1716, 0.0
      %1803 = vadd.xlane.f32.xlu0 %v1802
      %v1804 = vpop.xlane.xlu0 %1803
      %v1805 = vsel %vm1528, %v1717, 0.0
      %1806 = vadd.xlane.f32.xlu0 %v1805
      %v1807 = vpop.xlane.xlu0 %1806
      %v1808 = vsel %vm1528, %v1718, 0.0
      %1809 = vadd.xlane.f32.xlu0 %v1808
      %v1810 = vpop.xlane.xlu0 %1809
      %v1811 = vsel %vm1528, %v1719, 0.0
      %1812 = vadd.xlane.f32.xlu0 %v1811
      %v1813 = vpop.xlane.xlu0 %1812
      %v1814 = vsel %vm1528, %v1720, 0.0
      %1815 = vadd.xlane.f32.xlu0 %v1814
      %v1816 = vpop.xlane.xlu0 %1815
      %v1817 = vmul.f32 %v1723, 0.125
      %v1818 = vmul.f32 %v1726, 0.125
      %v1819 = vmul.f32 %v1729, 0.125
      %v1820 = vmul.f32 %v1732, 0.125
      %v1821 = vmul.f32 %v1735, 0.125
      %v1822 = vmul.f32 %v1738, 0.125
      %v1823 = vmul.f32 %v1741, 0.125
      %v1824 = vmul.f32 %v1744, 0.125
      %v1825 = vmul.f32 %v1747, 0.125
      %v1826 = vmul.f32 %v1750, 0.125
      %v1827 = vmul.f32 %v1753, 0.125
      %v1828 = vmul.f32 %v1756, 0.125
      %v1829 = vmul.f32 %v1759, 0.125
      %v1830 = vmul.f32 %v1762, 0.125
      %v1831 = vmul.f32 %v1765, 0.125
      %v1832 = vmul.f32 %v1768, 0.125
      %v1833 = vmul.f32 %v1771, 0.125
      %v1834 = vmul.f32 %v1774, 0.125
      %v1835 = vmul.f32 %v1777, 0.125
      %v1836 = vmul.f32 %v1780, 0.125
      %v1837 = vmul.f32 %v1783, 0.125
      %v1838 = vmul.f32 %v1786, 0.125
      %v1839 = vmul.f32 %v1789, 0.125
      %v1840 = vmul.f32 %v1792, 0.125
      %v1841 = vmul.f32 %v1795, 0.125
      %v1842 = vmul.f32 %v1798, 0.125
      %v1843 = vmul.f32 %v1801, 0.125
      %v1844 = vmul.f32 %v1804, 0.125
      %v1845 = vmul.f32 %v1807, 0.125
      %v1846 = vmul.f32 %v1810, 0.125
      %v1847 = vmul.f32 %v1813, 0.125
      %v1848 = vmul.f32 %v1816, 0.125
      %v1849 = vadd.f32 %v1817, 1e-05
      %v1850 = vadd.f32 %v1818, 1e-05
      %v1851 = vadd.f32 %v1819, 1e-05
      %v1852 = vadd.f32 %v1820, 1e-05
      %v1853 = vadd.f32 %v1821, 1e-05
      %v1854 = vadd.f32 %v1822, 1e-05
      %v1855 = vadd.f32 %v1823, 1e-05
      %v1856 = vadd.f32 %v1824, 1e-05
      %v1857 = vadd.f32 %v1825, 1e-05
      %v1858 = vadd.f32 %v1826, 1e-05
      %v1859 = vadd.f32 %v1827, 1e-05
      %v1860 = vadd.f32 %v1828, 1e-05
      %v1861 = vadd.f32 %v1829, 1e-05
      %v1862 = vadd.f32 %v1830, 1e-05
      %v1863 = vadd.f32 %v1831, 1e-05
      %v1864 = vadd.f32 %v1832, 1e-05
      %v1865 = vadd.f32 %v1833, 1e-05
      %v1866 = vadd.f32 %v1834, 1e-05
      %v1867 = vadd.f32 %v1835, 1e-05
      %v1868 = vadd.f32 %v1836, 1e-05
      %v1869 = vadd.f32 %v1837, 1e-05
      %v1870 = vadd.f32 %v1838, 1e-05
      %v1871 = vadd.f32 %v1839, 1e-05
      %v1872 = vadd.f32 %v1840, 1e-05
      %v1873 = vadd.f32 %v1841, 1e-05
      %v1874 = vadd.f32 %v1842, 1e-05
      %v1875 = vadd.f32 %v1843, 1e-05
      %v1876 = vadd.f32 %v1844, 1e-05
      %v1877 = vadd.f32 %v1845, 1e-05
      %v1878 = vadd.f32 %v1846, 1e-05
      %v1879 = vadd.f32 %v1847, 1e-05
      %v1880 = vadd.f32 %v1848, 1e-05
      %v1881 = vrsqrt.pop %v1849
      %v1882 = vrsqrt.pop %v1850
      %v1883 = vrsqrt.pop %v1851
      %v1884 = vrsqrt.pop %v1852
      %v1885 = vrsqrt.pop %v1853
      %v1886 = vrsqrt.pop %v1854
      %v1887 = vrsqrt.pop %v1855
      %v1888 = vrsqrt.pop %v1856
      %v1889 = vrsqrt.pop %v1857
      %v1890 = vrsqrt.pop %v1858
      %v1891 = vrsqrt.pop %v1859
      %v1892 = vrsqrt.pop %v1860
      %v1893 = vrsqrt.pop %v1861
      %v1894 = vrsqrt.pop %v1862
      %v1895 = vrsqrt.pop %v1863
      %v1896 = vrsqrt.pop %v1864
      %v1897 = vrsqrt.pop %v1865
      %v1898 = vrsqrt.pop %v1866
      %v1899 = vrsqrt.pop %v1867
      %v1900 = vrsqrt.pop %v1868
      %v1901 = vrsqrt.pop %v1869
      %v1902 = vrsqrt.pop %v1870
      %v1903 = vrsqrt.pop %v1871
      %v1904 = vrsqrt.pop %v1872
      %v1905 = vrsqrt.pop %v1873
      %v1906 = vrsqrt.pop %v1874
      %v1907 = vrsqrt.pop %v1875
      %v1908 = vrsqrt.pop %v1876
      %v1909 = vrsqrt.pop %v1877
      %v1910 = vrsqrt.pop %v1878
      %v1911 = vrsqrt.pop %v1879
      %v1912 = vrsqrt.pop %v1880
      %v1913 = vmul.f32 %v1657, %v1881
      %v1914 = vmul.f32 %v1658, %v1882
      %v1915 = vmul.f32 %v1659, %v1883
      %v1916 = vmul.f32 %v1660, %v1884
      %v1917 = vmul.f32 %v1661, %v1885
      %v1918 = vmul.f32 %v1662, %v1886
      %v1919 = vmul.f32 %v1663, %v1887
      %v1920 = vmul.f32 %v1664, %v1888
      %v1921 = vmul.f32 %v1665, %v1889
      %v1922 = vmul.f32 %v1666, %v1890
      %v1923 = vmul.f32 %v1667, %v1891
      %v1924 = vmul.f32 %v1668, %v1892
      %v1925 = vmul.f32 %v1669, %v1893
      %v1926 = vmul.f32 %v1670, %v1894
      %v1927 = vmul.f32 %v1671, %v1895
      %v1928 = vmul.f32 %v1672, %v1896
      %v1929 = vmul.f32 %v1673, %v1897
      %v1930 = vmul.f32 %v1674, %v1898
      %v1931 = vmul.f32 %v1675, %v1899
      %v1932 = vmul.f32 %v1676, %v1900
      %v1933 = vmul.f32 %v1677, %v1901
      %v1934 = vmul.f32 %v1678, %v1902
      %v1935 = vmul.f32 %v1679, %v1903
      %v1936 = vmul.f32 %v1680, %v1904
      %v1937 = vmul.f32 %v1681, %v1905
      %v1938 = vmul.f32 %v1682, %v1906
      %v1939 = vmul.f32 %v1683, %v1907
      %v1940 = vmul.f32 %v1684, %v1908
      %v1941 = vmul.f32 %v1685, %v1909
      %v1942 = vmul.f32 %v1686, %v1910
      %v1943 = vmul.f32 %v1687, %v1911
      %v1944 = vmul.f32 %v1688, %v1912
      %v1945 = vld [vmem:[%s8 + $0x1] sm:$0x1]
      %v1946 = vlaneseq
      %v1947 = vshrl.u32 %v1946, 7
      %v1948 = vsub.s32 0, %v1947
      %v1949 = vrot.slane %v1945, %v1948
      %v1950 = vmul.f32 %v1913, %v1949
      %v1951 = vmul.f32 %v1914, %v1949
      %v1952 = vmul.f32 %v1915, %v1949
      %v1953 = vmul.f32 %v1916, %v1949
      %v1954 = vmul.f32 %v1917, %v1949
      %v1955 = vmul.f32 %v1918, %v1949
      %v1956 = vmul.f32 %v1919, %v1949
      %v1957 = vmul.f32 %v1920, %v1949
      %v1958 = vmul.f32 %v1921, %v1949
      %v1959 = vmul.f32 %v1922, %v1949
      %v1960 = vmul.f32 %v1923, %v1949
      %v1961 = vmul.f32 %v1924, %v1949
      %v1962 = vmul.f32 %v1925, %v1949
      %v1963 = vmul.f32 %v1926, %v1949
      %v1964 = vmul.f32 %v1927, %v1949
      %v1965 = vmul.f32 %v1928, %v1949
      %v1966 = vmul.f32 %v1929, %v1949
      %v1967 = vmul.f32 %v1930, %v1949
      %v1968 = vmul.f32 %v1931, %v1949
      %v1969 = vmul.f32 %v1932, %v1949
      %v1970 = vmul.f32 %v1933, %v1949
      %v1971 = vmul.f32 %v1934, %v1949
      %v1972 = vmul.f32 %v1935, %v1949
      %v1973 = vmul.f32 %v1936, %v1949
      %v1974 = vmul.f32 %v1937, %v1949
      %v1975 = vmul.f32 %v1938, %v1949
      %v1976 = vmul.f32 %v1939, %v1949
      %v1977 = vmul.f32 %v1940, %v1949
      %v1978 = vmul.f32 %v1941, %v1949
      %v1979 = vmul.f32 %v1942, %v1949
      %v1980 = vmul.f32 %v1943, %v1949
      %v1981 = vmul.f32 %v1944, %v1949
      %v1982 = vld [vmem:[%s8 + $0x2] sm:$0x1]
      %v1983 = vlaneseq
      %v1984 = vshrl.u32 %v1983, 7
      %v1985 = vsub.s32 0, %v1984
      %v1986 = vrot.slane %v1982, %v1985
      %v1987 = vadd.f32 %v1950, %v1986
      %v1988 = vadd.f32 %v1951, %v1986
      %v1989 = vadd.f32 %v1952, %v1986
      %v1990 = vadd.f32 %v1953, %v1986
      %v1991 = vadd.f32 %v1954, %v1986
      %v1992 = vadd.f32 %v1955, %v1986
      %v1993 = vadd.f32 %v1956, %v1986
      %v1994 = vadd.f32 %v1957, %v1986
      %v1995 = vadd.f32 %v1958, %v1986
      %v1996 = vadd.f32 %v1959, %v1986
      %v1997 = vadd.f32 %v1960, %v1986
      %v1998 = vadd.f32 %v1961, %v1986
      %v1999 = vadd.f32 %v1962, %v1986
      %v2000 = vadd.f32 %v1963, %v1986
      %v2001 = vadd.f32 %v1964, %v1986
      %v2002 = vadd.f32 %v1965, %v1986
      %v2003 = vadd.f32 %v1966, %v1986
      %v2004 = vadd.f32 %v1967, %v1986
      %v2005 = vadd.f32 %v1968, %v1986
      %v2006 = vadd.f32 %v1969, %v1986
      %v2007 = vadd.f32 %v1970, %v1986
      %v2008 = vadd.f32 %v1971, %v1986
      %v2009 = vadd.f32 %v1972, %v1986
      %v2010 = vadd.f32 %v1973, %v1986
      %v2011 = vadd.f32 %v1974, %v1986
      %v2012 = vadd.f32 %v1975, %v1986
      %v2013 = vadd.f32 %v1976, %v1986
      %v2014 = vadd.f32 %v1977, %v1986
      %v2015 = vadd.f32 %v1978, %v1986
      %v2016 = vadd.f32 %v1979, %v1986
      %v2017 = vadd.f32 %v1980, %v1986
      %v2018 = vadd.f32 %v1981, %v1986
      %v2019 = vmul.f32 %v1987, 0.5
      %v2020 = vmul.f32 %v1988, 0.5
      %v2021 = vmul.f32 %v1989, 0.5
      %v2022 = vmul.f32 %v1990, 0.5
      %v2023 = vmul.f32 %v1991, 0.5
      %v2024 = vmul.f32 %v1992, 0.5
      %v2025 = vmul.f32 %v1993, 0.5
      %v2026 = vmul.f32 %v1994, 0.5
      %v2027 = vmul.f32 %v1995, 0.5
      %v2028 = vmul.f32 %v1996, 0.5
      %v2029 = vmul.f32 %v1997, 0.5
      %v2030 = vmul.f32 %v1998, 0.5
      %v2031 = vmul.f32 %v1999, 0.5
      %v2032 = vmul.f32 %v2000, 0.5
      %v2033 = vmul.f32 %v2001, 0.5
      %v2034 = vmul.f32 %v2002, 0.5
      %v2035 = vmul.f32 %v2003, 0.5
      %v2036 = vmul.f32 %v2004, 0.5
      %v2037 = vmul.f32 %v2005, 0.5
      %v2038 = vmul.f32 %v2006, 0.5
      %v2039 = vmul.f32 %v2007, 0.5
      %v2040 = vmul.f32 %v2008, 0.5
      %v2041 = vmul.f32 %v2009, 0.5
      %v2042 = vmul.f32 %v2010, 0.5
      %v2043 = vmul.f32 %v2011, 0.5
      %v2044 = vmul.f32 %v2012, 0.5
      %v2045 = vmul.f32 %v2013, 0.5
      %v2046 = vmul.f32 %v2014, 0.5
      %v2047 = vmul.f32 %v2015, 0.5
      %v2048 = vmul.f32 %v2016, 0.5
      %v2049 = vmul.f32 %v2017, 0.5
      %v2050 = vmul.f32 %v2018, 0.5
      %v2051 = vtanh.pop %v2019
      %v2052 = vtanh.pop %v2020
      %v2053 = vtanh.pop %v2021
      %v2054 = vtanh.pop %v2022
      %v2055 = vtanh.pop %v2023
      %v2056 = vtanh.pop %v2024
      %v2057 = vtanh.pop %v2025
      %v2058 = vtanh.pop %v2026
      %v2059 = vtanh.pop %v2027
      %v2060 = vtanh.pop %v2028
      %v2061 = vtanh.pop %v2029
      %v2062 = vtanh.pop %v2030
      %v2063 = vtanh.pop %v2031
      %v2064 = vtanh.pop %v2032
      %v2065 = vtanh.pop %v2033
      %v2066 = vtanh.pop %v2034
      %v2067 = vtanh.pop %v2035
      %v2068 = vtanh.pop %v2036
      %v2069 = vtanh.pop %v2037
      %v2070 = vtanh.pop %v2038
      %v2071 = vtanh.pop %v2039
      %v2072 = vtanh.pop %v2040
      %v2073 = vtanh.pop %v2041
      %v2074 = vtanh.pop %v2042
      %v2075 = vtanh.pop %v2043
      %v2076 = vtanh.pop %v2044
      %v2077 = vtanh.pop %v2045
      %v2078 = vtanh.pop %v2046
      %v2079 = vtanh.pop %v2047
      %v2080 = vtanh.pop %v2048
      %v2081 = vtanh.pop %v2049
      %v2082 = vtanh.pop %v2050
      %v2083 = vmul.f32 %v2051, 0.5
      %v2084 = vmul.f32 %v2052, 0.5
      %v2085 = vmul.f32 %v2053, 0.5
      %v2086 = vmul.f32 %v2054, 0.5
      %v2087 = vmul.f32 %v2055, 0.5
      %v2088 = vmul.f32 %v2056, 0.5
      %v2089 = vmul.f32 %v2057, 0.5
      %v2090 = vmul.f32 %v2058, 0.5
      %v2091 = vmul.f32 %v2059, 0.5
      %v2092 = vmul.f32 %v2060, 0.5
      %v2093 = vmul.f32 %v2061, 0.5
      %v2094 = vmul.f32 %v2062, 0.5
      %v2095 = vmul.f32 %v2063, 0.5
      %v2096 = vmul.f32 %v2064, 0.5
      %v2097 = vmul.f32 %v2065, 0.5
      %v2098 = vmul.f32 %v2066, 0.5
      %v2099 = vmul.f32 %v2067, 0.5
      %v2100 = vmul.f32 %v2068, 0.5
      %v2101 = vmul.f32 %v2069, 0.5
      %v2102 = vmul.f32 %v2070, 0.5
      %v2103 = vmul.f32 %v2071, 0.5
      %v2104 = vmul.f32 %v2072, 0.5
      %v2105 = vmul.f32 %v2073, 0.5
      %v2106 = vmul.f32 %v2074, 0.5
      %v2107 = vmul.f32 %v2075, 0.5
      %v2108 = vmul.f32 %v2076, 0.5
      %v2109 = vmul.f32 %v2077, 0.5
      %v2110 = vmul.f32 %v2078, 0.5
      %v2111 = vmul.f32 %v2079, 0.5
      %v2112 = vmul.f32 %v2080, 0.5
      %v2113 = vmul.f32 %v2081, 0.5
      %v2114 = vmul.f32 %v2082, 0.5
      %v2115 = vadd.f32 %v2083, 0.5
      %v2116 = vadd.f32 %v2084, 0.5
      %v2117 = vadd.f32 %v2085, 0.5
      %v2118 = vadd.f32 %v2086, 0.5
      %v2119 = vadd.f32 %v2087, 0.5
      %v2120 = vadd.f32 %v2088, 0.5
      %v2121 = vadd.f32 %v2089, 0.5
      %v2122 = vadd.f32 %v2090, 0.5
      %v2123 = vadd.f32 %v2091, 0.5
      %v2124 = vadd.f32 %v2092, 0.5
      %v2125 = vadd.f32 %v2093, 0.5
      %v2126 = vadd.f32 %v2094, 0.5
      %v2127 = vadd.f32 %v2095, 0.5
      %v2128 = vadd.f32 %v2096, 0.5
      %v2129 = vadd.f32 %v2097, 0.5
      %v2130 = vadd.f32 %v2098, 0.5
      %v2131 = vadd.f32 %v2099, 0.5
      %v2132 = vadd.f32 %v2100, 0.5
      %v2133 = vadd.f32 %v2101, 0.5
      %v2134 = vadd.f32 %v2102, 0.5
      %v2135 = vadd.f32 %v2103, 0.5
      %v2136 = vadd.f32 %v2104, 0.5
      %v2137 = vadd.f32 %v2105, 0.5
      %v2138 = vadd.f32 %v2106, 0.5
      %v2139 = vadd.f32 %v2107, 0.5
      %v2140 = vadd.f32 %v2108, 0.5
      %v2141 = vadd.f32 %v2109, 0.5
      %v2142 = vadd.f32 %v2110, 0.5
      %v2143 = vadd.f32 %v2111, 0.5
      %v2144 = vadd.f32 %v2112, 0.5
      %v2145 = vadd.f32 %v2113, 0.5
      %v2146 = vadd.f32 %v2114, 0.5
      %v2147 = vmul.f32 %v1987, %v2115
      %v2148 = vmul.f32 %v1988, %v2116
      %v2149 = vmul.f32 %v1989, %v2117
      %v2150 = vmul.f32 %v1990, %v2118
      %v2151 = vmul.f32 %v1991, %v2119
      %v2152 = vmul.f32 %v1992, %v2120
      %v2153 = vmul.f32 %v1993, %v2121
      %v2154 = vmul.f32 %v1994, %v2122
      %v2155 = vmul.f32 %v1995, %v2123
      %v2156 = vmul.f32 %v1996, %v2124
      %v2157 = vmul.f32 %v1997, %v2125
      %v2158 = vmul.f32 %v1998, %v2126
      %v2159 = vmul.f32 %v1999, %v2127
      %v2160 = vmul.f32 %v2000, %v2128
      %v2161 = vmul.f32 %v2001, %v2129
      %v2162 = vmul.f32 %v2002, %v2130
      %v2163 = vmul.f32 %v2003, %v2131
      %v2164 = vmul.f32 %v2004, %v2132
      %v2165 = vmul.f32 %v2005, %v2133
      %v2166 = vmul.f32 %v2006, %v2134
      %v2167 = vmul.f32 %v2007, %v2135
      %v2168 = vmul.f32 %v2008, %v2136
      %v2169 = vmul.f32 %v2009, %v2137
      %v2170 = vmul.f32 %v2010, %v2138
      %v2171 = vmul.f32 %v2011, %v2139
      %v2172 = vmul.f32 %v2012, %v2140
      %v2173 = vmul.f32 %v2013, %v2141
      %v2174 = vmul.f32 %v2014, %v2142
      %v2175 = vmul.f32 %v2015, %v2143
      %v2176 = vmul.f32 %v2016, %v2144
      %v2177 = vmul.f32 %v2017, %v2145
      %v2178 = vmul.f32 %v2018, %v2146
      %v2179 = vld [vmem:[%s4] sm:$0xff]
      %v2180 = vld [vmem:[%s8 + $0x3] sm:$0x1]
      %v2181 = vlaneseq
      %v2182 = vshrl.u32 %v2181, 7
      %v2183 = vsub.s32 0, %v2182
      %v2184 = vrot.slane %v2180, %v2183
      %v2186 = vsel %vm1528, %v2147, 0
      %v2189 = vsel %vm1528, %v2148, 0
      %v2192 = vsel %vm1528, %v2149, 0
      %v2195 = vsel %vm1528, %v2150, 0
      %v2198 = vsel %vm1528, %v2151, 0
      %v2201 = vsel %vm1528, %v2152, 0
      %v2204 = vsel %vm1528, %v2153, 0
      %v2207 = vsel %vm1528, %v2154, 0
      %v2210 = vsel %vm1528, %v2155, 0
      %v2213 = vsel %vm1528, %v2156, 0
      %v2216 = vsel %vm1528, %v2157, 0
      %v2219 = vsel %vm1528, %v2158, 0
      %v2222 = vsel %vm1528, %v2159, 0
      %v2225 = vsel %vm1528, %v2160, 0
      %v2228 = vsel %vm1528, %v2161, 0
      %v2231 = vsel %vm1528, %v2162, 0
      %v2234 = vsel %vm1528, %v2163, 0
      %v2237 = vsel %vm1528, %v2164, 0
      %v2240 = vsel %vm1528, %v2165, 0
      %v2243 = vsel %vm1528, %v2166, 0
      %v2246 = vsel %vm1528, %v2167, 0
      %v2249 = vsel %vm1528, %v2168, 0
      %v2252 = vsel %vm1528, %v2169, 0
      %v2255 = vsel %vm1528, %v2170, 0
      %v2258 = vsel %vm1528, %v2171, 0
      %v2261 = vsel %vm1528, %v2172, 0
      %v2264 = vsel %vm1528, %v2173, 0
      %v2267 = vsel %vm1528, %v2174, 0
      %v2270 = vsel %vm1528, %v2175, 0
      %v2273 = vsel %vm1528, %v2176, 0
      %v2276 = vsel %vm1528, %v2177, 0
      %v2279 = vsel %vm1528, %v2178, 0
      %2281 = vmatprep.subr.mxu0 0.0
      %2282 = vmatpush1.msra.mxu0 0.0
      %2283 = vmatprep.subr.mxu0 0.0
      %2284 = vmatpush1.msra.mxu0 0.0
      %2285 = vmatprep.subr.mxu0 0.0
      %2286 = vmatpush1.msra.mxu0 0.0
      %2287 = vmatprep.subr.mxu0 0.0
      %2288 = vmatpush1.msra.mxu0 0.0
      %2289 = vmatprep.subr.mxu0 0.0
      %2290 = vmatpush1.msra.mxu0 0.0
      %2291 = vmatprep.subr.mxu0 0.0
      %2292 = vmatpush1.msra.mxu0 0.0
      %2293 = vmatprep.subr.mxu0 0.0
      %2294 = vmatpush1.msra.mxu0 0.0
      %2295 = vmatprep.subr.mxu0 0.0
      %2296 = vmatpush1.msra.mxu0 0.0
      %2297 = vmatprep.subr.mxu0 0.0
      %2298 = vmatpush1.msra.mxu0 0.0
      %2299 = vmatprep.subr.mxu0 0.0
      %2300 = vmatpush1.msra.mxu0 0.0
      %2301 = vmatprep.subr.mxu0 0.0
      %2302 = vmatpush1.msra.mxu0 0.0
      %2303 = vmatprep.subr.mxu0 0.0
      %2304 = vmatpush1.msra.mxu0 0.0
      %2305 = vmatprep.subr.mxu0 0.0
      %2306 = vmatpush1.msra.mxu0 0.0
      %2307 = vmatprep.subr.mxu0 0.0
      %2308 = vmatpush1.msra.mxu0 0.0
      %2309 = vmatprep.subr.mxu0 0.0
      %2310 = vmatpush1.msra.mxu0 0.0
      %2311 = vmatprep.subr.mxu0 0.0
      %2312 = vmatpush1.msra.mxu0 %v2179
      %2313 = vmatprep.subr.mxu0 0.0
      %2314 = vmatpush2.msra.mxu0 0.0
      %2315 = vmatprep.subr.mxu0 0.0
      %2316 = vmatpush2.msra.mxu0 0.0
      %2317 = vmatprep.subr.mxu0 0.0
      %2318 = vmatpush2.msra.mxu0 0.0
      %2319 = vmatprep.subr.mxu0 0.0
      %2320 = vmatpush2.msra.mxu0 0.0
      %2321 = vmatprep.subr.mxu0 0.0
      %2322 = vmatpush2.msra.mxu0 0.0
      %2323 = vmatprep.subr.mxu0 0.0
      %2324 = vmatpush2.msra.mxu0 0.0
      %2325 = vmatprep.subr.mxu0 0.0
      %2326 = vmatpush2.msra.mxu0 0.0
      %2327 = vmatprep.subr.mxu0 0.0
      %2328 = vmatpush2.msra.mxu0 0.0
      %2329 = vmatprep.subr.mxu0 0.0
      %2330 = vmatpush2.msra.mxu0 0.0
      %2331 = vmatprep.subr.mxu0 0.0
      %2332 = vmatpush2.msra.mxu0 0.0
      %2333 = vmatprep.subr.mxu0 0.0
      %2334 = vmatpush2.msra.mxu0 0.0
      %2335 = vmatprep.subr.mxu0 0.0
      %2336 = vmatpush2.msra.mxu0 0.0
      %2337 = vmatprep.subr.mxu0 0.0
      %2338 = vmatpush2.msra.mxu0 0.0
      %2339 = vmatprep.subr.mxu0 0.0
      %2340 = vmatpush2.msra.mxu0 0.0
      %2341 = vmatprep.subr.mxu0 0.0
      %2342 = vmatpush2.msra.mxu0 0.0
      %2343 = vmatprep.subr.mxu0 0.0
      %2344 = vmatpush2.msra.mxu0 0.0
      %2345 = vmatprep.mubr.f32.mxu0 0.0
      %2346 = vmatmul.mubr.f32.gmra.mxu0 %v2186
      %v2347 = vpop.f32.mrf.mxu0
      %v2348 = vadd.f32 %v2184, %v2347
      %v2349 = vpop.f32.mrf.mxu0
      %2350 = vmatprep.mubr.f32.mxu0 0.0
      %2351 = vmatmul.mubr.f32.gmra.mxu0 %v2189
      %v2352 = vpop.f32.mrf.mxu0
      %v2353 = vadd.f32 %v2184, %v2352
      %v2354 = vpop.f32.mrf.mxu0
      %2355 = vmatprep.mubr.f32.mxu0 0.0
      %2356 = vmatmul.mubr.f32.gmra.mxu0 %v2192
      %v2357 = vpop.f32.mrf.mxu0
      %v2358 = vadd.f32 %v2184, %v2357
      %v2359 = vpop.f32.mrf.mxu0
      %2360 = vmatprep.mubr.f32.mxu0 0.0
      %2361 = vmatmul.mubr.f32.gmra.mxu0 %v2195
      %v2362 = vpop.f32.mrf.mxu0
      %v2363 = vadd.f32 %v2184, %v2362
      %v2364 = vpop.f32.mrf.mxu0
      %2365 = vmatprep.mubr.f32.mxu0 0.0
      %2366 = vmatmul.mubr.f32.gmra.mxu0 %v2198
      %v2367 = vpop.f32.mrf.mxu0
      %v2368 = vadd.f32 %v2184, %v2367
      %v2369 = vpop.f32.mrf.mxu0
      %2370 = vmatprep.mubr.f32.mxu0 0.0
      %2371 = vmatmul.mubr.f32.gmra.mxu0 %v2201
      %v2372 = vpop.f32.mrf.mxu0
      %v2373 = vadd.f32 %v2184, %v2372
      %v2374 = vpop.f32.mrf.mxu0
      %2375 = vmatprep.mubr.f32.mxu0 0.0
      %2376 = vmatmul.mubr.f32.gmra.mxu0 %v2204
      %v2377 = vpop.f32.mrf.mxu0
      %v2378 = vadd.f32 %v2184, %v2377
      %v2379 = vpop.f32.mrf.mxu0
      %2380 = vmatprep.mubr.f32.mxu0 0.0
      %2381 = vmatmul.mubr.f32.gmra.mxu0 %v2207
      %v2382 = vpop.f32.mrf.mxu0
      %v2383 = vadd.f32 %v2184, %v2382
      %v2384 = vpop.f32.mrf.mxu0
      %2385 = vmatprep.mubr.f32.mxu0 0.0
      %2386 = vmatmul.mubr.f32.gmra.mxu0 %v2210
      %v2387 = vpop.f32.mrf.mxu0
      %v2388 = vadd.f32 %v2184, %v2387
      %v2389 = vpop.f32.mrf.mxu0
      %2390 = vmatprep.mubr.f32.mxu0 0.0
      %2391 = vmatmul.mubr.f32.gmra.mxu0 %v2213
      %v2392 = vpop.f32.mrf.mxu0
      %v2393 = vadd.f32 %v2184, %v2392
      %v2394 = vpop.f32.mrf.mxu0
      %2395 = vmatprep.mubr.f32.mxu0 0.0
      %2396 = vmatmul.mubr.f32.gmra.mxu0 %v2216
      %v2397 = vpop.f32.mrf.mxu0
      %v2398 = vadd.f32 %v2184, %v2397
      %v2399 = vpop.f32.mrf.mxu0
      %2400 = vmatprep.mubr.f32.mxu0 0.0
      %2401 = vmatmul.mubr.f32.gmra.mxu0 %v2219
      %v2402 = vpop.f32.mrf.mxu0
      %v2403 = vadd.f32 %v2184, %v2402
      %v2404 = vpop.f32.mrf.mxu0
      %2405 = vmatprep.mubr.f32.mxu0 0.0
      %2406 = vmatmul.mubr.f32.gmra.mxu0 %v2222
      %v2407 = vpop.f32.mrf.mxu0
      %v2408 = vadd.f32 %v2184, %v2407
      %v2409 = vpop.f32.mrf.mxu0
      %2410 = vmatprep.mubr.f32.mxu0 0.0
      %2411 = vmatmul.mubr.f32.gmra.mxu0 %v2225
      %v2412 = vpop.f32.mrf.mxu0
      %v2413 = vadd.f32 %v2184, %v2412
      %v2414 = vpop.f32.mrf.mxu0
      %2415 = vmatprep.mubr.f32.mxu0 0.0
      %2416 = vmatmul.mubr.f32.gmra.mxu0 %v2228
      %v2417 = vpop.f32.mrf.mxu0
      %v2418 = vadd.f32 %v2184, %v2417
      %v2419 = vpop.f32.mrf.mxu0
      %2420 = vmatprep.mubr.f32.mxu0 0.0
      %2421 = vmatmul.mubr.f32.gmra.mxu0 %v2231
      %v2422 = vpop.f32.mrf.mxu0
      %v2423 = vadd.f32 %v2184, %v2422
      %v2424 = vpop.f32.mrf.mxu0
      %2425 = vmatprep.mubr.f32.mxu0 0.0
      %2426 = vmatmul.mubr.f32.gmra.mxu0 %v2234
      %v2427 = vpop.f32.mrf.mxu0
      %v2428 = vadd.f32 %v2184, %v2427
      %v2429 = vpop.f32.mrf.mxu0
      %2430 = vmatprep.mubr.f32.mxu0 0.0
      %2431 = vmatmul.mubr.f32.gmra.mxu0 %v2237
      %v2432 = vpop.f32.mrf.mxu0
      %v2433 = vadd.f32 %v2184, %v2432
      %v2434 = vpop.f32.mrf.mxu0
      %2435 = vmatprep.mubr.f32.mxu0 0.0
      %2436 = vmatmul.mubr.f32.gmra.mxu0 %v2240
      %v2437 = vpop.f32.mrf.mxu0
      %v2438 = vadd.f32 %v2184, %v2437
      %v2439 = vpop.f32.mrf.mxu0
      %2440 = vmatprep.mubr.f32.mxu0 0.0
      %2441 = vmatmul.mubr.f32.gmra.mxu0 %v2243
      %v2442 = vpop.f32.mrf.mxu0
      %v2443 = vadd.f32 %v2184, %v2442
      %v2444 = vpop.f32.mrf.mxu0
      %2445 = vmatprep.mubr.f32.mxu0 0.0
      %2446 = vmatmul.mubr.f32.gmra.mxu0 %v2246
      %v2447 = vpop.f32.mrf.mxu0
      %v2448 = vadd.f32 %v2184, %v2447
      %v2449 = vpop.f32.mrf.mxu0
      %2450 = vmatprep.mubr.f32.mxu0 0.0
      %2451 = vmatmul.mubr.f32.gmra.mxu0 %v2249
      %v2452 = vpop.f32.mrf.mxu0
      %v2453 = vadd.f32 %v2184, %v2452
      %v2454 = vpop.f32.mrf.mxu0
      %2455 = vmatprep.mubr.f32.mxu0 0.0
      %2456 = vmatmul.mubr.f32.gmra.mxu0 %v2252
      %v2457 = vpop.f32.mrf.mxu0
      %v2458 = vadd.f32 %v2184, %v2457
      %v2459 = vpop.f32.mrf.mxu0
      %2460 = vmatprep.mubr.f32.mxu0 0.0
      %2461 = vmatmul.mubr.f32.gmra.mxu0 %v2255
      %v2462 = vpop.f32.mrf.mxu0
      %v2463 = vadd.f32 %v2184, %v2462
      %v2464 = vpop.f32.mrf.mxu0
      %2465 = vmatprep.mubr.f32.mxu0 0.0
      %2466 = vmatmul.mubr.f32.gmra.mxu0 %v2258
      %v2467 = vpop.f32.mrf.mxu0
      %v2468 = vadd.f32 %v2184, %v2467
      %v2469 = vpop.f32.mrf.mxu0
      %2470 = vmatprep.mubr.f32.mxu0 0.0
      %2471 = vmatmul.mubr.f32.gmra.mxu0 %v2261
      %v2472 = vpop.f32.mrf.mxu0
      %v2473 = vadd.f32 %v2184, %v2472
      %v2474 = vpop.f32.mrf.mxu0
      %2475 = vmatprep.mubr.f32.mxu0 0.0
      %2476 = vmatmul.mubr.f32.gmra.mxu0 %v2264
      %v2477 = vpop.f32.mrf.mxu0
      %v2478 = vadd.f32 %v2184, %v2477
      %v2479 = vpop.f32.mrf.mxu0
      %2480 = vmatprep.mubr.f32.mxu0 0.0
      %2481 = vmatmul.mubr.f32.gmra.mxu0 %v2267
      %v2482 = vpop.f32.mrf.mxu0
      %v2483 = vadd.f32 %v2184, %v2482
      %v2484 = vpop.f32.mrf.mxu0
      %2485 = vmatprep.mubr.f32.mxu0 0.0
      %2486 = vmatmul.mubr.f32.gmra.mxu0 %v2270
      %v2487 = vpop.f32.mrf.mxu0
      %v2488 = vadd.f32 %v2184, %v2487
      %v2489 = vpop.f32.mrf.mxu0
      %2490 = vmatprep.mubr.f32.mxu0 0.0
      %2491 = vmatmul.mubr.f32.gmra.mxu0 %v2273
      %v2492 = vpop.f32.mrf.mxu0
      %v2493 = vadd.f32 %v2184, %v2492
      %v2494 = vpop.f32.mrf.mxu0
      %2495 = vmatprep.mubr.f32.mxu0 0.0
      %2496 = vmatmul.mubr.f32.gmra.mxu0 %v2276
      %v2497 = vpop.f32.mrf.mxu0
      %v2498 = vadd.f32 %v2184, %v2497
      %v2499 = vpop.f32.mrf.mxu0
      %2500 = vmatprep.mubr.f32.mxu0 0.0
      %2501 = vmatmul.mubr.f32.gmra.mxu0 %v2279
      %v2502 = vpop.f32.mrf.mxu0
      %v2503 = vadd.f32 %v2184, %v2502
      %v2504 = vpop.f32.mrf.mxu0
      %2505 = vdwg.mxu0
      %v2506 = vld [vmem:[%s383] sm:$0xff]
      %v2507 = vld [vmem:[%s383 + $0x8] sm:$0xff]
      %v2508 = vld [vmem:[%s383 + $0x18] sm:$0xff]
      %v2509 = vld [vmem:[%s383 + $0x20] sm:$0xff]
      %v2510 = vld [vmem:[%s383 + $0x30] sm:$0xff]
      %v2511 = vld [vmem:[%s383 + $0x38] sm:$0xff]
      %v2512 = vld [vmem:[%s383 + $0x48] sm:$0xff]
      %v2513 = vld [vmem:[%s383 + $0x50] sm:$0xff]
      %v2514 = vld [vmem:[%s383 + $0x60] sm:$0xff]
      %v2515 = vld [vmem:[%s383 + $0x68] sm:$0xff]
      %v2516 = vld [vmem:[%s383 + $0x78] sm:$0xff]
      %v2517 = vld [vmem:[%s383 + $0x80] sm:$0xff]
      %v2518 = vld [vmem:[%s383 + $0x90] sm:$0xff]
      %v2519 = vld [vmem:[%s383 + $0x98] sm:$0xff]
      %v2520 = vld [vmem:[%s383 + $0xa8] sm:$0xff]
      %v2521 = vld [vmem:[%s383 + $0xb0] sm:$0xff]
      %v2522 = vld [vmem:[%s383 + $0xc0] sm:$0xff]
      %v2523 = vld [vmem:[%s383 + $0xc8] sm:$0xff]
      %v2524 = vld [vmem:[%s383 + $0xd8] sm:$0xff]
      %v2525 = vld [vmem:[%s383 + $0xe0] sm:$0xff]
      %v2526 = vld [vmem:[%s383 + $0xf0] sm:$0xff]
      %v2527 = vld [vmem:[%s383 + $0xf8] sm:$0xff]
      %v2528 = vld [vmem:[%s383 + $0x108] sm:$0xff]
      %v2529 = vld [vmem:[%s383 + $0x110] sm:$0xff]
      %v2530 = vld [vmem:[%s383 + $0x120] sm:$0xff]
      %v2531 = vld [vmem:[%s383 + $0x128] sm:$0xff]
      %v2532 = vld [vmem:[%s383 + $0x138] sm:$0xff]
      %v2533 = vld [vmem:[%s383 + $0x140] sm:$0xff]
      %v2534 = vld [vmem:[%s383 + $0x150] sm:$0xff]
      %v2535 = vld [vmem:[%s383 + $0x158] sm:$0xff]
      %v2536 = vld [vmem:[%s383 + $0x168] sm:$0xff]
      %v2537 = vld [vmem:[%s383 + $0x170] sm:$0xff]
      %v2538 = vld [vmem:[%s3] sm:$0xff]
      %v2539 = vld [vmem:[%s383 + $0x1] sm:$0xff]
      %v2540 = vld [vmem:[%s383 + $0x9] sm:$0xff]
      %v2541 = vld [vmem:[%s383 + $0x19] sm:$0xff]
      %v2542 = vld [vmem:[%s383 + $0x21] sm:$0xff]
      %v2543 = vld [vmem:[%s383 + $0x31] sm:$0xff]
      %v2544 = vld [vmem:[%s383 + $0x39] sm:$0xff]
      %v2545 = vld [vmem:[%s383 + $0x49] sm:$0xff]
      %v2546 = vld [vmem:[%s383 + $0x51] sm:$0xff]
      %v2547 = vld [vmem:[%s383 + $0x61] sm:$0xff]
      %v2548 = vld [vmem:[%s383 + $0x69] sm:$0xff]
      %v2549 = vld [vmem:[%s383 + $0x79] sm:$0xff]
      %v2550 = vld [vmem:[%s383 + $0x81] sm:$0xff]
      %v2551 = vld [vmem:[%s383 + $0x91] sm:$0xff]
      %v2552 = vld [vmem:[%s383 + $0x99] sm:$0xff]
      %v2553 = vld [vmem:[%s383 + $0xa9] sm:$0xff]
      %v2554 = vld [vmem:[%s383 + $0xb1] sm:$0xff]
      %v2555 = vld [vmem:[%s383 + $0xc1] sm:$0xff]
      %v2556 = vld [vmem:[%s383 + $0xc9] sm:$0xff]
      %v2557 = vld [vmem:[%s383 + $0xd9] sm:$0xff]
      %v2558 = vld [vmem:[%s383 + $0xe1] sm:$0xff]
      %v2559 = vld [vmem:[%s383 + $0xf1] sm:$0xff]
      %v2560 = vld [vmem:[%s383 + $0xf9] sm:$0xff]
      %v2561 = vld [vmem:[%s383 + $0x109] sm:$0xff]
      %v2562 = vld [vmem:[%s383 + $0x111] sm:$0xff]
      %v2563 = vld [vmem:[%s383 + $0x121] sm:$0xff]
      %v2564 = vld [vmem:[%s383 + $0x129] sm:$0xff]
      %v2565 = vld [vmem:[%s383 + $0x139] sm:$0xff]
      %v2566 = vld [vmem:[%s383 + $0x141] sm:$0xff]
      %v2567 = vld [vmem:[%s383 + $0x151] sm:$0xff]
      %v2568 = vld [vmem:[%s383 + $0x159] sm:$0xff]
      %v2569 = vld [vmem:[%s383 + $0x169] sm:$0xff]
      %v2570 = vld [vmem:[%s383 + $0x171] sm:$0xff]
      %s2571 = scalar_lea.vmem %s3, 8
      %v2572 = vld [vmem:[%s2571] sm:$0xff]
      %v2574 = vsel %vm1528, %v2539, 0
      %v2577 = vsel %vm1528, %v2540, 0
      %v2580 = vsel %vm1528, %v2541, 0
      %v2583 = vsel %vm1528, %v2542, 0
      %v2586 = vsel %vm1528, %v2543, 0
      %v2589 = vsel %vm1528, %v2544, 0
      %v2592 = vsel %vm1528, %v2545, 0
      %v2595 = vsel %vm1528, %v2546, 0
      %v2598 = vsel %vm1528, %v2547, 0
      %v2601 = vsel %vm1528, %v2548, 0
      %v2604 = vsel %vm1528, %v2549, 0
      %v2607 = vsel %vm1528, %v2550, 0
      %v2610 = vsel %vm1528, %v2551, 0
      %v2613 = vsel %vm1528, %v2552, 0
      %v2616 = vsel %vm1528, %v2553, 0
      %v2619 = vsel %vm1528, %v2554, 0
      %v2622 = vsel %vm1528, %v2555, 0
      %v2625 = vsel %vm1528, %v2556, 0
      %v2628 = vsel %vm1528, %v2557, 0
      %v2631 = vsel %vm1528, %v2558, 0
      %v2634 = vsel %vm1528, %v2559, 0
      %v2637 = vsel %vm1528, %v2560, 0
      %v2640 = vsel %vm1528, %v2561, 0
      %v2643 = vsel %vm1528, %v2562, 0
      %v2646 = vsel %vm1528, %v2563, 0
      %v2649 = vsel %vm1528, %v2564, 0
      %v2652 = vsel %vm1528, %v2565, 0
      %v2655 = vsel %vm1528, %v2566, 0
      %v2658 = vsel %vm1528, %v2567, 0
      %v2661 = vsel %vm1528, %v2568, 0
      %v2664 = vsel %vm1528, %v2569, 0
      %v2667 = vsel %vm1528, %v2570, 0
      %2669 = vmatprep.subr.mxu0 0.0
      %2670 = vmatpush1.msra.mxu0 0.0
      %2671 = vmatprep.subr.mxu0 0.0
      %2672 = vmatpush1.msra.mxu0 0.0
      %2673 = vmatprep.subr.mxu0 0.0
      %2674 = vmatpush1.msra.mxu0 0.0
      %2675 = vmatprep.subr.mxu0 0.0
      %2676 = vmatpush1.msra.mxu0 0.0
      %2677 = vmatprep.subr.mxu0 0.0
      %2678 = vmatpush1.msra.mxu0 0.0
      %2679 = vmatprep.subr.mxu0 0.0
      %2680 = vmatpush1.msra.mxu0 0.0
      %2681 = vmatprep.subr.mxu0 0.0
      %2682 = vmatpush1.msra.mxu0 0.0
      %2683 = vmatprep.subr.mxu0 0.0
      %2684 = vmatpush1.msra.mxu0 0.0
      %2685 = vmatprep.subr.mxu0 0.0
      %2686 = vmatpush1.msra.mxu0 0.0
      %2687 = vmatprep.subr.mxu0 0.0
      %2688 = vmatpush1.msra.mxu0 0.0
      %2689 = vmatprep.subr.mxu0 0.0
      %2690 = vmatpush1.msra.mxu0 0.0
      %2691 = vmatprep.subr.mxu0 0.0
      %2692 = vmatpush1.msra.mxu0 0.0
      %2693 = vmatprep.subr.mxu0 0.0
      %2694 = vmatpush1.msra.mxu0 0.0
      %2695 = vmatprep.subr.mxu0 0.0
      %2696 = vmatpush1.msra.mxu0 0.0
      %2697 = vmatprep.subr.mxu0 0.0
      %2698 = vmatpush1.msra.mxu0 0.0
      %2699 = vmatprep.subr.mxu0 0.0
      %2700 = vmatpush1.msra.mxu0 %v2572
      %2701 = vmatprep.subr.mxu0 0.0
      %2702 = vmatpush2.msra.mxu0 0.0
      %2703 = vmatprep.subr.mxu0 0.0
      %2704 = vmatpush2.msra.mxu0 0.0
      %2705 = vmatprep.subr.mxu0 0.0
      %2706 = vmatpush2.msra.mxu0 0.0
      %2707 = vmatprep.subr.mxu0 0.0
      %2708 = vmatpush2.msra.mxu0 0.0
      %2709 = vmatprep.subr.mxu0 0.0
      %2710 = vmatpush2.msra.mxu0 0.0
      %2711 = vmatprep.subr.mxu0 0.0
      %2712 = vmatpush2.msra.mxu0 0.0
      %2713 = vmatprep.subr.mxu0 0.0
      %2714 = vmatpush2.msra.mxu0 0.0
      %2715 = vmatprep.subr.mxu0 0.0
      %2716 = vmatpush2.msra.mxu0 0.0
      %2717 = vmatprep.subr.mxu0 0.0
      %2718 = vmatpush2.msra.mxu0 0.0
      %2719 = vmatprep.subr.mxu0 0.0
      %2720 = vmatpush2.msra.mxu0 0.0
      %2721 = vmatprep.subr.mxu0 0.0
      %2722 = vmatpush2.msra.mxu0 0.0
      %2723 = vmatprep.subr.mxu0 0.0
      %2724 = vmatpush2.msra.mxu0 0.0
      %2725 = vmatprep.subr.mxu0 0.0
      %2726 = vmatpush2.msra.mxu0 0.0
      %2727 = vmatprep.subr.mxu0 0.0
      %2728 = vmatpush2.msra.mxu0 0.0
      %2729 = vmatprep.subr.mxu0 0.0
      %2730 = vmatpush2.msra.mxu0 0.0
      %2731 = vmatprep.subr.mxu0 0.0
      %2732 = vmatpush2.msra.mxu0 0.0
      %2733 = vmatprep.mubr.f32.mxu0 0.0
      %2734 = vmatmul.mubr.f32.gmra.mxu0 %v2574
      %v2735 = vpop.f32.mrf.mxu0
      %v2736 = vadd.f32 0.0, %v2735
      %v2737 = vpop.f32.mrf.mxu0
      %2738 = vmatprep.mubr.f32.mxu0 0.0
      %2739 = vmatmul.mubr.f32.gmra.mxu0 %v2577
      %v2740 = vpop.f32.mrf.mxu0
      %v2741 = vadd.f32 0.0, %v2740
      %v2742 = vpop.f32.mrf.mxu0
      %2743 = vmatprep.mubr.f32.mxu0 0.0
      %2744 = vmatmul.mubr.f32.gmra.mxu0 %v2580
      %v2745 = vpop.f32.mrf.mxu0
      %v2746 = vadd.f32 0.0, %v2745
      %v2747 = vpop.f32.mrf.mxu0
      %2748 = vmatprep.mubr.f32.mxu0 0.0
      %2749 = vmatmul.mubr.f32.gmra.mxu0 %v2583
      %v2750 = vpop.f32.mrf.mxu0
      %v2751 = vadd.f32 0.0, %v2750
      %v2752 = vpop.f32.mrf.mxu0
      %2753 = vmatprep.mubr.f32.mxu0 0.0
      %2754 = vmatmul.mubr.f32.gmra.mxu0 %v2586
      %v2755 = vpop.f32.mrf.mxu0
      %v2756 = vadd.f32 0.0, %v2755
      %v2757 = vpop.f32.mrf.mxu0
      %2758 = vmatprep.mubr.f32.mxu0 0.0
      %2759 = vmatmul.mubr.f32.gmra.mxu0 %v2589
      %v2760 = vpop.f32.mrf.mxu0
      %v2761 = vadd.f32 0.0, %v2760
      %v2762 = vpop.f32.mrf.mxu0
      %2763 = vmatprep.mubr.f32.mxu0 0.0
      %2764 = vmatmul.mubr.f32.gmra.mxu0 %v2592
      %v2765 = vpop.f32.mrf.mxu0
      %v2766 = vadd.f32 0.0, %v2765
      %v2767 = vpop.f32.mrf.mxu0
      %2768 = vmatprep.mubr.f32.mxu0 0.0
      %2769 = vmatmul.mubr.f32.gmra.mxu0 %v2595
      %v2770 = vpop.f32.mrf.mxu0
      %v2771 = vadd.f32 0.0, %v2770
      %v2772 = vpop.f32.mrf.mxu0
      %2773 = vmatprep.mubr.f32.mxu0 0.0
      %2774 = vmatmul.mubr.f32.gmra.mxu0 %v2598
      %v2775 = vpop.f32.mrf.mxu0
      %v2776 = vadd.f32 0.0, %v2775
      %v2777 = vpop.f32.mrf.mxu0
      %2778 = vmatprep.mubr.f32.mxu0 0.0
      %2779 = vmatmul.mubr.f32.gmra.mxu0 %v2601
      %v2780 = vpop.f32.mrf.mxu0
      %v2781 = vadd.f32 0.0, %v2780
      %v2782 = vpop.f32.mrf.mxu0
      %2783 = vmatprep.mubr.f32.mxu0 0.0
      %2784 = vmatmul.mubr.f32.gmra.mxu0 %v2604
      %v2785 = vpop.f32.mrf.mxu0
      %v2786 = vadd.f32 0.0, %v2785
      %v2787 = vpop.f32.mrf.mxu0
      %2788 = vmatprep.mubr.f32.mxu0 0.0
      %2789 = vmatmul.mubr.f32.gmra.mxu0 %v2607
      %v2790 = vpop.f32.mrf.mxu0
      %v2791 = vadd.f32 0.0, %v2790
      %v2792 = vpop.f32.mrf.mxu0
      %2793 = vmatprep.mubr.f32.mxu0 0.0
      %2794 = vmatmul.mubr.f32.gmra.mxu0 %v2610
      %v2795 = vpop.f32.mrf.mxu0
      %v2796 = vadd.f32 0.0, %v2795
      %v2797 = vpop.f32.mrf.mxu0
      %2798 = vmatprep.mubr.f32.mxu0 0.0
      %2799 = vmatmul.mubr.f32.gmra.mxu0 %v2613
      %v2800 = vpop.f32.mrf.mxu0
      %v2801 = vadd.f32 0.0, %v2800
      %v2802 = vpop.f32.mrf.mxu0
      %2803 = vmatprep.mubr.f32.mxu0 0.0
      %2804 = vmatmul.mubr.f32.gmra.mxu0 %v2616
      %v2805 = vpop.f32.mrf.mxu0
      %v2806 = vadd.f32 0.0, %v2805
      %v2807 = vpop.f32.mrf.mxu0
      %2808 = vmatprep.mubr.f32.mxu0 0.0
      %2809 = vmatmul.mubr.f32.gmra.mxu0 %v2619
      %v2810 = vpop.f32.mrf.mxu0
      %v2811 = vadd.f32 0.0, %v2810
      %v2812 = vpop.f32.mrf.mxu0
      %2813 = vmatprep.mubr.f32.mxu0 0.0
      %2814 = vmatmul.mubr.f32.gmra.mxu0 %v2622
      %v2815 = vpop.f32.mrf.mxu0
      %v2816 = vadd.f32 0.0, %v2815
      %v2817 = vpop.f32.mrf.mxu0
      %2818 = vmatprep.mubr.f32.mxu0 0.0
      %2819 = vmatmul.mubr.f32.gmra.mxu0 %v2625
      %v2820 = vpop.f32.mrf.mxu0
      %v2821 = vadd.f32 0.0, %v2820
      %v2822 = vpop.f32.mrf.mxu0
      %2823 = vmatprep.mubr.f32.mxu0 0.0
      %2824 = vmatmul.mubr.f32.gmra.mxu0 %v2628
      %v2825 = vpop.f32.mrf.mxu0
      %v2826 = vadd.f32 0.0, %v2825
      %v2827 = vpop.f32.mrf.mxu0
      %2828 = vmatprep.mubr.f32.mxu0 0.0
      %2829 = vmatmul.mubr.f32.gmra.mxu0 %v2631
      %v2830 = vpop.f32.mrf.mxu0
      %v2831 = vadd.f32 0.0, %v2830
      %v2832 = vpop.f32.mrf.mxu0
      %2833 = vmatprep.mubr.f32.mxu0 0.0
      %2834 = vmatmul.mubr.f32.gmra.mxu0 %v2634
      %v2835 = vpop.f32.mrf.mxu0
      %v2836 = vadd.f32 0.0, %v2835
      %v2837 = vpop.f32.mrf.mxu0
      %2838 = vmatprep.mubr.f32.mxu0 0.0
      %2839 = vmatmul.mubr.f32.gmra.mxu0 %v2637
      %v2840 = vpop.f32.mrf.mxu0
      %v2841 = vadd.f32 0.0, %v2840
      %v2842 = vpop.f32.mrf.mxu0
      %2843 = vmatprep.mubr.f32.mxu0 0.0
      %2844 = vmatmul.mubr.f32.gmra.mxu0 %v2640
      %v2845 = vpop.f32.mrf.mxu0
      %v2846 = vadd.f32 0.0, %v2845
      %v2847 = vpop.f32.mrf.mxu0
      %2848 = vmatprep.mubr.f32.mxu0 0.0
      %2849 = vmatmul.mubr.f32.gmra.mxu0 %v2643
      %v2850 = vpop.f32.mrf.mxu0
      %v2851 = vadd.f32 0.0, %v2850
      %v2852 = vpop.f32.mrf.mxu0
      %2853 = vmatprep.mubr.f32.mxu0 0.0
      %2854 = vmatmul.mubr.f32.gmra.mxu0 %v2646
      %v2855 = vpop.f32.mrf.mxu0
      %v2856 = vadd.f32 0.0, %v2855
      %v2857 = vpop.f32.mrf.mxu0
      %2858 = vmatprep.mubr.f32.mxu0 0.0
      %2859 = vmatmul.mubr.f32.gmra.mxu0 %v2649
      %v2860 = vpop.f32.mrf.mxu0
      %v2861 = vadd.f32 0.0, %v2860
      %v2862 = vpop.f32.mrf.mxu0
      %2863 = vmatprep.mubr.f32.mxu0 0.0
      %2864 = vmatmul.mubr.f32.gmra.mxu0 %v2652
      %v2865 = vpop.f32.mrf.mxu0
      %v2866 = vadd.f32 0.0, %v2865
      %v2867 = vpop.f32.mrf.mxu0
      %2868 = vmatprep.mubr.f32.mxu0 0.0
      %2869 = vmatmul.mubr.f32.gmra.mxu0 %v2655
      %v2870 = vpop.f32.mrf.mxu0
      %v2871 = vadd.f32 0.0, %v2870
      %v2872 = vpop.f32.mrf.mxu0
      %2873 = vmatprep.mubr.f32.mxu0 0.0
      %2874 = vmatmul.mubr.f32.gmra.mxu0 %v2658
      %v2875 = vpop.f32.mrf.mxu0
      %v2876 = vadd.f32 0.0, %v2875
      %v2877 = vpop.f32.mrf.mxu0
      %2878 = vmatprep.mubr.f32.mxu0 0.0
      %2879 = vmatmul.mubr.f32.gmra.mxu0 %v2661
      %v2880 = vpop.f32.mrf.mxu0
      %v2881 = vadd.f32 0.0, %v2880
      %v2882 = vpop.f32.mrf.mxu0
      %2883 = vmatprep.mubr.f32.mxu0 0.0
      %2884 = vmatmul.mubr.f32.gmra.mxu0 %v2664
      %v2885 = vpop.f32.mrf.mxu0
      %v2886 = vadd.f32 0.0, %v2885
      %v2887 = vpop.f32.mrf.mxu0
      %2888 = vmatprep.mubr.f32.mxu0 0.0
      %2889 = vmatmul.mubr.f32.gmra.mxu0 %v2667
      %v2890 = vpop.f32.mrf.mxu0
      %v2891 = vadd.f32 0.0, %v2890
      %v2892 = vpop.f32.mrf.mxu0
      %2893 = vdwg.mxu0
      %v2895 = vsel %vm1528, %v2506, 0
      %v2898 = vsel %vm1528, %v2507, 0
      %v2901 = vsel %vm1528, %v2508, 0
      %v2904 = vsel %vm1528, %v2509, 0
      %v2907 = vsel %vm1528, %v2510, 0
      %v2910 = vsel %vm1528, %v2511, 0
      %v2913 = vsel %vm1528, %v2512, 0
      %v2916 = vsel %vm1528, %v2513, 0
      %v2919 = vsel %vm1528, %v2514, 0
      %v2922 = vsel %vm1528, %v2515, 0
      %v2925 = vsel %vm1528, %v2516, 0
      %v2928 = vsel %vm1528, %v2517, 0
      %v2931 = vsel %vm1528, %v2518, 0
      %v2934 = vsel %vm1528, %v2519, 0
      %v2937 = vsel %vm1528, %v2520, 0
      %v2940 = vsel %vm1528, %v2521, 0
      %v2943 = vsel %vm1528, %v2522, 0
      %v2946 = vsel %vm1528, %v2523, 0
      %v2949 = vsel %vm1528, %v2524, 0
      %v2952 = vsel %vm1528, %v2525, 0
      %v2955 = vsel %vm1528, %v2526, 0
      %v2958 = vsel %vm1528, %v2527, 0
      %v2961 = vsel %vm1528, %v2528, 0
      %v2964 = vsel %vm1528, %v2529, 0
      %v2967 = vsel %vm1528, %v2530, 0
      %v2970 = vsel %vm1528, %v2531, 0
      %v2973 = vsel %vm1528, %v2532, 0
      %v2976 = vsel %vm1528, %v2533, 0
      %v2979 = vsel %vm1528, %v2534, 0
      %v2982 = vsel %vm1528, %v2535, 0
      %v2985 = vsel %vm1528, %v2536, 0
      %v2988 = vsel %vm1528, %v2537, 0
      %2990 = vmatprep.subr.mxu0 0.0
      %2991 = vmatpush1.msra.mxu0 0.0
      %2992 = vmatprep.subr.mxu0 0.0
      %2993 = vmatpush1.msra.mxu0 0.0
      %2994 = vmatprep.subr.mxu0 0.0
      %2995 = vmatpush1.msra.mxu0 0.0
      %2996 = vmatprep.subr.mxu0 0.0
      %2997 = vmatpush1.msra.mxu0 0.0
      %2998 = vmatprep.subr.mxu0 0.0
      %2999 = vmatpush1.msra.mxu0 0.0
      %3000 = vmatprep.subr.mxu0 0.0
      %3001 = vmatpush1.msra.mxu0 0.0
      %3002 = vmatprep.subr.mxu0 0.0
      %3003 = vmatpush1.msra.mxu0 0.0
      %3004 = vmatprep.subr.mxu0 0.0
      %3005 = vmatpush1.msra.mxu0 0.0
      %3006 = vmatprep.subr.mxu0 0.0
      %3007 = vmatpush1.msra.mxu0 0.0
      %3008 = vmatprep.subr.mxu0 0.0
      %3009 = vmatpush1.msra.mxu0 0.0
      %3010 = vmatprep.subr.mxu0 0.0
      %3011 = vmatpush1.msra.mxu0 0.0
      %3012 = vmatprep.subr.mxu0 0.0
      %3013 = vmatpush1.msra.mxu0 0.0
      %3014 = vmatprep.subr.mxu0 0.0
      %3015 = vmatpush1.msra.mxu0 0.0
      %3016 = vmatprep.subr.mxu0 0.0
      %3017 = vmatpush1.msra.mxu0 0.0
      %3018 = vmatprep.subr.mxu0 0.0
      %3019 = vmatpush1.msra.mxu0 0.0
      %3020 = vmatprep.subr.mxu0 0.0
      %3021 = vmatpush1.msra.mxu0 %v2538
      %3022 = vmatprep.subr.mxu0 0.0
      %3023 = vmatpush2.msra.mxu0 0.0
      %3024 = vmatprep.subr.mxu0 0.0
      %3025 = vmatpush2.msra.mxu0 0.0
      %3026 = vmatprep.subr.mxu0 0.0
      %3027 = vmatpush2.msra.mxu0 0.0
      %3028 = vmatprep.subr.mxu0 0.0
      %3029 = vmatpush2.msra.mxu0 0.0
      %3030 = vmatprep.subr.mxu0 0.0
      %3031 = vmatpush2.msra.mxu0 0.0
      %3032 = vmatprep.subr.mxu0 0.0
      %3033 = vmatpush2.msra.mxu0 0.0
      %3034 = vmatprep.subr.mxu0 0.0
      %3035 = vmatpush2.msra.mxu0 0.0
      %3036 = vmatprep.subr.mxu0 0.0
      %3037 = vmatpush2.msra.mxu0 0.0
      %3038 = vmatprep.subr.mxu0 0.0
      %3039 = vmatpush2.msra.mxu0 0.0
      %3040 = vmatprep.subr.mxu0 0.0
      %3041 = vmatpush2.msra.mxu0 0.0
      %3042 = vmatprep.subr.mxu0 0.0
      %3043 = vmatpush2.msra.mxu0 0.0
      %3044 = vmatprep.subr.mxu0 0.0
      %3045 = vmatpush2.msra.mxu0 0.0
      %3046 = vmatprep.subr.mxu0 0.0
      %3047 = vmatpush2.msra.mxu0 0.0
      %3048 = vmatprep.subr.mxu0 0.0
      %3049 = vmatpush2.msra.mxu0 0.0
      %3050 = vmatprep.subr.mxu0 0.0
      %3051 = vmatpush2.msra.mxu0 0.0
      %3052 = vmatprep.subr.mxu0 0.0
      %3053 = vmatpush2.msra.mxu0 0.0
      %3054 = vmatprep.mubr.f32.mxu0 0.0
      %3055 = vmatmul.mubr.f32.gmra.mxu0 %v2895
      %v3056 = vpop.f32.mrf.mxu0
      %v3057 = vadd.f32 %v2736, %v3056
      %v3058 = vpop.f32.mrf.mxu0
      %3059 = vmatprep.mubr.f32.mxu0 0.0
      %3060 = vmatmul.mubr.f32.gmra.mxu0 %v2898
      %v3061 = vpop.f32.mrf.mxu0
      %v3062 = vadd.f32 %v2741, %v3061
      %v3063 = vpop.f32.mrf.mxu0
      %3064 = vmatprep.mubr.f32.mxu0 0.0
      %3065 = vmatmul.mubr.f32.gmra.mxu0 %v2901
      %v3066 = vpop.f32.mrf.mxu0
      %v3067 = vadd.f32 %v2746, %v3066
      %v3068 = vpop.f32.mrf.mxu0
      %3069 = vmatprep.mubr.f32.mxu0 0.0
      %3070 = vmatmul.mubr.f32.gmra.mxu0 %v2904
      %v3071 = vpop.f32.mrf.mxu0
      %v3072 = vadd.f32 %v2751, %v3071
      %v3073 = vpop.f32.mrf.mxu0
      %3074 = vmatprep.mubr.f32.mxu0 0.0
      %3075 = vmatmul.mubr.f32.gmra.mxu0 %v2907
      %v3076 = vpop.f32.mrf.mxu0
      %v3077 = vadd.f32 %v2756, %v3076
      %v3078 = vpop.f32.mrf.mxu0
      %3079 = vmatprep.mubr.f32.mxu0 0.0
      %3080 = vmatmul.mubr.f32.gmra.mxu0 %v2910
      %v3081 = vpop.f32.mrf.mxu0
      %v3082 = vadd.f32 %v2761, %v3081
      %v3083 = vpop.f32.mrf.mxu0
      %3084 = vmatprep.mubr.f32.mxu0 0.0
      %3085 = vmatmul.mubr.f32.gmra.mxu0 %v2913
      %v3086 = vpop.f32.mrf.mxu0
      %v3087 = vadd.f32 %v2766, %v3086
      %v3088 = vpop.f32.mrf.mxu0
      %3089 = vmatprep.mubr.f32.mxu0 0.0
      %3090 = vmatmul.mubr.f32.gmra.mxu0 %v2916
      %v3091 = vpop.f32.mrf.mxu0
      %v3092 = vadd.f32 %v2771, %v3091
      %v3093 = vpop.f32.mrf.mxu0
      %3094 = vmatprep.mubr.f32.mxu0 0.0
      %3095 = vmatmul.mubr.f32.gmra.mxu0 %v2919
      %v3096 = vpop.f32.mrf.mxu0
      %v3097 = vadd.f32 %v2776, %v3096
      %v3098 = vpop.f32.mrf.mxu0
      %3099 = vmatprep.mubr.f32.mxu0 0.0
      %3100 = vmatmul.mubr.f32.gmra.mxu0 %v2922
      %v3101 = vpop.f32.mrf.mxu0
      %v3102 = vadd.f32 %v2781, %v3101
      %v3103 = vpop.f32.mrf.mxu0
      %3104 = vmatprep.mubr.f32.mxu0 0.0
      %3105 = vmatmul.mubr.f32.gmra.mxu0 %v2925
      %v3106 = vpop.f32.mrf.mxu0
      %v3107 = vadd.f32 %v2786, %v3106
      %v3108 = vpop.f32.mrf.mxu0
      %3109 = vmatprep.mubr.f32.mxu0 0.0
      %3110 = vmatmul.mubr.f32.gmra.mxu0 %v2928
      %v3111 = vpop.f32.mrf.mxu0
      %v3112 = vadd.f32 %v2791, %v3111
      %v3113 = vpop.f32.mrf.mxu0
      %3114 = vmatprep.mubr.f32.mxu0 0.0
      %3115 = vmatmul.mubr.f32.gmra.mxu0 %v2931
      %v3116 = vpop.f32.mrf.mxu0
      %v3117 = vadd.f32 %v2796, %v3116
      %v3118 = vpop.f32.mrf.mxu0
      %3119 = vmatprep.mubr.f32.mxu0 0.0
      %3120 = vmatmul.mubr.f32.gmra.mxu0 %v2934
      %v3121 = vpop.f32.mrf.mxu0
      %v3122 = vadd.f32 %v2801, %v3121
      %v3123 = vpop.f32.mrf.mxu0
      %3124 = vmatprep.mubr.f32.mxu0 0.0
      %3125 = vmatmul.mubr.f32.gmra.mxu0 %v2937
      %v3126 = vpop.f32.mrf.mxu0
      %v3127 = vadd.f32 %v2806, %v3126
      %v3128 = vpop.f32.mrf.mxu0
      %3129 = vmatprep.mubr.f32.mxu0 0.0
      %3130 = vmatmul.mubr.f32.gmra.mxu0 %v2940
      %v3131 = vpop.f32.mrf.mxu0
      %v3132 = vadd.f32 %v2811, %v3131
      %v3133 = vpop.f32.mrf.mxu0
      %3134 = vmatprep.mubr.f32.mxu0 0.0
      %3135 = vmatmul.mubr.f32.gmra.mxu0 %v2943
      %v3136 = vpop.f32.mrf.mxu0
      %v3137 = vadd.f32 %v2816, %v3136
      %v3138 = vpop.f32.mrf.mxu0
      %3139 = vmatprep.mubr.f32.mxu0 0.0
      %3140 = vmatmul.mubr.f32.gmra.mxu0 %v2946
      %v3141 = vpop.f32.mrf.mxu0
      %v3142 = vadd.f32 %v2821, %v3141
      %v3143 = vpop.f32.mrf.mxu0
      %3144 = vmatprep.mubr.f32.mxu0 0.0
      %3145 = vmatmul.mubr.f32.gmra.mxu0 %v2949
      %v3146 = vpop.f32.mrf.mxu0
      %v3147 = vadd.f32 %v2826, %v3146
      %v3148 = vpop.f32.mrf.mxu0
      %3149 = vmatprep.mubr.f32.mxu0 0.0
      %3150 = vmatmul.mubr.f32.gmra.mxu0 %v2952
      %v3151 = vpop.f32.mrf.mxu0
      %v3152 = vadd.f32 %v2831, %v3151
      %v3153 = vpop.f32.mrf.mxu0
      %3154 = vmatprep.mubr.f32.mxu0 0.0
      %3155 = vmatmul.mubr.f32.gmra.mxu0 %v2955
      %v3156 = vpop.f32.mrf.mxu0
      %v3157 = vadd.f32 %v2836, %v3156
      %v3158 = vpop.f32.mrf.mxu0
      %3159 = vmatprep.mubr.f32.mxu0 0.0
      %3160 = vmatmul.mubr.f32.gmra.mxu0 %v2958
      %v3161 = vpop.f32.mrf.mxu0
      %v3162 = vadd.f32 %v2841, %v3161
      %v3163 = vpop.f32.mrf.mxu0
      %3164 = vmatprep.mubr.f32.mxu0 0.0
      %3165 = vmatmul.mubr.f32.gmra.mxu0 %v2961
      %v3166 = vpop.f32.mrf.mxu0
      %v3167 = vadd.f32 %v2846, %v3166
      %v3168 = vpop.f32.mrf.mxu0
      %3169 = vmatprep.mubr.f32.mxu0 0.0
      %3170 = vmatmul.mubr.f32.gmra.mxu0 %v2964
      %v3171 = vpop.f32.mrf.mxu0
      %v3172 = vadd.f32 %v2851, %v3171
      %v3173 = vpop.f32.mrf.mxu0
      %3174 = vmatprep.mubr.f32.mxu0 0.0
      %3175 = vmatmul.mubr.f32.gmra.mxu0 %v2967
      %v3176 = vpop.f32.mrf.mxu0
      %v3177 = vadd.f32 %v2856, %v3176
      %v3178 = vpop.f32.mrf.mxu0
      %3179 = vmatprep.mubr.f32.mxu0 0.0
      %3180 = vmatmul.mubr.f32.gmra.mxu0 %v2970
      %v3181 = vpop.f32.mrf.mxu0
      %v3182 = vadd.f32 %v2861, %v3181
      %v3183 = vpop.f32.mrf.mxu0
      %3184 = vmatprep.mubr.f32.mxu0 0.0
      %3185 = vmatmul.mubr.f32.gmra.mxu0 %v2973
      %v3186 = vpop.f32.mrf.mxu0
      %v3187 = vadd.f32 %v2866, %v3186
      %v3188 = vpop.f32.mrf.mxu0
      %3189 = vmatprep.mubr.f32.mxu0 0.0
      %3190 = vmatmul.mubr.f32.gmra.mxu0 %v2976
      %v3191 = vpop.f32.mrf.mxu0
      %v3192 = vadd.f32 %v2871, %v3191
      %v3193 = vpop.f32.mrf.mxu0
      %3194 = vmatprep.mubr.f32.mxu0 0.0
      %3195 = vmatmul.mubr.f32.gmra.mxu0 %v2979
      %v3196 = vpop.f32.mrf.mxu0
      %v3197 = vadd.f32 %v2876, %v3196
      %v3198 = vpop.f32.mrf.mxu0
      %3199 = vmatprep.mubr.f32.mxu0 0.0
      %3200 = vmatmul.mubr.f32.gmra.mxu0 %v2982
      %v3201 = vpop.f32.mrf.mxu0
      %v3202 = vadd.f32 %v2881, %v3201
      %v3203 = vpop.f32.mrf.mxu0
      %3204 = vmatprep.mubr.f32.mxu0 0.0
      %3205 = vmatmul.mubr.f32.gmra.mxu0 %v2985
      %v3206 = vpop.f32.mrf.mxu0
      %v3207 = vadd.f32 %v2886, %v3206
      %v3208 = vpop.f32.mrf.mxu0
      %3209 = vmatprep.mubr.f32.mxu0 0.0
      %3210 = vmatmul.mubr.f32.gmra.mxu0 %v2988
      %v3211 = vpop.f32.mrf.mxu0
      %v3212 = vadd.f32 %v2891, %v3211
      %v3213 = vpop.f32.mrf.mxu0
      %3214 = vdwg.mxu0
      %v3215 = vld [vmem:[%s8 + $0x4] sm:$0x1]
      %v3216 = vlaneseq
      %v3217 = vshrl.u32 %v3216, 7
      %v3218 = vsub.s32 0, %v3217
      %v3219 = vrot.slane %v3215, %v3218
      %v3220 = vadd.f32 %v3057, %v3219
      %v3221 = vadd.f32 %v3062, %v3219
      %v3222 = vadd.f32 %v3067, %v3219
      %v3223 = vadd.f32 %v3072, %v3219
      %v3224 = vadd.f32 %v3077, %v3219
      %v3225 = vadd.f32 %v3082, %v3219
      %v3226 = vadd.f32 %v3087, %v3219
      %v3227 = vadd.f32 %v3092, %v3219
      %v3228 = vadd.f32 %v3097, %v3219
      %v3229 = vadd.f32 %v3102, %v3219
      %v3230 = vadd.f32 %v3107, %v3219
      %v3231 = vadd.f32 %v3112, %v3219
      %v3232 = vadd.f32 %v3117, %v3219
      %v3233 = vadd.f32 %v3122, %v3219
      %v3234 = vadd.f32 %v3127, %v3219
      %v3235 = vadd.f32 %v3132, %v3219
      %v3236 = vadd.f32 %v3137, %v3219
      %v3237 = vadd.f32 %v3142, %v3219
      %v3238 = vadd.f32 %v3147, %v3219
      %v3239 = vadd.f32 %v3152, %v3219
      %v3240 = vadd.f32 %v3157, %v3219
      %v3241 = vadd.f32 %v3162, %v3219
      %v3242 = vadd.f32 %v3167, %v3219
      %v3243 = vadd.f32 %v3172, %v3219
      %v3244 = vadd.f32 %v3177, %v3219
      %v3245 = vadd.f32 %v3182, %v3219
      %v3246 = vadd.f32 %v3187, %v3219
      %v3247 = vadd.f32 %v3192, %v3219
      %v3248 = vadd.f32 %v3197, %v3219
      %v3249 = vadd.f32 %v3202, %v3219
      %v3250 = vadd.f32 %v3207, %v3219
      %v3251 = vadd.f32 %v3212, %v3219
      %v3252 = vsel %vm1528, %v3220, 0.0
      %3253 = vadd.xlane.f32.xlu0 %v3252
      %v3254 = vpop.xlane.xlu0 %3253
      %v3255 = vsel %vm1528, %v3221, 0.0
      %3256 = vadd.xlane.f32.xlu0 %v3255
      %v3257 = vpop.xlane.xlu0 %3256
      %v3258 = vsel %vm1528, %v3222, 0.0
      %3259 = vadd.xlane.f32.xlu0 %v3258
      %v3260 = vpop.xlane.xlu0 %3259
      %v3261 = vsel %vm1528, %v3223, 0.0
      %3262 = vadd.xlane.f32.xlu0 %v3261
      %v3263 = vpop.xlane.xlu0 %3262
      %v3264 = vsel %vm1528, %v3224, 0.0
      %3265 = vadd.xlane.f32.xlu0 %v3264
      %v3266 = vpop.xlane.xlu0 %3265
      %v3267 = vsel %vm1528, %v3225, 0.0
      %3268 = vadd.xlane.f32.xlu0 %v3267
      %v3269 = vpop.xlane.xlu0 %3268
      %v3270 = vsel %vm1528, %v3226, 0.0
      %3271 = vadd.xlane.f32.xlu0 %v3270
      %v3272 = vpop.xlane.xlu0 %3271
      %v3273 = vsel %vm1528, %v3227, 0.0
      %3274 = vadd.xlane.f32.xlu0 %v3273
      %v3275 = vpop.xlane.xlu0 %3274
      %v3276 = vsel %vm1528, %v3228, 0.0
      %3277 = vadd.xlane.f32.xlu0 %v3276
      %v3278 = vpop.xlane.xlu0 %3277
      %v3279 = vsel %vm1528, %v3229, 0.0
      %3280 = vadd.xlane.f32.xlu0 %v3279
      %v3281 = vpop.xlane.xlu0 %3280
      %v3282 = vsel %vm1528, %v3230, 0.0
      %3283 = vadd.xlane.f32.xlu0 %v3282
      %v3284 = vpop.xlane.xlu0 %3283
      %v3285 = vsel %vm1528, %v3231, 0.0
      %3286 = vadd.xlane.f32.xlu0 %v3285
      %v3287 = vpop.xlane.xlu0 %3286
      %v3288 = vsel %vm1528, %v3232, 0.0
      %3289 = vadd.xlane.f32.xlu0 %v3288
      %v3290 = vpop.xlane.xlu0 %3289
      %v3291 = vsel %vm1528, %v3233, 0.0
      %3292 = vadd.xlane.f32.xlu0 %v3291
      %v3293 = vpop.xlane.xlu0 %3292
      %v3294 = vsel %vm1528, %v3234, 0.0
      %3295 = vadd.xlane.f32.xlu0 %v3294
      %v3296 = vpop.xlane.xlu0 %3295
      %v3297 = vsel %vm1528, %v3235, 0.0
      %3298 = vadd.xlane.f32.xlu0 %v3297
      %v3299 = vpop.xlane.xlu0 %3298
      %v3300 = vsel %vm1528, %v3236, 0.0
      %3301 = vadd.xlane.f32.xlu0 %v3300
      %v3302 = vpop.xlane.xlu0 %3301
      %v3303 = vsel %vm1528, %v3237, 0.0
      %3304 = vadd.xlane.f32.xlu0 %v3303
      %v3305 = vpop.xlane.xlu0 %3304
      %v3306 = vsel %vm1528, %v3238, 0.0
      %3307 = vadd.xlane.f32.xlu0 %v3306
      %v3308 = vpop.xlane.xlu0 %3307
      %v3309 = vsel %vm1528, %v3239, 0.0
      %3310 = vadd.xlane.f32.xlu0 %v3309
      %v3311 = vpop.xlane.xlu0 %3310
      %v3312 = vsel %vm1528, %v3240, 0.0
      %3313 = vadd.xlane.f32.xlu0 %v3312
      %v3314 = vpop.xlane.xlu0 %3313
      %v3315 = vsel %vm1528, %v3241, 0.0
      %3316 = vadd.xlane.f32.xlu0 %v3315
      %v3317 = vpop.xlane.xlu0 %3316
      %v3318 = vsel %vm1528, %v3242, 0.0
      %3319 = vadd.xlane.f32.xlu0 %v3318
      %v3320 = vpop.xlane.xlu0 %3319
      %v3321 = vsel %vm1528, %v3243, 0.0
      %3322 = vadd.xlane.f32.xlu0 %v3321
      %v3323 = vpop.xlane.xlu0 %3322
      %v3324 = vsel %vm1528, %v3244, 0.0
      %3325 = vadd.xlane.f32.xlu0 %v3324
      %v3326 = vpop.xlane.xlu0 %3325
      %v3327 = vsel %vm1528, %v3245, 0.0
      %3328 = vadd.xlane.f32.xlu0 %v3327
      %v3329 = vpop.xlane.xlu0 %3328
      %v3330 = vsel %vm1528, %v3246, 0.0
      %3331 = vadd.xlane.f32.xlu0 %v3330
      %v3332 = vpop.xlane.xlu0 %3331
      %v3333 = vsel %vm1528, %v3247, 0.0
      %3334 = vadd.xlane.f32.xlu0 %v3333
      %v3335 = vpop.xlane.xlu0 %3334
      %v3336 = vsel %vm1528, %v3248, 0.0
      %3337 = vadd.xlane.f32.xlu0 %v3336
      %v3338 = vpop.xlane.xlu0 %3337
      %v3339 = vsel %vm1528, %v3249, 0.0
      %3340 = vadd.xlane.f32.xlu0 %v3339
      %v3341 = vpop.xlane.xlu0 %3340
      %v3342 = vsel %vm1528, %v3250, 0.0
      %3343 = vadd.xlane.f32.xlu0 %v3342
      %v3344 = vpop.xlane.xlu0 %3343
      %v3345 = vsel %vm1528, %v3251, 0.0
      %3346 = vadd.xlane.f32.xlu0 %v3345
      %v3347 = vpop.xlane.xlu0 %3346
      %v3348 = vmul.f32 %v3254, 0.125
      %v3349 = vmul.f32 %v3257, 0.125
      %v3350 = vmul.f32 %v3260, 0.125
      %v3351 = vmul.f32 %v3263, 0.125
      %v3352 = vmul.f32 %v3266, 0.125
      %v3353 = vmul.f32 %v3269, 0.125
      %v3354 = vmul.f32 %v3272, 0.125
      %v3355 = vmul.f32 %v3275, 0.125
      %v3356 = vmul.f32 %v3278, 0.125
      %v3357 = vmul.f32 %v3281, 0.125
      %v3358 = vmul.f32 %v3284, 0.125
      %v3359 = vmul.f32 %v3287, 0.125
      %v3360 = vmul.f32 %v3290, 0.125
      %v3361 = vmul.f32 %v3293, 0.125
      %v3362 = vmul.f32 %v3296, 0.125
      %v3363 = vmul.f32 %v3299, 0.125
      %v3364 = vmul.f32 %v3302, 0.125
      %v3365 = vmul.f32 %v3305, 0.125
      %v3366 = vmul.f32 %v3308, 0.125
      %v3367 = vmul.f32 %v3311, 0.125
      %v3368 = vmul.f32 %v3314, 0.125
      %v3369 = vmul.f32 %v3317, 0.125
      %v3370 = vmul.f32 %v3320, 0.125
      %v3371 = vmul.f32 %v3323, 0.125
      %v3372 = vmul.f32 %v3326, 0.125
      %v3373 = vmul.f32 %v3329, 0.125
      %v3374 = vmul.f32 %v3332, 0.125
      %v3375 = vmul.f32 %v3335, 0.125
      %v3376 = vmul.f32 %v3338, 0.125
      %v3377 = vmul.f32 %v3341, 0.125
      %v3378 = vmul.f32 %v3344, 0.125
      %v3379 = vmul.f32 %v3347, 0.125
      %v3380 = vsub.f32 %v3220, %v3348
      %v3381 = vsub.f32 %v3221, %v3349
      %v3382 = vsub.f32 %v3222, %v3350
      %v3383 = vsub.f32 %v3223, %v3351
      %v3384 = vsub.f32 %v3224, %v3352
      %v3385 = vsub.f32 %v3225, %v3353
      %v3386 = vsub.f32 %v3226, %v3354
      %v3387 = vsub.f32 %v3227, %v3355
      %v3388 = vsub.f32 %v3228, %v3356
      %v3389 = vsub.f32 %v3229, %v3357
      %v3390 = vsub.f32 %v3230, %v3358
      %v3391 = vsub.f32 %v3231, %v3359
      %v3392 = vsub.f32 %v3232, %v3360
      %v3393 = vsub.f32 %v3233, %v3361
      %v3394 = vsub.f32 %v3234, %v3362
      %v3395 = vsub.f32 %v3235, %v3363
      %v3396 = vsub.f32 %v3236, %v3364
      %v3397 = vsub.f32 %v3237, %v3365
      %v3398 = vsub.f32 %v3238, %v3366
      %v3399 = vsub.f32 %v3239, %v3367
      %v3400 = vsub.f32 %v3240, %v3368
      %v3401 = vsub.f32 %v3241, %v3369
      %v3402 = vsub.f32 %v3242, %v3370
      %v3403 = vsub.f32 %v3243, %v3371
      %v3404 = vsub.f32 %v3244, %v3372
      %v3405 = vsub.f32 %v3245, %v3373
      %v3406 = vsub.f32 %v3246, %v3374
      %v3407 = vsub.f32 %v3247, %v3375
      %v3408 = vsub.f32 %v3248, %v3376
      %v3409 = vsub.f32 %v3249, %v3377
      %v3410 = vsub.f32 %v3250, %v3378
      %v3411 = vsub.f32 %v3251, %v3379
      %v3412 = vmul.f32 %v3380, %v3380
      %v3413 = vmul.f32 %v3381, %v3381
      %v3414 = vmul.f32 %v3382, %v3382
      %v3415 = vmul.f32 %v3383, %v3383
      %v3416 = vmul.f32 %v3384, %v3384
      %v3417 = vmul.f32 %v3385, %v3385
      %v3418 = vmul.f32 %v3386, %v3386
      %v3419 = vmul.f32 %v3387, %v3387
      %v3420 = vmul.f32 %v3388, %v3388
      %v3421 = vmul.f32 %v3389, %v3389
      %v3422 = vmul.f32 %v3390, %v3390
      %v3423 = vmul.f32 %v3391, %v3391
      %v3424 = vmul.f32 %v3392, %v3392
      %v3425 = vmul.f32 %v3393, %v3393
      %v3426 = vmul.f32 %v3394, %v3394
      %v3427 = vmul.f32 %v3395, %v3395
      %v3428 = vmul.f32 %v3396, %v3396
      %v3429 = vmul.f32 %v3397, %v3397
      %v3430 = vmul.f32 %v3398, %v3398
      %v3431 = vmul.f32 %v3399, %v3399
      %v3432 = vmul.f32 %v3400, %v3400
      %v3433 = vmul.f32 %v3401, %v3401
      %v3434 = vmul.f32 %v3402, %v3402
      %v3435 = vmul.f32 %v3403, %v3403
      %v3436 = vmul.f32 %v3404, %v3404
      %v3437 = vmul.f32 %v3405, %v3405
      %v3438 = vmul.f32 %v3406, %v3406
      %v3439 = vmul.f32 %v3407, %v3407
      %v3440 = vmul.f32 %v3408, %v3408
      %v3441 = vmul.f32 %v3409, %v3409
      %v3442 = vmul.f32 %v3410, %v3410
      %v3443 = vmul.f32 %v3411, %v3411
      %v3444 = vsel %vm1528, %v3412, 0.0
      %3445 = vadd.xlane.f32.xlu0 %v3444
      %v3446 = vpop.xlane.xlu0 %3445
      %v3447 = vsel %vm1528, %v3413, 0.0
      %3448 = vadd.xlane.f32.xlu0 %v3447
      %v3449 = vpop.xlane.xlu0 %3448
      %v3450 = vsel %vm1528, %v3414, 0.0
      %3451 = vadd.xlane.f32.xlu0 %v3450
      %v3452 = vpop.xlane.xlu0 %3451
      %v3453 = vsel %vm1528, %v3415, 0.0
      %3454 = vadd.xlane.f32.xlu0 %v3453
      %v3455 = vpop.xlane.xlu0 %3454
      %v3456 = vsel %vm1528, %v3416, 0.0
      %3457 = vadd.xlane.f32.xlu0 %v3456
      %v3458 = vpop.xlane.xlu0 %3457
      %v3459 = vsel %vm1528, %v3417, 0.0
      %3460 = vadd.xlane.f32.xlu0 %v3459
      %v3461 = vpop.xlane.xlu0 %3460
      %v3462 = vsel %vm1528, %v3418, 0.0
      %3463 = vadd.xlane.f32.xlu0 %v3462
      %v3464 = vpop.xlane.xlu0 %3463
      %v3465 = vsel %vm1528, %v3419, 0.0
      %3466 = vadd.xlane.f32.xlu0 %v3465
      %v3467 = vpop.xlane.xlu0 %3466
      %v3468 = vsel %vm1528, %v3420, 0.0
      %3469 = vadd.xlane.f32.xlu0 %v3468
      %v3470 = vpop.xlane.xlu0 %3469
      %v3471 = vsel %vm1528, %v3421, 0.0
      %3472 = vadd.xlane.f32.xlu0 %v3471
      %v3473 = vpop.xlane.xlu0 %3472
      %v3474 = vsel %vm1528, %v3422, 0.0
      %3475 = vadd.xlane.f32.xlu0 %v3474
      %v3476 = vpop.xlane.xlu0 %3475
      %v3477 = vsel %vm1528, %v3423, 0.0
      %3478 = vadd.xlane.f32.xlu0 %v3477
      %v3479 = vpop.xlane.xlu0 %3478
      %v3480 = vsel %vm1528, %v3424, 0.0
      %3481 = vadd.xlane.f32.xlu0 %v3480
      %v3482 = vpop.xlane.xlu0 %3481
      %v3483 = vsel %vm1528, %v3425, 0.0
      %3484 = vadd.xlane.f32.xlu0 %v3483
      %v3485 = vpop.xlane.xlu0 %3484
      %v3486 = vsel %vm1528, %v3426, 0.0
      %3487 = vadd.xlane.f32.xlu0 %v3486
      %v3488 = vpop.xlane.xlu0 %3487
      %v3489 = vsel %vm1528, %v3427, 0.0
      %3490 = vadd.xlane.f32.xlu0 %v3489
      %v3491 = vpop.xlane.xlu0 %3490
      %v3492 = vsel %vm1528, %v3428, 0.0
      %3493 = vadd.xlane.f32.xlu0 %v3492
      %v3494 = vpop.xlane.xlu0 %3493
      %v3495 = vsel %vm1528, %v3429, 0.0
      %3496 = vadd.xlane.f32.xlu0 %v3495
      %v3497 = vpop.xlane.xlu0 %3496
      %v3498 = vsel %vm1528, %v3430, 0.0
      %3499 = vadd.xlane.f32.xlu0 %v3498
      %v3500 = vpop.xlane.xlu0 %3499
      %v3501 = vsel %vm1528, %v3431, 0.0
      %3502 = vadd.xlane.f32.xlu0 %v3501
      %v3503 = vpop.xlane.xlu0 %3502
      %v3504 = vsel %vm1528, %v3432, 0.0
      %3505 = vadd.xlane.f32.xlu0 %v3504
      %v3506 = vpop.xlane.xlu0 %3505
      %v3507 = vsel %vm1528, %v3433, 0.0
      %3508 = vadd.xlane.f32.xlu0 %v3507
      %v3509 = vpop.xlane.xlu0 %3508
      %v3510 = vsel %vm1528, %v3434, 0.0
      %3511 = vadd.xlane.f32.xlu0 %v3510
      %v3512 = vpop.xlane.xlu0 %3511
      %v3513 = vsel %vm1528, %v3435, 0.0
      %3514 = vadd.xlane.f32.xlu0 %v3513
      %v3515 = vpop.xlane.xlu0 %3514
      %v3516 = vsel %vm1528, %v3436, 0.0
      %3517 = vadd.xlane.f32.xlu0 %v3516
      %v3518 = vpop.xlane.xlu0 %3517
      %v3519 = vsel %vm1528, %v3437, 0.0
      %3520 = vadd.xlane.f32.xlu0 %v3519
      %v3521 = vpop.xlane.xlu0 %3520
      %v3522 = vsel %vm1528, %v3438, 0.0
      %3523 = vadd.xlane.f32.xlu0 %v3522
      %v3524 = vpop.xlane.xlu0 %3523
      %v3525 = vsel %vm1528, %v3439, 0.0
      %3526 = vadd.xlane.f32.xlu0 %v3525
      %v3527 = vpop.xlane.xlu0 %3526
      %v3528 = vsel %vm1528, %v3440, 0.0
      %3529 = vadd.xlane.f32.xlu0 %v3528
      %v3530 = vpop.xlane.xlu0 %3529
      %v3531 = vsel %vm1528, %v3441, 0.0
      %3532 = vadd.xlane.f32.xlu0 %v3531
      %v3533 = vpop.xlane.xlu0 %3532
      %v3534 = vsel %vm1528, %v3442, 0.0
      %3535 = vadd.xlane.f32.xlu0 %v3534
      %v3536 = vpop.xlane.xlu0 %3535
      %v3537 = vsel %vm1528, %v3443, 0.0
      %3538 = vadd.xlane.f32.xlu0 %v3537
      %v3539 = vpop.xlane.xlu0 %3538
      %v3540 = vmul.f32 %v3446, 0.125
      %v3541 = vmul.f32 %v3449, 0.125
      %v3542 = vmul.f32 %v3452, 0.125
      %v3543 = vmul.f32 %v3455, 0.125
      %v3544 = vmul.f32 %v3458, 0.125
      %v3545 = vmul.f32 %v3461, 0.125
      %v3546 = vmul.f32 %v3464, 0.125
      %v3547 = vmul.f32 %v3467, 0.125
      %v3548 = vmul.f32 %v3470, 0.125
      %v3549 = vmul.f32 %v3473, 0.125
      %v3550 = vmul.f32 %v3476, 0.125
      %v3551 = vmul.f32 %v3479, 0.125
      %v3552 = vmul.f32 %v3482, 0.125
      %v3553 = vmul.f32 %v3485, 0.125
      %v3554 = vmul.f32 %v3488, 0.125
      %v3555 = vmul.f32 %v3491, 0.125
      %v3556 = vmul.f32 %v3494, 0.125
      %v3557 = vmul.f32 %v3497, 0.125
      %v3558 = vmul.f32 %v3500, 0.125
      %v3559 = vmul.f32 %v3503, 0.125
      %v3560 = vmul.f32 %v3506, 0.125
      %v3561 = vmul.f32 %v3509, 0.125
      %v3562 = vmul.f32 %v3512, 0.125
      %v3563 = vmul.f32 %v3515, 0.125
      %v3564 = vmul.f32 %v3518, 0.125
      %v3565 = vmul.f32 %v3521, 0.125
      %v3566 = vmul.f32 %v3524, 0.125
      %v3567 = vmul.f32 %v3527, 0.125
      %v3568 = vmul.f32 %v3530, 0.125
      %v3569 = vmul.f32 %v3533, 0.125
      %v3570 = vmul.f32 %v3536, 0.125
      %v3571 = vmul.f32 %v3539, 0.125
      %v3572 = vadd.f32 %v3540, 1e-05
      %v3573 = vadd.f32 %v3541, 1e-05
      %v3574 = vadd.f32 %v3542, 1e-05
      %v3575 = vadd.f32 %v3543, 1e-05
      %v3576 = vadd.f32 %v3544, 1e-05
      %v3577 = vadd.f32 %v3545, 1e-05
      %v3578 = vadd.f32 %v3546, 1e-05
      %v3579 = vadd.f32 %v3547, 1e-05
      %v3580 = vadd.f32 %v3548, 1e-05
      %v3581 = vadd.f32 %v3549, 1e-05
      %v3582 = vadd.f32 %v3550, 1e-05
      %v3583 = vadd.f32 %v3551, 1e-05
      %v3584 = vadd.f32 %v3552, 1e-05
      %v3585 = vadd.f32 %v3553, 1e-05
      %v3586 = vadd.f32 %v3554, 1e-05
      %v3587 = vadd.f32 %v3555, 1e-05
      %v3588 = vadd.f32 %v3556, 1e-05
      %v3589 = vadd.f32 %v3557, 1e-05
      %v3590 = vadd.f32 %v3558, 1e-05
      %v3591 = vadd.f32 %v3559, 1e-05
      %v3592 = vadd.f32 %v3560, 1e-05
      %v3593 = vadd.f32 %v3561, 1e-05
      %v3594 = vadd.f32 %v3562, 1e-05
      %v3595 = vadd.f32 %v3563, 1e-05
      %v3596 = vadd.f32 %v3564, 1e-05
      %v3597 = vadd.f32 %v3565, 1e-05
      %v3598 = vadd.f32 %v3566, 1e-05
      %v3599 = vadd.f32 %v3567, 1e-05
      %v3600 = vadd.f32 %v3568, 1e-05
      %v3601 = vadd.f32 %v3569, 1e-05
      %v3602 = vadd.f32 %v3570, 1e-05
      %v3603 = vadd.f32 %v3571, 1e-05
      %v3604 = vrsqrt.pop %v3572
      %v3605 = vrsqrt.pop %v3573
      %v3606 = vrsqrt.pop %v3574
      %v3607 = vrsqrt.pop %v3575
      %v3608 = vrsqrt.pop %v3576
      %v3609 = vrsqrt.pop %v3577
      %v3610 = vrsqrt.pop %v3578
      %v3611 = vrsqrt.pop %v3579
      %v3612 = vrsqrt.pop %v3580
      %v3613 = vrsqrt.pop %v3581
      %v3614 = vrsqrt.pop %v3582
      %v3615 = vrsqrt.pop %v3583
      %v3616 = vrsqrt.pop %v3584
      %v3617 = vrsqrt.pop %v3585
      %v3618 = vrsqrt.pop %v3586
      %v3619 = vrsqrt.pop %v3587
      %v3620 = vrsqrt.pop %v3588
      %v3621 = vrsqrt.pop %v3589
      %v3622 = vrsqrt.pop %v3590
      %v3623 = vrsqrt.pop %v3591
      %v3624 = vrsqrt.pop %v3592
      %v3625 = vrsqrt.pop %v3593
      %v3626 = vrsqrt.pop %v3594
      %v3627 = vrsqrt.pop %v3595
      %v3628 = vrsqrt.pop %v3596
      %v3629 = vrsqrt.pop %v3597
      %v3630 = vrsqrt.pop %v3598
      %v3631 = vrsqrt.pop %v3599
      %v3632 = vrsqrt.pop %v3600
      %v3633 = vrsqrt.pop %v3601
      %v3634 = vrsqrt.pop %v3602
      %v3635 = vrsqrt.pop %v3603
      %v3636 = vmul.f32 %v3380, %v3604
      %v3637 = vmul.f32 %v3381, %v3605
      %v3638 = vmul.f32 %v3382, %v3606
      %v3639 = vmul.f32 %v3383, %v3607
      %v3640 = vmul.f32 %v3384, %v3608
      %v3641 = vmul.f32 %v3385, %v3609
      %v3642 = vmul.f32 %v3386, %v3610
      %v3643 = vmul.f32 %v3387, %v3611
      %v3644 = vmul.f32 %v3388, %v3612
      %v3645 = vmul.f32 %v3389, %v3613
      %v3646 = vmul.f32 %v3390, %v3614
      %v3647 = vmul.f32 %v3391, %v3615
      %v3648 = vmul.f32 %v3392, %v3616
      %v3649 = vmul.f32 %v3393, %v3617
      %v3650 = vmul.f32 %v3394, %v3618
      %v3651 = vmul.f32 %v3395, %v3619
      %v3652 = vmul.f32 %v3396, %v3620
      %v3653 = vmul.f32 %v3397, %v3621
      %v3654 = vmul.f32 %v3398, %v3622
      %v3655 = vmul.f32 %v3399, %v3623
      %v3656 = vmul.f32 %v3400, %v3624
      %v3657 = vmul.f32 %v3401, %v3625
      %v3658 = vmul.f32 %v3402, %v3626
      %v3659 = vmul.f32 %v3403, %v3627
      %v3660 = vmul.f32 %v3404, %v3628
      %v3661 = vmul.f32 %v3405, %v3629
      %v3662 = vmul.f32 %v3406, %v3630
      %v3663 = vmul.f32 %v3407, %v3631
      %v3664 = vmul.f32 %v3408, %v3632
      %v3665 = vmul.f32 %v3409, %v3633
      %v3666 = vmul.f32 %v3410, %v3634
      %v3667 = vmul.f32 %v3411, %v3635
      %v3668 = vld [vmem:[%s8 + $0x5] sm:$0x1]
      %v3669 = vlaneseq
      %v3670 = vshrl.u32 %v3669, 7
      %v3671 = vsub.s32 0, %v3670
      %v3672 = vrot.slane %v3668, %v3671
      %v3673 = vmul.f32 %v3636, %v3672
      %v3674 = vmul.f32 %v3637, %v3672
      %v3675 = vmul.f32 %v3638, %v3672
      %v3676 = vmul.f32 %v3639, %v3672
      %v3677 = vmul.f32 %v3640, %v3672
      %v3678 = vmul.f32 %v3641, %v3672
      %v3679 = vmul.f32 %v3642, %v3672
      %v3680 = vmul.f32 %v3643, %v3672
      %v3681 = vmul.f32 %v3644, %v3672
      %v3682 = vmul.f32 %v3645, %v3672
      %v3683 = vmul.f32 %v3646, %v3672
      %v3684 = vmul.f32 %v3647, %v3672
      %v3685 = vmul.f32 %v3648, %v3672
      %v3686 = vmul.f32 %v3649, %v3672
      %v3687 = vmul.f32 %v3650, %v3672
      %v3688 = vmul.f32 %v3651, %v3672
      %v3689 = vmul.f32 %v3652, %v3672
      %v3690 = vmul.f32 %v3653, %v3672
      %v3691 = vmul.f32 %v3654, %v3672
      %v3692 = vmul.f32 %v3655, %v3672
      %v3693 = vmul.f32 %v3656, %v3672
      %v3694 = vmul.f32 %v3657, %v3672
      %v3695 = vmul.f32 %v3658, %v3672
      %v3696 = vmul.f32 %v3659, %v3672
      %v3697 = vmul.f32 %v3660, %v3672
      %v3698 = vmul.f32 %v3661, %v3672
      %v3699 = vmul.f32 %v3662, %v3672
      %v3700 = vmul.f32 %v3663, %v3672
      %v3701 = vmul.f32 %v3664, %v3672
      %v3702 = vmul.f32 %v3665, %v3672
      %v3703 = vmul.f32 %v3666, %v3672
      %v3704 = vmul.f32 %v3667, %v3672
      %v3705 = vld [vmem:[%s8 + $0x6] sm:$0x1]
      %v3706 = vlaneseq
      %v3707 = vshrl.u32 %v3706, 7
      %v3708 = vsub.s32 0, %v3707
      %v3709 = vrot.slane %v3705, %v3708
      %v3710 = vadd.f32 %v3673, %v3709
      %v3711 = vadd.f32 %v3674, %v3709
      %v3712 = vadd.f32 %v3675, %v3709
      %v3713 = vadd.f32 %v3676, %v3709
      %v3714 = vadd.f32 %v3677, %v3709
      %v3715 = vadd.f32 %v3678, %v3709
      %v3716 = vadd.f32 %v3679, %v3709
      %v3717 = vadd.f32 %v3680, %v3709
      %v3718 = vadd.f32 %v3681, %v3709
      %v3719 = vadd.f32 %v3682, %v3709
      %v3720 = vadd.f32 %v3683, %v3709
      %v3721 = vadd.f32 %v3684, %v3709
      %v3722 = vadd.f32 %v3685, %v3709
      %v3723 = vadd.f32 %v3686, %v3709
      %v3724 = vadd.f32 %v3687, %v3709
      %v3725 = vadd.f32 %v3688, %v3709
      %v3726 = vadd.f32 %v3689, %v3709
      %v3727 = vadd.f32 %v3690, %v3709
      %v3728 = vadd.f32 %v3691, %v3709
      %v3729 = vadd.f32 %v3692, %v3709
      %v3730 = vadd.f32 %v3693, %v3709
      %v3731 = vadd.f32 %v3694, %v3709
      %v3732 = vadd.f32 %v3695, %v3709
      %v3733 = vadd.f32 %v3696, %v3709
      %v3734 = vadd.f32 %v3697, %v3709
      %v3735 = vadd.f32 %v3698, %v3709
      %v3736 = vadd.f32 %v3699, %v3709
      %v3737 = vadd.f32 %v3700, %v3709
      %v3738 = vadd.f32 %v3701, %v3709
      %v3739 = vadd.f32 %v3702, %v3709
      %v3740 = vadd.f32 %v3703, %v3709
      %v3741 = vadd.f32 %v3704, %v3709
      %v3742 = vmul.f32 %v3710, 0.5
      %v3743 = vmul.f32 %v3711, 0.5
      %v3744 = vmul.f32 %v3712, 0.5
      %v3745 = vmul.f32 %v3713, 0.5
      %v3746 = vmul.f32 %v3714, 0.5
      %v3747 = vmul.f32 %v3715, 0.5
      %v3748 = vmul.f32 %v3716, 0.5
      %v3749 = vmul.f32 %v3717, 0.5
      %v3750 = vmul.f32 %v3718, 0.5
      %v3751 = vmul.f32 %v3719, 0.5
      %v3752 = vmul.f32 %v3720, 0.5
      %v3753 = vmul.f32 %v3721, 0.5
      %v3754 = vmul.f32 %v3722, 0.5
      %v3755 = vmul.f32 %v3723, 0.5
      %v3756 = vmul.f32 %v3724, 0.5
      %v3757 = vmul.f32 %v3725, 0.5
      %v3758 = vmul.f32 %v3726, 0.5
      %v3759 = vmul.f32 %v3727, 0.5
      %v3760 = vmul.f32 %v3728, 0.5
      %v3761 = vmul.f32 %v3729, 0.5
      %v3762 = vmul.f32 %v3730, 0.5
      %v3763 = vmul.f32 %v3731, 0.5
      %v3764 = vmul.f32 %v3732, 0.5
      %v3765 = vmul.f32 %v3733, 0.5
      %v3766 = vmul.f32 %v3734, 0.5
      %v3767 = vmul.f32 %v3735, 0.5
      %v3768 = vmul.f32 %v3736, 0.5
      %v3769 = vmul.f32 %v3737, 0.5
      %v3770 = vmul.f32 %v3738, 0.5
      %v3771 = vmul.f32 %v3739, 0.5
      %v3772 = vmul.f32 %v3740, 0.5
      %v3773 = vmul.f32 %v3741, 0.5
      %v3774 = vtanh.pop %v3742
      %v3775 = vtanh.pop %v3743
      %v3776 = vtanh.pop %v3744
      %v3777 = vtanh.pop %v3745
      %v3778 = vtanh.pop %v3746
      %v3779 = vtanh.pop %v3747
      %v3780 = vtanh.pop %v3748
      %v3781 = vtanh.pop %v3749
      %v3782 = vtanh.pop %v3750
      %v3783 = vtanh.pop %v3751
      %v3784 = vtanh.pop %v3752
      %v3785 = vtanh.pop %v3753
      %v3786 = vtanh.pop %v3754
      %v3787 = vtanh.pop %v3755
      %v3788 = vtanh.pop %v3756
      %v3789 = vtanh.pop %v3757
      %v3790 = vtanh.pop %v3758
      %v3791 = vtanh.pop %v3759
      %v3792 = vtanh.pop %v3760
      %v3793 = vtanh.pop %v3761
      %v3794 = vtanh.pop %v3762
      %v3795 = vtanh.pop %v3763
      %v3796 = vtanh.pop %v3764
      %v3797 = vtanh.pop %v3765
      %v3798 = vtanh.pop %v3766
      %v3799 = vtanh.pop %v3767
      %v3800 = vtanh.pop %v3768
      %v3801 = vtanh.pop %v3769
      %v3802 = vtanh.pop %v3770
      %v3803 = vtanh.pop %v3771
      %v3804 = vtanh.pop %v3772
      %v3805 = vtanh.pop %v3773
      %v3806 = vmul.f32 %v3774, 0.5
      %v3807 = vmul.f32 %v3775, 0.5
      %v3808 = vmul.f32 %v3776, 0.5
      %v3809 = vmul.f32 %v3777, 0.5
      %v3810 = vmul.f32 %v3778, 0.5
      %v3811 = vmul.f32 %v3779, 0.5
      %v3812 = vmul.f32 %v3780, 0.5
      %v3813 = vmul.f32 %v3781, 0.5
      %v3814 = vmul.f32 %v3782, 0.5
      %v3815 = vmul.f32 %v3783, 0.5
      %v3816 = vmul.f32 %v3784, 0.5
      %v3817 = vmul.f32 %v3785, 0.5
      %v3818 = vmul.f32 %v3786, 0.5
      %v3819 = vmul.f32 %v3787, 0.5
      %v3820 = vmul.f32 %v3788, 0.5
      %v3821 = vmul.f32 %v3789, 0.5
      %v3822 = vmul.f32 %v3790, 0.5
      %v3823 = vmul.f32 %v3791, 0.5
      %v3824 = vmul.f32 %v3792, 0.5
      %v3825 = vmul.f32 %v3793, 0.5
      %v3826 = vmul.f32 %v3794, 0.5
      %v3827 = vmul.f32 %v3795, 0.5
      %v3828 = vmul.f32 %v3796, 0.5
      %v3829 = vmul.f32 %v3797, 0.5
      %v3830 = vmul.f32 %v3798, 0.5
      %v3831 = vmul.f32 %v3799, 0.5
      %v3832 = vmul.f32 %v3800, 0.5
      %v3833 = vmul.f32 %v3801, 0.5
      %v3834 = vmul.f32 %v3802, 0.5
      %v3835 = vmul.f32 %v3803, 0.5
      %v3836 = vmul.f32 %v3804, 0.5
      %v3837 = vmul.f32 %v3805, 0.5
      %v3838 = vadd.f32 %v3806, 0.5
      %v3839 = vadd.f32 %v3807, 0.5
      %v3840 = vadd.f32 %v3808, 0.5
      %v3841 = vadd.f32 %v3809, 0.5
      %v3842 = vadd.f32 %v3810, 0.5
      %v3843 = vadd.f32 %v3811, 0.5
      %v3844 = vadd.f32 %v3812, 0.5
      %v3845 = vadd.f32 %v3813, 0.5
      %v3846 = vadd.f32 %v3814, 0.5
      %v3847 = vadd.f32 %v3815, 0.5
      %v3848 = vadd.f32 %v3816, 0.5
      %v3849 = vadd.f32 %v3817, 0.5
      %v3850 = vadd.f32 %v3818, 0.5
      %v3851 = vadd.f32 %v3819, 0.5
      %v3852 = vadd.f32 %v3820, 0.5
      %v3853 = vadd.f32 %v3821, 0.5
      %v3854 = vadd.f32 %v3822, 0.5
      %v3855 = vadd.f32 %v3823, 0.5
      %v3856 = vadd.f32 %v3824, 0.5
      %v3857 = vadd.f32 %v3825, 0.5
      %v3858 = vadd.f32 %v3826, 0.5
      %v3859 = vadd.f32 %v3827, 0.5
      %v3860 = vadd.f32 %v3828, 0.5
      %v3861 = vadd.f32 %v3829, 0.5
      %v3862 = vadd.f32 %v3830, 0.5
      %v3863 = vadd.f32 %v3831, 0.5
      %v3864 = vadd.f32 %v3832, 0.5
      %v3865 = vadd.f32 %v3833, 0.5
      %v3866 = vadd.f32 %v3834, 0.5
      %v3867 = vadd.f32 %v3835, 0.5
      %v3868 = vadd.f32 %v3836, 0.5
      %v3869 = vadd.f32 %v3837, 0.5
      %v3870 = vmul.f32 %v3710, %v3838
      %v3871 = vmul.f32 %v3711, %v3839
      %v3872 = vmul.f32 %v3712, %v3840
      %v3873 = vmul.f32 %v3713, %v3841
      %v3874 = vmul.f32 %v3714, %v3842
      %v3875 = vmul.f32 %v3715, %v3843
      %v3876 = vmul.f32 %v3716, %v3844
      %v3877 = vmul.f32 %v3717, %v3845
      %v3878 = vmul.f32 %v3718, %v3846
      %v3879 = vmul.f32 %v3719, %v3847
      %v3880 = vmul.f32 %v3720, %v3848
      %v3881 = vmul.f32 %v3721, %v3849
      %v3882 = vmul.f32 %v3722, %v3850
      %v3883 = vmul.f32 %v3723, %v3851
      %v3884 = vmul.f32 %v3724, %v3852
      %v3885 = vmul.f32 %v3725, %v3853
      %v3886 = vmul.f32 %v3726, %v3854
      %v3887 = vmul.f32 %v3727, %v3855
      %v3888 = vmul.f32 %v3728, %v3856
      %v3889 = vmul.f32 %v3729, %v3857
      %v3890 = vmul.f32 %v3730, %v3858
      %v3891 = vmul.f32 %v3731, %v3859
      %v3892 = vmul.f32 %v3732, %v3860
      %v3893 = vmul.f32 %v3733, %v3861
      %v3894 = vmul.f32 %v3734, %v3862
      %v3895 = vmul.f32 %v3735, %v3863
      %v3896 = vmul.f32 %v3736, %v3864
      %v3897 = vmul.f32 %v3737, %v3865
      %v3898 = vmul.f32 %v3738, %v3866
      %v3899 = vmul.f32 %v3739, %v3867
      %v3900 = vmul.f32 %v3740, %v3868
      %v3901 = vmul.f32 %v3741, %v3869
      %v3902 = vld [vmem:[%s5] sm:$0xff]
      %v3903 = vld [vmem:[%s8 + $0x7] sm:$0x1]
      %v3904 = vlaneseq
      %v3905 = vshrl.u32 %v3904, 7
      %v3906 = vsub.s32 0, %v3905
      %v3907 = vrot.slane %v3903, %v3906
      %v3909 = vsel %vm1528, %v3870, 0
      %v3912 = vsel %vm1528, %v3871, 0
      %v3915 = vsel %vm1528, %v3872, 0
      %v3918 = vsel %vm1528, %v3873, 0
      %v3921 = vsel %vm1528, %v3874, 0
      %v3924 = vsel %vm1528, %v3875, 0
      %v3927 = vsel %vm1528, %v3876, 0
      %v3930 = vsel %vm1528, %v3877, 0
      %v3933 = vsel %vm1528, %v3878, 0
      %v3936 = vsel %vm1528, %v3879, 0
      %v3939 = vsel %vm1528, %v3880, 0
      %v3942 = vsel %vm1528, %v3881, 0
      %v3945 = vsel %vm1528, %v3882, 0
      %v3948 = vsel %vm1528, %v3883, 0
      %v3951 = vsel %vm1528, %v3884, 0
      %v3954 = vsel %vm1528, %v3885, 0
      %v3957 = vsel %vm1528, %v3886, 0
      %v3960 = vsel %vm1528, %v3887, 0
      %v3963 = vsel %vm1528, %v3888, 0
      %v3966 = vsel %vm1528, %v3889, 0
      %v3969 = vsel %vm1528, %v3890, 0
      %v3972 = vsel %vm1528, %v3891, 0
      %v3975 = vsel %vm1528, %v3892, 0
      %v3978 = vsel %vm1528, %v3893, 0
      %v3981 = vsel %vm1528, %v3894, 0
      %v3984 = vsel %vm1528, %v3895, 0
      %v3987 = vsel %vm1528, %v3896, 0
      %v3990 = vsel %vm1528, %v3897, 0
      %v3993 = vsel %vm1528, %v3898, 0
      %v3996 = vsel %vm1528, %v3899, 0
      %v3999 = vsel %vm1528, %v3900, 0
      %v4002 = vsel %vm1528, %v3901, 0
      %4004 = vmatprep.subr.mxu0 0.0
      %4005 = vmatpush1.msra.mxu0 0.0
      %4006 = vmatprep.subr.mxu0 0.0
      %4007 = vmatpush1.msra.mxu0 0.0
      %4008 = vmatprep.subr.mxu0 0.0
      %4009 = vmatpush1.msra.mxu0 0.0
      %4010 = vmatprep.subr.mxu0 0.0
      %4011 = vmatpush1.msra.mxu0 0.0
      %4012 = vmatprep.subr.mxu0 0.0
      %4013 = vmatpush1.msra.mxu0 0.0
      %4014 = vmatprep.subr.mxu0 0.0
      %4015 = vmatpush1.msra.mxu0 0.0
      %4016 = vmatprep.subr.mxu0 0.0
      %4017 = vmatpush1.msra.mxu0 0.0
      %4018 = vmatprep.subr.mxu0 0.0
      %4019 = vmatpush1.msra.mxu0 0.0
      %4020 = vmatprep.subr.mxu0 0.0
      %4021 = vmatpush1.msra.mxu0 0.0
      %4022 = vmatprep.subr.mxu0 0.0
      %4023 = vmatpush1.msra.mxu0 0.0
      %4024 = vmatprep.subr.mxu0 0.0
      %4025 = vmatpush1.msra.mxu0 0.0
      %4026 = vmatprep.subr.mxu0 0.0
      %4027 = vmatpush1.msra.mxu0 0.0
      %4028 = vmatprep.subr.mxu0 0.0
      %4029 = vmatpush1.msra.mxu0 0.0
      %4030 = vmatprep.subr.mxu0 0.0
      %4031 = vmatpush1.msra.mxu0 0.0
      %4032 = vmatprep.subr.mxu0 0.0
      %4033 = vmatpush1.msra.mxu0 0.0
      %4034 = vmatprep.subr.mxu0 0.0
      %4035 = vmatpush1.msra.mxu0 %v3902
      %4036 = vmatprep.subr.mxu0 0.0
      %4037 = vmatpush2.msra.mxu0 0.0
      %4038 = vmatprep.subr.mxu0 0.0
      %4039 = vmatpush2.msra.mxu0 0.0
      %4040 = vmatprep.subr.mxu0 0.0
      %4041 = vmatpush2.msra.mxu0 0.0
      %4042 = vmatprep.subr.mxu0 0.0
      %4043 = vmatpush2.msra.mxu0 0.0
      %4044 = vmatprep.subr.mxu0 0.0
      %4045 = vmatpush2.msra.mxu0 0.0
      %4046 = vmatprep.subr.mxu0 0.0
      %4047 = vmatpush2.msra.mxu0 0.0
      %4048 = vmatprep.subr.mxu0 0.0
      %4049 = vmatpush2.msra.mxu0 0.0
      %4050 = vmatprep.subr.mxu0 0.0
      %4051 = vmatpush2.msra.mxu0 0.0
      %4052 = vmatprep.subr.mxu0 0.0
      %4053 = vmatpush2.msra.mxu0 0.0
      %4054 = vmatprep.subr.mxu0 0.0
      %4055 = vmatpush2.msra.mxu0 0.0
      %4056 = vmatprep.subr.mxu0 0.0
      %4057 = vmatpush2.msra.mxu0 0.0
      %4058 = vmatprep.subr.mxu0 0.0
      %4059 = vmatpush2.msra.mxu0 0.0
      %4060 = vmatprep.subr.mxu0 0.0
      %4061 = vmatpush2.msra.mxu0 0.0
      %4062 = vmatprep.subr.mxu0 0.0
      %4063 = vmatpush2.msra.mxu0 0.0
      %4064 = vmatprep.subr.mxu0 0.0
      %4065 = vmatpush2.msra.mxu0 0.0
      %4066 = vmatprep.subr.mxu0 0.0
      %4067 = vmatpush2.msra.mxu0 0.0
      %4068 = vmatprep.mubr.f32.mxu0 0.0
      %4069 = vmatmul.mubr.f32.gmra.mxu0 %v3909
      %v4070 = vpop.f32.mrf.mxu0
      %v4071 = vadd.f32 %v3907, %v4070
      %v4072 = vpop.f32.mrf.mxu0
      %4073 = vmatprep.mubr.f32.mxu0 0.0
      %4074 = vmatmul.mubr.f32.gmra.mxu0 %v3912
      %v4075 = vpop.f32.mrf.mxu0
      %v4076 = vadd.f32 %v3907, %v4075
      %v4077 = vpop.f32.mrf.mxu0
      %4078 = vmatprep.mubr.f32.mxu0 0.0
      %4079 = vmatmul.mubr.f32.gmra.mxu0 %v3915
      %v4080 = vpop.f32.mrf.mxu0
      %v4081 = vadd.f32 %v3907, %v4080
      %v4082 = vpop.f32.mrf.mxu0
      %4083 = vmatprep.mubr.f32.mxu0 0.0
      %4084 = vmatmul.mubr.f32.gmra.mxu0 %v3918
      %v4085 = vpop.f32.mrf.mxu0
      %v4086 = vadd.f32 %v3907, %v4085
      %v4087 = vpop.f32.mrf.mxu0
      %4088 = vmatprep.mubr.f32.mxu0 0.0
      %4089 = vmatmul.mubr.f32.gmra.mxu0 %v3921
      %v4090 = vpop.f32.mrf.mxu0
      %v4091 = vadd.f32 %v3907, %v4090
      %v4092 = vpop.f32.mrf.mxu0
      %4093 = vmatprep.mubr.f32.mxu0 0.0
      %4094 = vmatmul.mubr.f32.gmra.mxu0 %v3924
      %v4095 = vpop.f32.mrf.mxu0
      %v4096 = vadd.f32 %v3907, %v4095
      %v4097 = vpop.f32.mrf.mxu0
      %4098 = vmatprep.mubr.f32.mxu0 0.0
      %4099 = vmatmul.mubr.f32.gmra.mxu0 %v3927
      %v4100 = vpop.f32.mrf.mxu0
      %v4101 = vadd.f32 %v3907, %v4100
      %v4102 = vpop.f32.mrf.mxu0
      %4103 = vmatprep.mubr.f32.mxu0 0.0
      %4104 = vmatmul.mubr.f32.gmra.mxu0 %v3930
      %v4105 = vpop.f32.mrf.mxu0
      %v4106 = vadd.f32 %v3907, %v4105
      %v4107 = vpop.f32.mrf.mxu0
      %4108 = vmatprep.mubr.f32.mxu0 0.0
      %4109 = vmatmul.mubr.f32.gmra.mxu0 %v3933
      %v4110 = vpop.f32.mrf.mxu0
      %v4111 = vadd.f32 %v3907, %v4110
      %v4112 = vpop.f32.mrf.mxu0
      %4113 = vmatprep.mubr.f32.mxu0 0.0
      %4114 = vmatmul.mubr.f32.gmra.mxu0 %v3936
      %v4115 = vpop.f32.mrf.mxu0
      %v4116 = vadd.f32 %v3907, %v4115
      %v4117 = vpop.f32.mrf.mxu0
      %4118 = vmatprep.mubr.f32.mxu0 0.0
      %4119 = vmatmul.mubr.f32.gmra.mxu0 %v3939
      %v4120 = vpop.f32.mrf.mxu0
      %v4121 = vadd.f32 %v3907, %v4120
      %v4122 = vpop.f32.mrf.mxu0
      %4123 = vmatprep.mubr.f32.mxu0 0.0
      %4124 = vmatmul.mubr.f32.gmra.mxu0 %v3942
      %v4125 = vpop.f32.mrf.mxu0
      %v4126 = vadd.f32 %v3907, %v4125
      %v4127 = vpop.f32.mrf.mxu0
      %4128 = vmatprep.mubr.f32.mxu0 0.0
      %4129 = vmatmul.mubr.f32.gmra.mxu0 %v3945
      %v4130 = vpop.f32.mrf.mxu0
      %v4131 = vadd.f32 %v3907, %v4130
      %v4132 = vpop.f32.mrf.mxu0
      %4133 = vmatprep.mubr.f32.mxu0 0.0
      %4134 = vmatmul.mubr.f32.gmra.mxu0 %v3948
      %v4135 = vpop.f32.mrf.mxu0
      %v4136 = vadd.f32 %v3907, %v4135
      %v4137 = vpop.f32.mrf.mxu0
      %4138 = vmatprep.mubr.f32.mxu0 0.0
      %4139 = vmatmul.mubr.f32.gmra.mxu0 %v3951
      %v4140 = vpop.f32.mrf.mxu0
      %v4141 = vadd.f32 %v3907, %v4140
      %v4142 = vpop.f32.mrf.mxu0
      %4143 = vmatprep.mubr.f32.mxu0 0.0
      %4144 = vmatmul.mubr.f32.gmra.mxu0 %v3954
      %v4145 = vpop.f32.mrf.mxu0
      %v4146 = vadd.f32 %v3907, %v4145
      %v4147 = vpop.f32.mrf.mxu0
      %4148 = vmatprep.mubr.f32.mxu0 0.0
      %4149 = vmatmul.mubr.f32.gmra.mxu0 %v3957
      %v4150 = vpop.f32.mrf.mxu0
      %v4151 = vadd.f32 %v3907, %v4150
      %v4152 = vpop.f32.mrf.mxu0
      %4153 = vmatprep.mubr.f32.mxu0 0.0
      %4154 = vmatmul.mubr.f32.gmra.mxu0 %v3960
      %v4155 = vpop.f32.mrf.mxu0
      %v4156 = vadd.f32 %v3907, %v4155
      %v4157 = vpop.f32.mrf.mxu0
      %4158 = vmatprep.mubr.f32.mxu0 0.0
      %4159 = vmatmul.mubr.f32.gmra.mxu0 %v3963
      %v4160 = vpop.f32.mrf.mxu0
      %v4161 = vadd.f32 %v3907, %v4160
      %v4162 = vpop.f32.mrf.mxu0
      %4163 = vmatprep.mubr.f32.mxu0 0.0
      %4164 = vmatmul.mubr.f32.gmra.mxu0 %v3966
      %v4165 = vpop.f32.mrf.mxu0
      %v4166 = vadd.f32 %v3907, %v4165
      %v4167 = vpop.f32.mrf.mxu0
      %4168 = vmatprep.mubr.f32.mxu0 0.0
      %4169 = vmatmul.mubr.f32.gmra.mxu0 %v3969
      %v4170 = vpop.f32.mrf.mxu0
      %v4171 = vadd.f32 %v3907, %v4170
      %v4172 = vpop.f32.mrf.mxu0
      %4173 = vmatprep.mubr.f32.mxu0 0.0
      %4174 = vmatmul.mubr.f32.gmra.mxu0 %v3972
      %v4175 = vpop.f32.mrf.mxu0
      %v4176 = vadd.f32 %v3907, %v4175
      %v4177 = vpop.f32.mrf.mxu0
      %4178 = vmatprep.mubr.f32.mxu0 0.0
      %4179 = vmatmul.mubr.f32.gmra.mxu0 %v3975
      %v4180 = vpop.f32.mrf.mxu0
      %v4181 = vadd.f32 %v3907, %v4180
      %v4182 = vpop.f32.mrf.mxu0
      %4183 = vmatprep.mubr.f32.mxu0 0.0
      %4184 = vmatmul.mubr.f32.gmra.mxu0 %v3978
      %v4185 = vpop.f32.mrf.mxu0
      %v4186 = vadd.f32 %v3907, %v4185
      %v4187 = vpop.f32.mrf.mxu0
      %4188 = vmatprep.mubr.f32.mxu0 0.0
      %4189 = vmatmul.mubr.f32.gmra.mxu0 %v3981
      %v4190 = vpop.f32.mrf.mxu0
      %v4191 = vadd.f32 %v3907, %v4190
      %v4192 = vpop.f32.mrf.mxu0
      %4193 = vmatprep.mubr.f32.mxu0 0.0
      %4194 = vmatmul.mubr.f32.gmra.mxu0 %v3984
      %v4195 = vpop.f32.mrf.mxu0
      %v4196 = vadd.f32 %v3907, %v4195
      %v4197 = vpop.f32.mrf.mxu0
      %4198 = vmatprep.mubr.f32.mxu0 0.0
      %4199 = vmatmul.mubr.f32.gmra.mxu0 %v3987
      %v4200 = vpop.f32.mrf.mxu0
      %v4201 = vadd.f32 %v3907, %v4200
      %v4202 = vpop.f32.mrf.mxu0
      %4203 = vmatprep.mubr.f32.mxu0 0.0
      %4204 = vmatmul.mubr.f32.gmra.mxu0 %v3990
      %v4205 = vpop.f32.mrf.mxu0
      %v4206 = vadd.f32 %v3907, %v4205
      %v4207 = vpop.f32.mrf.mxu0
      %4208 = vmatprep.mubr.f32.mxu0 0.0
      %4209 = vmatmul.mubr.f32.gmra.mxu0 %v3993
      %v4210 = vpop.f32.mrf.mxu0
      %v4211 = vadd.f32 %v3907, %v4210
      %v4212 = vpop.f32.mrf.mxu0
      %4213 = vmatprep.mubr.f32.mxu0 0.0
      %4214 = vmatmul.mubr.f32.gmra.mxu0 %v3996
      %v4215 = vpop.f32.mrf.mxu0
      %v4216 = vadd.f32 %v3907, %v4215
      %v4217 = vpop.f32.mrf.mxu0
      %4218 = vmatprep.mubr.f32.mxu0 0.0
      %4219 = vmatmul.mubr.f32.gmra.mxu0 %v3999
      %v4220 = vpop.f32.mrf.mxu0
      %v4221 = vadd.f32 %v3907, %v4220
      %v4222 = vpop.f32.mrf.mxu0
      %4223 = vmatprep.mubr.f32.mxu0 0.0
      %4224 = vmatmul.mubr.f32.gmra.mxu0 %v4002
      %v4225 = vpop.f32.mrf.mxu0
      %v4226 = vadd.f32 %v3907, %v4225
      %v4227 = vpop.f32.mrf.mxu0
      %4228 = vdwg.mxu0
      %v4229 = vadd.f32 %v4071, %v2348
      %v4230 = vadd.f32 %v4076, %v2353
      %v4231 = vadd.f32 %v4081, %v2358
      %v4232 = vadd.f32 %v4086, %v2363
      %v4233 = vadd.f32 %v4091, %v2368
      %v4234 = vadd.f32 %v4096, %v2373
      %v4235 = vadd.f32 %v4101, %v2378
      %v4236 = vadd.f32 %v4106, %v2383
      %v4237 = vadd.f32 %v4111, %v2388
      %v4238 = vadd.f32 %v4116, %v2393
      %v4239 = vadd.f32 %v4121, %v2398
      %v4240 = vadd.f32 %v4126, %v2403
      %v4241 = vadd.f32 %v4131, %v2408
      %v4242 = vadd.f32 %v4136, %v2413
      %v4243 = vadd.f32 %v4141, %v2418
      %v4244 = vadd.f32 %v4146, %v2423
      %v4245 = vadd.f32 %v4151, %v2428
      %v4246 = vadd.f32 %v4156, %v2433
      %v4247 = vadd.f32 %v4161, %v2438
      %v4248 = vadd.f32 %v4166, %v2443
      %v4249 = vadd.f32 %v4171, %v2448
      %v4250 = vadd.f32 %v4176, %v2453
      %v4251 = vadd.f32 %v4181, %v2458
      %v4252 = vadd.f32 %v4186, %v2463
      %v4253 = vadd.f32 %v4191, %v2468
      %v4254 = vadd.f32 %v4196, %v2473
      %v4255 = vadd.f32 %v4201, %v2478
      %v4256 = vadd.f32 %v4206, %v2483
      %v4257 = vadd.f32 %v4211, %v2488
      %v4258 = vadd.f32 %v4216, %v2493
      %v4259 = vadd.f32 %v4221, %v2498
      %v4260 = vadd.f32 %v4226, %v2503
      %v4261 = vsel %vm1528, %v4229, 0.0
      %4262 = vadd.xlane.f32.xlu0 %v4261
      %v4263 = vpop.xlane.xlu0 %4262
      %v4264 = vsel %vm1528, %v4230, 0.0
      %4265 = vadd.xlane.f32.xlu0 %v4264
      %v4266 = vpop.xlane.xlu0 %4265
      %v4267 = vsel %vm1528, %v4231, 0.0
      %4268 = vadd.xlane.f32.xlu0 %v4267
      %v4269 = vpop.xlane.xlu0 %4268
      %v4270 = vsel %vm1528, %v4232, 0.0
      %4271 = vadd.xlane.f32.xlu0 %v4270
      %v4272 = vpop.xlane.xlu0 %4271
      %v4273 = vsel %vm1528, %v4233, 0.0
      %4274 = vadd.xlane.f32.xlu0 %v4273
      %v4275 = vpop.xlane.xlu0 %4274
      %v4276 = vsel %vm1528, %v4234, 0.0
      %4277 = vadd.xlane.f32.xlu0 %v4276
      %v4278 = vpop.xlane.xlu0 %4277
      %v4279 = vsel %vm1528, %v4235, 0.0
      %4280 = vadd.xlane.f32.xlu0 %v4279
      %v4281 = vpop.xlane.xlu0 %4280
      %v4282 = vsel %vm1528, %v4236, 0.0
      %4283 = vadd.xlane.f32.xlu0 %v4282
      %v4284 = vpop.xlane.xlu0 %4283
      %v4285 = vsel %vm1528, %v4237, 0.0
      %4286 = vadd.xlane.f32.xlu0 %v4285
      %v4287 = vpop.xlane.xlu0 %4286
      %v4288 = vsel %vm1528, %v4238, 0.0
      %4289 = vadd.xlane.f32.xlu0 %v4288
      %v4290 = vpop.xlane.xlu0 %4289
      %v4291 = vsel %vm1528, %v4239, 0.0
      %4292 = vadd.xlane.f32.xlu0 %v4291
      %v4293 = vpop.xlane.xlu0 %4292
      %v4294 = vsel %vm1528, %v4240, 0.0
      %4295 = vadd.xlane.f32.xlu0 %v4294
      %v4296 = vpop.xlane.xlu0 %4295
      %v4297 = vsel %vm1528, %v4241, 0.0
      %4298 = vadd.xlane.f32.xlu0 %v4297
      %v4299 = vpop.xlane.xlu0 %4298
      %v4300 = vsel %vm1528, %v4242, 0.0
      %4301 = vadd.xlane.f32.xlu0 %v4300
      %v4302 = vpop.xlane.xlu0 %4301
      %v4303 = vsel %vm1528, %v4243, 0.0
      %4304 = vadd.xlane.f32.xlu0 %v4303
      %v4305 = vpop.xlane.xlu0 %4304
      %v4306 = vsel %vm1528, %v4244, 0.0
      %4307 = vadd.xlane.f32.xlu0 %v4306
      %v4308 = vpop.xlane.xlu0 %4307
      %v4309 = vsel %vm1528, %v4245, 0.0
      %4310 = vadd.xlane.f32.xlu0 %v4309
      %v4311 = vpop.xlane.xlu0 %4310
      %v4312 = vsel %vm1528, %v4246, 0.0
      %4313 = vadd.xlane.f32.xlu0 %v4312
      %v4314 = vpop.xlane.xlu0 %4313
      %v4315 = vsel %vm1528, %v4247, 0.0
      %4316 = vadd.xlane.f32.xlu0 %v4315
      %v4317 = vpop.xlane.xlu0 %4316
      %v4318 = vsel %vm1528, %v4248, 0.0
      %4319 = vadd.xlane.f32.xlu0 %v4318
      %v4320 = vpop.xlane.xlu0 %4319
      %v4321 = vsel %vm1528, %v4249, 0.0
      %4322 = vadd.xlane.f32.xlu0 %v4321
      %v4323 = vpop.xlane.xlu0 %4322
      %v4324 = vsel %vm1528, %v4250, 0.0
      %4325 = vadd.xlane.f32.xlu0 %v4324
      %v4326 = vpop.xlane.xlu0 %4325
      %v4327 = vsel %vm1528, %v4251, 0.0
      %4328 = vadd.xlane.f32.xlu0 %v4327
      %v4329 = vpop.xlane.xlu0 %4328
      %v4330 = vsel %vm1528, %v4252, 0.0
      %4331 = vadd.xlane.f32.xlu0 %v4330
      %v4332 = vpop.xlane.xlu0 %4331
      %v4333 = vsel %vm1528, %v4253, 0.0
      %4334 = vadd.xlane.f32.xlu0 %v4333
      %v4335 = vpop.xlane.xlu0 %4334
      %v4336 = vsel %vm1528, %v4254, 0.0
      %4337 = vadd.xlane.f32.xlu0 %v4336
      %v4338 = vpop.xlane.xlu0 %4337
      %v4339 = vsel %vm1528, %v4255, 0.0
      %4340 = vadd.xlane.f32.xlu0 %v4339
      %v4341 = vpop.xlane.xlu0 %4340
      %v4342 = vsel %vm1528, %v4256, 0.0
      %4343 = vadd.xlane.f32.xlu0 %v4342
      %v4344 = vpop.xlane.xlu0 %4343
      %v4345 = vsel %vm1528, %v4257, 0.0
      %4346 = vadd.xlane.f32.xlu0 %v4345
      %v4347 = vpop.xlane.xlu0 %4346
      %v4348 = vsel %vm1528, %v4258, 0.0
      %4349 = vadd.xlane.f32.xlu0 %v4348
      %v4350 = vpop.xlane.xlu0 %4349
      %v4351 = vsel %vm1528, %v4259, 0.0
      %4352 = vadd.xlane.f32.xlu0 %v4351
      %v4353 = vpop.xlane.xlu0 %4352
      %v4354 = vsel %vm1528, %v4260, 0.0
      %4355 = vadd.xlane.f32.xlu0 %v4354
      %v4356 = vpop.xlane.xlu0 %4355
      %v4357 = vmul.f32 %v4263, 0.125
      %v4358 = vmul.f32 %v4266, 0.125
      %v4359 = vmul.f32 %v4269, 0.125
      %v4360 = vmul.f32 %v4272, 0.125
      %v4361 = vmul.f32 %v4275, 0.125
      %v4362 = vmul.f32 %v4278, 0.125
      %v4363 = vmul.f32 %v4281, 0.125
      %v4364 = vmul.f32 %v4284, 0.125
      %v4365 = vmul.f32 %v4287, 0.125
      %v4366 = vmul.f32 %v4290, 0.125
      %v4367 = vmul.f32 %v4293, 0.125
      %v4368 = vmul.f32 %v4296, 0.125
      %v4369 = vmul.f32 %v4299, 0.125
      %v4370 = vmul.f32 %v4302, 0.125
      %v4371 = vmul.f32 %v4305, 0.125
      %v4372 = vmul.f32 %v4308, 0.125
      %v4373 = vmul.f32 %v4311, 0.125
      %v4374 = vmul.f32 %v4314, 0.125
      %v4375 = vmul.f32 %v4317, 0.125
      %v4376 = vmul.f32 %v4320, 0.125
      %v4377 = vmul.f32 %v4323, 0.125
      %v4378 = vmul.f32 %v4326, 0.125
      %v4379 = vmul.f32 %v4329, 0.125
      %v4380 = vmul.f32 %v4332, 0.125
      %v4381 = vmul.f32 %v4335, 0.125
      %v4382 = vmul.f32 %v4338, 0.125
      %v4383 = vmul.f32 %v4341, 0.125
      %v4384 = vmul.f32 %v4344, 0.125
      %v4385 = vmul.f32 %v4347, 0.125
      %v4386 = vmul.f32 %v4350, 0.125
      %v4387 = vmul.f32 %v4353, 0.125
      %v4388 = vmul.f32 %v4356, 0.125
      %v4389 = vsub.f32 %v4229, %v4357
      %v4390 = vsub.f32 %v4230, %v4358
      %v4391 = vsub.f32 %v4231, %v4359
      %v4392 = vsub.f32 %v4232, %v4360
      %v4393 = vsub.f32 %v4233, %v4361
      %v4394 = vsub.f32 %v4234, %v4362
      %v4395 = vsub.f32 %v4235, %v4363
      %v4396 = vsub.f32 %v4236, %v4364
      %v4397 = vsub.f32 %v4237, %v4365
      %v4398 = vsub.f32 %v4238, %v4366
      %v4399 = vsub.f32 %v4239, %v4367
      %v4400 = vsub.f32 %v4240, %v4368
      %v4401 = vsub.f32 %v4241, %v4369
      %v4402 = vsub.f32 %v4242, %v4370
      %v4403 = vsub.f32 %v4243, %v4371
      %v4404 = vsub.f32 %v4244, %v4372
      %v4405 = vsub.f32 %v4245, %v4373
      %v4406 = vsub.f32 %v4246, %v4374
      %v4407 = vsub.f32 %v4247, %v4375
      %v4408 = vsub.f32 %v4248, %v4376
      %v4409 = vsub.f32 %v4249, %v4377
      %v4410 = vsub.f32 %v4250, %v4378
      %v4411 = vsub.f32 %v4251, %v4379
      %v4412 = vsub.f32 %v4252, %v4380
      %v4413 = vsub.f32 %v4253, %v4381
      %v4414 = vsub.f32 %v4254, %v4382
      %v4415 = vsub.f32 %v4255, %v4383
      %v4416 = vsub.f32 %v4256, %v4384
      %v4417 = vsub.f32 %v4257, %v4385
      %v4418 = vsub.f32 %v4258, %v4386
      %v4419 = vsub.f32 %v4259, %v4387
      %v4420 = vsub.f32 %v4260, %v4388
      %v4421 = vmul.f32 %v4389, %v4389
      %v4422 = vmul.f32 %v4390, %v4390
      %v4423 = vmul.f32 %v4391, %v4391
      %v4424 = vmul.f32 %v4392, %v4392
      %v4425 = vmul.f32 %v4393, %v4393
      %v4426 = vmul.f32 %v4394, %v4394
      %v4427 = vmul.f32 %v4395, %v4395
      %v4428 = vmul.f32 %v4396, %v4396
      %v4429 = vmul.f32 %v4397, %v4397
      %v4430 = vmul.f32 %v4398, %v4398
      %v4431 = vmul.f32 %v4399, %v4399
      %v4432 = vmul.f32 %v4400, %v4400
      %v4433 = vmul.f32 %v4401, %v4401
      %v4434 = vmul.f32 %v4402, %v4402
      %v4435 = vmul.f32 %v4403, %v4403
      %v4436 = vmul.f32 %v4404, %v4404
      %v4437 = vmul.f32 %v4405, %v4405
      %v4438 = vmul.f32 %v4406, %v4406
      %v4439 = vmul.f32 %v4407, %v4407
      %v4440 = vmul.f32 %v4408, %v4408
      %v4441 = vmul.f32 %v4409, %v4409
      %v4442 = vmul.f32 %v4410, %v4410
      %v4443 = vmul.f32 %v4411, %v4411
      %v4444 = vmul.f32 %v4412, %v4412
      %v4445 = vmul.f32 %v4413, %v4413
      %v4446 = vmul.f32 %v4414, %v4414
      %v4447 = vmul.f32 %v4415, %v4415
      %v4448 = vmul.f32 %v4416, %v4416
      %v4449 = vmul.f32 %v4417, %v4417
      %v4450 = vmul.f32 %v4418, %v4418
      %v4451 = vmul.f32 %v4419, %v4419
      %v4452 = vmul.f32 %v4420, %v4420
      %v4453 = vsel %vm1528, %v4421, 0.0
      %4454 = vadd.xlane.f32.xlu0 %v4453
      %v4455 = vpop.xlane.xlu0 %4454
      %v4456 = vsel %vm1528, %v4422, 0.0
      %4457 = vadd.xlane.f32.xlu0 %v4456
      %v4458 = vpop.xlane.xlu0 %4457
      %v4459 = vsel %vm1528, %v4423, 0.0
      %4460 = vadd.xlane.f32.xlu0 %v4459
      %v4461 = vpop.xlane.xlu0 %4460
      %v4462 = vsel %vm1528, %v4424, 0.0
      %4463 = vadd.xlane.f32.xlu0 %v4462
      %v4464 = vpop.xlane.xlu0 %4463
      %v4465 = vsel %vm1528, %v4425, 0.0
      %4466 = vadd.xlane.f32.xlu0 %v4465
      %v4467 = vpop.xlane.xlu0 %4466
      %v4468 = vsel %vm1528, %v4426, 0.0
      %4469 = vadd.xlane.f32.xlu0 %v4468
      %v4470 = vpop.xlane.xlu0 %4469
      %v4471 = vsel %vm1528, %v4427, 0.0
      %4472 = vadd.xlane.f32.xlu0 %v4471
      %v4473 = vpop.xlane.xlu0 %4472
      %v4474 = vsel %vm1528, %v4428, 0.0
      %4475 = vadd.xlane.f32.xlu0 %v4474
      %v4476 = vpop.xlane.xlu0 %4475
      %v4477 = vsel %vm1528, %v4429, 0.0
      %4478 = vadd.xlane.f32.xlu0 %v4477
      %v4479 = vpop.xlane.xlu0 %4478
      %v4480 = vsel %vm1528, %v4430, 0.0
      %4481 = vadd.xlane.f32.xlu0 %v4480
      %v4482 = vpop.xlane.xlu0 %4481
      %v4483 = vsel %vm1528, %v4431, 0.0
      %4484 = vadd.xlane.f32.xlu0 %v4483
      %v4485 = vpop.xlane.xlu0 %4484
      %v4486 = vsel %vm1528, %v4432, 0.0
      %4487 = vadd.xlane.f32.xlu0 %v4486
      %v4488 = vpop.xlane.xlu0 %4487
      %v4489 = vsel %vm1528, %v4433, 0.0
      %4490 = vadd.xlane.f32.xlu0 %v4489
      %v4491 = vpop.xlane.xlu0 %4490
      %v4492 = vsel %vm1528, %v4434, 0.0
      %4493 = vadd.xlane.f32.xlu0 %v4492
      %v4494 = vpop.xlane.xlu0 %4493
      %v4495 = vsel %vm1528, %v4435, 0.0
      %4496 = vadd.xlane.f32.xlu0 %v4495
      %v4497 = vpop.xlane.xlu0 %4496
      %v4498 = vsel %vm1528, %v4436, 0.0
      %4499 = vadd.xlane.f32.xlu0 %v4498
      %v4500 = vpop.xlane.xlu0 %4499
      %v4501 = vsel %vm1528, %v4437, 0.0
      %4502 = vadd.xlane.f32.xlu0 %v4501
      %v4503 = vpop.xlane.xlu0 %4502
      %v4504 = vsel %vm1528, %v4438, 0.0
      %4505 = vadd.xlane.f32.xlu0 %v4504
      %v4506 = vpop.xlane.xlu0 %4505
      %v4507 = vsel %vm1528, %v4439, 0.0
      %4508 = vadd.xlane.f32.xlu0 %v4507
      %v4509 = vpop.xlane.xlu0 %4508
      %v4510 = vsel %vm1528, %v4440, 0.0
      %4511 = vadd.xlane.f32.xlu0 %v4510
      %v4512 = vpop.xlane.xlu0 %4511
      %v4513 = vsel %vm1528, %v4441, 0.0
      %4514 = vadd.xlane.f32.xlu0 %v4513
      %v4515 = vpop.xlane.xlu0 %4514
      %v4516 = vsel %vm1528, %v4442, 0.0
      %4517 = vadd.xlane.f32.xlu0 %v4516
      %v4518 = vpop.xlane.xlu0 %4517
      %v4519 = vsel %vm1528, %v4443, 0.0
      %4520 = vadd.xlane.f32.xlu0 %v4519
      %v4521 = vpop.xlane.xlu0 %4520
      %v4522 = vsel %vm1528, %v4444, 0.0
      %4523 = vadd.xlane.f32.xlu0 %v4522
      %v4524 = vpop.xlane.xlu0 %4523
      %v4525 = vsel %vm1528, %v4445, 0.0
      %4526 = vadd.xlane.f32.xlu0 %v4525
      %v4527 = vpop.xlane.xlu0 %4526
      %v4528 = vsel %vm1528, %v4446, 0.0
      %4529 = vadd.xlane.f32.xlu0 %v4528
      %v4530 = vpop.xlane.xlu0 %4529
      %v4531 = vsel %vm1528, %v4447, 0.0
      %4532 = vadd.xlane.f32.xlu0 %v4531
      %v4533 = vpop.xlane.xlu0 %4532
      %v4534 = vsel %vm1528, %v4448, 0.0
      %4535 = vadd.xlane.f32.xlu0 %v4534
      %v4536 = vpop.xlane.xlu0 %4535
      %v4537 = vsel %vm1528, %v4449, 0.0
      %4538 = vadd.xlane.f32.xlu0 %v4537
      %v4539 = vpop.xlane.xlu0 %4538
      %v4540 = vsel %vm1528, %v4450, 0.0
      %4541 = vadd.xlane.f32.xlu0 %v4540
      %v4542 = vpop.xlane.xlu0 %4541
      %v4543 = vsel %vm1528, %v4451, 0.0
      %4544 = vadd.xlane.f32.xlu0 %v4543
      %v4545 = vpop.xlane.xlu0 %4544
      %v4546 = vsel %vm1528, %v4452, 0.0
      %4547 = vadd.xlane.f32.xlu0 %v4546
      %v4548 = vpop.xlane.xlu0 %4547
      %v4549 = vmul.f32 %v4455, 0.125
      %v4550 = vmul.f32 %v4458, 0.125
      %v4551 = vmul.f32 %v4461, 0.125
      %v4552 = vmul.f32 %v4464, 0.125
      %v4553 = vmul.f32 %v4467, 0.125
      %v4554 = vmul.f32 %v4470, 0.125
      %v4555 = vmul.f32 %v4473, 0.125
      %v4556 = vmul.f32 %v4476, 0.125
      %v4557 = vmul.f32 %v4479, 0.125
      %v4558 = vmul.f32 %v4482, 0.125
      %v4559 = vmul.f32 %v4485, 0.125
      %v4560 = vmul.f32 %v4488, 0.125
      %v4561 = vmul.f32 %v4491, 0.125
      %v4562 = vmul.f32 %v4494, 0.125
      %v4563 = vmul.f32 %v4497, 0.125
      %v4564 = vmul.f32 %v4500, 0.125
      %v4565 = vmul.f32 %v4503, 0.125
      %v4566 = vmul.f32 %v4506, 0.125
      %v4567 = vmul.f32 %v4509, 0.125
      %v4568 = vmul.f32 %v4512, 0.125
      %v4569 = vmul.f32 %v4515, 0.125
      %v4570 = vmul.f32 %v4518, 0.125
      %v4571 = vmul.f32 %v4521, 0.125
      %v4572 = vmul.f32 %v4524, 0.125
      %v4573 = vmul.f32 %v4527, 0.125
      %v4574 = vmul.f32 %v4530, 0.125
      %v4575 = vmul.f32 %v4533, 0.125
      %v4576 = vmul.f32 %v4536, 0.125
      %v4577 = vmul.f32 %v4539, 0.125
      %v4578 = vmul.f32 %v4542, 0.125
      %v4579 = vmul.f32 %v4545, 0.125
      %v4580 = vmul.f32 %v4548, 0.125
      %v4581 = vadd.f32 %v4549, 1e-05
      %v4582 = vadd.f32 %v4550, 1e-05
      %v4583 = vadd.f32 %v4551, 1e-05
      %v4584 = vadd.f32 %v4552, 1e-05
      %v4585 = vadd.f32 %v4553, 1e-05
      %v4586 = vadd.f32 %v4554, 1e-05
      %v4587 = vadd.f32 %v4555, 1e-05
      %v4588 = vadd.f32 %v4556, 1e-05
      %v4589 = vadd.f32 %v4557, 1e-05
      %v4590 = vadd.f32 %v4558, 1e-05
      %v4591 = vadd.f32 %v4559, 1e-05
      %v4592 = vadd.f32 %v4560, 1e-05
      %v4593 = vadd.f32 %v4561, 1e-05
      %v4594 = vadd.f32 %v4562, 1e-05
      %v4595 = vadd.f32 %v4563, 1e-05
      %v4596 = vadd.f32 %v4564, 1e-05
      %v4597 = vadd.f32 %v4565, 1e-05
      %v4598 = vadd.f32 %v4566, 1e-05
      %v4599 = vadd.f32 %v4567, 1e-05
      %v4600 = vadd.f32 %v4568, 1e-05
      %v4601 = vadd.f32 %v4569, 1e-05
      %v4602 = vadd.f32 %v4570, 1e-05
      %v4603 = vadd.f32 %v4571, 1e-05
      %v4604 = vadd.f32 %v4572, 1e-05
      %v4605 = vadd.f32 %v4573, 1e-05
      %v4606 = vadd.f32 %v4574, 1e-05
      %v4607 = vadd.f32 %v4575, 1e-05
      %v4608 = vadd.f32 %v4576, 1e-05
      %v4609 = vadd.f32 %v4577, 1e-05
      %v4610 = vadd.f32 %v4578, 1e-05
      %v4611 = vadd.f32 %v4579, 1e-05
      %v4612 = vadd.f32 %v4580, 1e-05
      %v4613 = vrsqrt.pop %v4581
      %v4614 = vrsqrt.pop %v4582
      %v4615 = vrsqrt.pop %v4583
      %v4616 = vrsqrt.pop %v4584
      %v4617 = vrsqrt.pop %v4585
      %v4618 = vrsqrt.pop %v4586
      %v4619 = vrsqrt.pop %v4587
      %v4620 = vrsqrt.pop %v4588
      %v4621 = vrsqrt.pop %v4589
      %v4622 = vrsqrt.pop %v4590
      %v4623 = vrsqrt.pop %v4591
      %v4624 = vrsqrt.pop %v4592
      %v4625 = vrsqrt.pop %v4593
      %v4626 = vrsqrt.pop %v4594
      %v4627 = vrsqrt.pop %v4595
      %v4628 = vrsqrt.pop %v4596
      %v4629 = vrsqrt.pop %v4597
      %v4630 = vrsqrt.pop %v4598
      %v4631 = vrsqrt.pop %v4599
      %v4632 = vrsqrt.pop %v4600
      %v4633 = vrsqrt.pop %v4601
      %v4634 = vrsqrt.pop %v4602
      %v4635 = vrsqrt.pop %v4603
      %v4636 = vrsqrt.pop %v4604
      %v4637 = vrsqrt.pop %v4605
      %v4638 = vrsqrt.pop %v4606
      %v4639 = vrsqrt.pop %v4607
      %v4640 = vrsqrt.pop %v4608
      %v4641 = vrsqrt.pop %v4609
      %v4642 = vrsqrt.pop %v4610
      %v4643 = vrsqrt.pop %v4611
      %v4644 = vrsqrt.pop %v4612
      %v4645 = vmul.f32 %v4389, %v4613
      %v4646 = vmul.f32 %v4390, %v4614
      %v4647 = vmul.f32 %v4391, %v4615
      %v4648 = vmul.f32 %v4392, %v4616
      %v4649 = vmul.f32 %v4393, %v4617
      %v4650 = vmul.f32 %v4394, %v4618
      %v4651 = vmul.f32 %v4395, %v4619
      %v4652 = vmul.f32 %v4396, %v4620
      %v4653 = vmul.f32 %v4397, %v4621
      %v4654 = vmul.f32 %v4398, %v4622
      %v4655 = vmul.f32 %v4399, %v4623
      %v4656 = vmul.f32 %v4400, %v4624
      %v4657 = vmul.f32 %v4401, %v4625
      %v4658 = vmul.f32 %v4402, %v4626
      %v4659 = vmul.f32 %v4403, %v4627
      %v4660 = vmul.f32 %v4404, %v4628
      %v4661 = vmul.f32 %v4405, %v4629
      %v4662 = vmul.f32 %v4406, %v4630
      %v4663 = vmul.f32 %v4407, %v4631
      %v4664 = vmul.f32 %v4408, %v4632
      %v4665 = vmul.f32 %v4409, %v4633
      %v4666 = vmul.f32 %v4410, %v4634
      %v4667 = vmul.f32 %v4411, %v4635
      %v4668 = vmul.f32 %v4412, %v4636
      %v4669 = vmul.f32 %v4413, %v4637
      %v4670 = vmul.f32 %v4414, %v4638
      %v4671 = vmul.f32 %v4415, %v4639
      %v4672 = vmul.f32 %v4416, %v4640
      %v4673 = vmul.f32 %v4417, %v4641
      %v4674 = vmul.f32 %v4418, %v4642
      %v4675 = vmul.f32 %v4419, %v4643
      %v4676 = vmul.f32 %v4420, %v4644
      %v4677 = vld [vmem:[%s8 + $0x8] sm:$0x1]
      %v4678 = vlaneseq
      %v4679 = vshrl.u32 %v4678, 7
      %v4680 = vsub.s32 0, %v4679
      %v4681 = vrot.slane %v4677, %v4680
      %v4682 = vmul.f32 %v4645, %v4681
      %v4683 = vmul.f32 %v4646, %v4681
      %v4684 = vmul.f32 %v4647, %v4681
      %v4685 = vmul.f32 %v4648, %v4681
      %v4686 = vmul.f32 %v4649, %v4681
      %v4687 = vmul.f32 %v4650, %v4681
      %v4688 = vmul.f32 %v4651, %v4681
      %v4689 = vmul.f32 %v4652, %v4681
      %v4690 = vmul.f32 %v4653, %v4681
      %v4691 = vmul.f32 %v4654, %v4681
      %v4692 = vmul.f32 %v4655, %v4681
      %v4693 = vmul.f32 %v4656, %v4681
      %v4694 = vmul.f32 %v4657, %v4681
      %v4695 = vmul.f32 %v4658, %v4681
      %v4696 = vmul.f32 %v4659, %v4681
      %v4697 = vmul.f32 %v4660, %v4681
      %v4698 = vmul.f32 %v4661, %v4681
      %v4699 = vmul.f32 %v4662, %v4681
      %v4700 = vmul.f32 %v4663, %v4681
      %v4701 = vmul.f32 %v4664, %v4681
      %v4702 = vmul.f32 %v4665, %v4681
      %v4703 = vmul.f32 %v4666, %v4681
      %v4704 = vmul.f32 %v4667, %v4681
      %v4705 = vmul.f32 %v4668, %v4681
      %v4706 = vmul.f32 %v4669, %v4681
      %v4707 = vmul.f32 %v4670, %v4681
      %v4708 = vmul.f32 %v4671, %v4681
      %v4709 = vmul.f32 %v4672, %v4681
      %v4710 = vmul.f32 %v4673, %v4681
      %v4711 = vmul.f32 %v4674, %v4681
      %v4712 = vmul.f32 %v4675, %v4681
      %v4713 = vmul.f32 %v4676, %v4681
      %v4714 = vld [vmem:[%s8 + $0x9] sm:$0x1]
      %v4715 = vlaneseq
      %v4716 = vshrl.u32 %v4715, 7
      %v4717 = vsub.s32 0, %v4716
      %v4718 = vrot.slane %v4714, %v4717
      %v4719 = vadd.f32 %v4682, %v4718
      %v4720 = vadd.f32 %v4683, %v4718
      %v4721 = vadd.f32 %v4684, %v4718
      %v4722 = vadd.f32 %v4685, %v4718
      %v4723 = vadd.f32 %v4686, %v4718
      %v4724 = vadd.f32 %v4687, %v4718
      %v4725 = vadd.f32 %v4688, %v4718
      %v4726 = vadd.f32 %v4689, %v4718
      %v4727 = vadd.f32 %v4690, %v4718
      %v4728 = vadd.f32 %v4691, %v4718
      %v4729 = vadd.f32 %v4692, %v4718
      %v4730 = vadd.f32 %v4693, %v4718
      %v4731 = vadd.f32 %v4694, %v4718
      %v4732 = vadd.f32 %v4695, %v4718
      %v4733 = vadd.f32 %v4696, %v4718
      %v4734 = vadd.f32 %v4697, %v4718
      %v4735 = vadd.f32 %v4698, %v4718
      %v4736 = vadd.f32 %v4699, %v4718
      %v4737 = vadd.f32 %v4700, %v4718
      %v4738 = vadd.f32 %v4701, %v4718
      %v4739 = vadd.f32 %v4702, %v4718
      %v4740 = vadd.f32 %v4703, %v4718
      %v4741 = vadd.f32 %v4704, %v4718
      %v4742 = vadd.f32 %v4705, %v4718
      %v4743 = vadd.f32 %v4706, %v4718
      %v4744 = vadd.f32 %v4707, %v4718
      %v4745 = vadd.f32 %v4708, %v4718
      %v4746 = vadd.f32 %v4709, %v4718
      %v4747 = vadd.f32 %v4710, %v4718
      %v4748 = vadd.f32 %v4711, %v4718
      %v4749 = vadd.f32 %v4712, %v4718
      %v4750 = vadd.f32 %v4713, %v4718
      %v4751 = vld [vmem:[%s6] sm:$0xff]
      %v4752 = vld [vmem:[%s9] sm:$0x1]
      %v4754 = vlaneseq
      %v4755 = vshrl.u32 %v4754, 7
      %v4756 = vsub.s32 0, %v4755
      %v4757 = vrot.slane %v4752, %v4756
      %v4760 = vsel %vm1528, %v4719, 0
      %v4763 = vsel %vm1528, %v4720, 0
      %v4766 = vsel %vm1528, %v4721, 0
      %v4769 = vsel %vm1528, %v4722, 0
      %v4772 = vsel %vm1528, %v4723, 0
      %v4775 = vsel %vm1528, %v4724, 0
      %v4778 = vsel %vm1528, %v4725, 0
      %v4781 = vsel %vm1528, %v4726, 0
      %v4784 = vsel %vm1528, %v4727, 0
      %v4787 = vsel %vm1528, %v4728, 0
      %v4790 = vsel %vm1528, %v4729, 0
      %v4793 = vsel %vm1528, %v4730, 0
      %v4796 = vsel %vm1528, %v4731, 0
      %v4799 = vsel %vm1528, %v4732, 0
      %v4802 = vsel %vm1528, %v4733, 0
      %v4805 = vsel %vm1528, %v4734, 0
      %v4808 = vsel %vm1528, %v4735, 0
      %v4811 = vsel %vm1528, %v4736, 0
      %v4814 = vsel %vm1528, %v4737, 0
      %v4817 = vsel %vm1528, %v4738, 0
      %v4820 = vsel %vm1528, %v4739, 0
      %v4823 = vsel %vm1528, %v4740, 0
      %v4826 = vsel %vm1528, %v4741, 0
      %v4829 = vsel %vm1528, %v4742, 0
      %v4832 = vsel %vm1528, %v4743, 0
      %v4835 = vsel %vm1528, %v4744, 0
      %v4838 = vsel %vm1528, %v4745, 0
      %v4841 = vsel %vm1528, %v4746, 0
      %v4844 = vsel %vm1528, %v4747, 0
      %v4847 = vsel %vm1528, %v4748, 0
      %v4850 = vsel %vm1528, %v4749, 0
      %v4853 = vsel %vm1528, %v4750, 0
      %4855 = vmatprep.subr.mxu0 0.0
      %4856 = vmatpush1.msra.mxu0 0.0
      %4857 = vmatprep.subr.mxu0 0.0
      %4858 = vmatpush1.msra.mxu0 0.0
      %4859 = vmatprep.subr.mxu0 0.0
      %4860 = vmatpush1.msra.mxu0 0.0
      %4861 = vmatprep.subr.mxu0 0.0
      %4862 = vmatpush1.msra.mxu0 0.0
      %4863 = vmatprep.subr.mxu0 0.0
      %4864 = vmatpush1.msra.mxu0 0.0
      %4865 = vmatprep.subr.mxu0 0.0
      %4866 = vmatpush1.msra.mxu0 0.0
      %4867 = vmatprep.subr.mxu0 0.0
      %4868 = vmatpush1.msra.mxu0 0.0
      %4869 = vmatprep.subr.mxu0 0.0
      %4870 = vmatpush1.msra.mxu0 0.0
      %4871 = vmatprep.subr.mxu0 0.0
      %4872 = vmatpush1.msra.mxu0 0.0
      %4873 = vmatprep.subr.mxu0 0.0
      %4874 = vmatpush1.msra.mxu0 0.0
      %4875 = vmatprep.subr.mxu0 0.0
      %4876 = vmatpush1.msra.mxu0 0.0
      %4877 = vmatprep.subr.mxu0 0.0
      %4878 = vmatpush1.msra.mxu0 0.0
      %4879 = vmatprep.subr.mxu0 0.0
      %4880 = vmatpush1.msra.mxu0 0.0
      %4881 = vmatprep.subr.mxu0 0.0
      %4882 = vmatpush1.msra.mxu0 0.0
      %4883 = vmatprep.subr.mxu0 0.0
      %4884 = vmatpush1.msra.mxu0 0.0
      %4885 = vmatprep.subr.mxu0 0.0
      %4886 = vmatpush1.msra.mxu0 %v4751
      %4887 = vmatprep.subr.mxu0 0.0
      %4888 = vmatpush2.msra.mxu0 0.0
      %4889 = vmatprep.subr.mxu0 0.0
      %4890 = vmatpush2.msra.mxu0 0.0
      %4891 = vmatprep.subr.mxu0 0.0
      %4892 = vmatpush2.msra.mxu0 0.0
      %4893 = vmatprep.subr.mxu0 0.0
      %4894 = vmatpush2.msra.mxu0 0.0
      %4895 = vmatprep.subr.mxu0 0.0
      %4896 = vmatpush2.msra.mxu0 0.0
      %4897 = vmatprep.subr.mxu0 0.0
      %4898 = vmatpush2.msra.mxu0 0.0
      %4899 = vmatprep.subr.mxu0 0.0
      %4900 = vmatpush2.msra.mxu0 0.0
      %4901 = vmatprep.subr.mxu0 0.0
      %4902 = vmatpush2.msra.mxu0 0.0
      %4903 = vmatprep.subr.mxu0 0.0
      %4904 = vmatpush2.msra.mxu0 0.0
      %4905 = vmatprep.subr.mxu0 0.0
      %4906 = vmatpush2.msra.mxu0 0.0
      %4907 = vmatprep.subr.mxu0 0.0
      %4908 = vmatpush2.msra.mxu0 0.0
      %4909 = vmatprep.subr.mxu0 0.0
      %4910 = vmatpush2.msra.mxu0 0.0
      %4911 = vmatprep.subr.mxu0 0.0
      %4912 = vmatpush2.msra.mxu0 0.0
      %4913 = vmatprep.subr.mxu0 0.0
      %4914 = vmatpush2.msra.mxu0 0.0
      %4915 = vmatprep.subr.mxu0 0.0
      %4916 = vmatpush2.msra.mxu0 0.0
      %4917 = vmatprep.subr.mxu0 0.0
      %4918 = vmatpush2.msra.mxu0 0.0
      %4919 = vmatprep.mubr.f32.mxu0 0.0
      %4920 = vmatmul.mubr.f32.gmra.mxu0 %v4760
      %v4921 = vpop.f32.mrf.mxu0
      %v4922 = vadd.f32 %v4757, %v4921
      %v4923 = vpop.f32.mrf.mxu0
      %4924 = vmatprep.mubr.f32.mxu0 0.0
      %4925 = vmatmul.mubr.f32.gmra.mxu0 %v4763
      %v4926 = vpop.f32.mrf.mxu0
      %v4927 = vadd.f32 %v4757, %v4926
      %v4928 = vpop.f32.mrf.mxu0
      %4929 = vmatprep.mubr.f32.mxu0 0.0
      %4930 = vmatmul.mubr.f32.gmra.mxu0 %v4766
      %v4931 = vpop.f32.mrf.mxu0
      %v4932 = vadd.f32 %v4757, %v4931
      %v4933 = vpop.f32.mrf.mxu0
      %4934 = vmatprep.mubr.f32.mxu0 0.0
      %4935 = vmatmul.mubr.f32.gmra.mxu0 %v4769
      %v4936 = vpop.f32.mrf.mxu0
      %v4937 = vadd.f32 %v4757, %v4936
      %v4938 = vpop.f32.mrf.mxu0
      %4939 = vmatprep.mubr.f32.mxu0 0.0
      %4940 = vmatmul.mubr.f32.gmra.mxu0 %v4772
      %v4941 = vpop.f32.mrf.mxu0
      %v4942 = vadd.f32 %v4757, %v4941
      %v4943 = vpop.f32.mrf.mxu0
      %4944 = vmatprep.mubr.f32.mxu0 0.0
      %4945 = vmatmul.mubr.f32.gmra.mxu0 %v4775
      %v4946 = vpop.f32.mrf.mxu0
      %v4947 = vadd.f32 %v4757, %v4946
      %v4948 = vpop.f32.mrf.mxu0
      %4949 = vmatprep.mubr.f32.mxu0 0.0
      %4950 = vmatmul.mubr.f32.gmra.mxu0 %v4778
      %v4951 = vpop.f32.mrf.mxu0
      %v4952 = vadd.f32 %v4757, %v4951
      %v4953 = vpop.f32.mrf.mxu0
      %4954 = vmatprep.mubr.f32.mxu0 0.0
      %4955 = vmatmul.mubr.f32.gmra.mxu0 %v4781
      %v4956 = vpop.f32.mrf.mxu0
      %v4957 = vadd.f32 %v4757, %v4956
      %v4958 = vpop.f32.mrf.mxu0
      %4959 = vmatprep.mubr.f32.mxu0 0.0
      %4960 = vmatmul.mubr.f32.gmra.mxu0 %v4784
      %v4961 = vpop.f32.mrf.mxu0
      %v4962 = vadd.f32 %v4757, %v4961
      %v4963 = vpop.f32.mrf.mxu0
      %4964 = vmatprep.mubr.f32.mxu0 0.0
      %4965 = vmatmul.mubr.f32.gmra.mxu0 %v4787
      %v4966 = vpop.f32.mrf.mxu0
      %v4967 = vadd.f32 %v4757, %v4966
      %v4968 = vpop.f32.mrf.mxu0
      %4969 = vmatprep.mubr.f32.mxu0 0.0
      %4970 = vmatmul.mubr.f32.gmra.mxu0 %v4790
      %v4971 = vpop.f32.mrf.mxu0
      %v4972 = vadd.f32 %v4757, %v4971
      %v4973 = vpop.f32.mrf.mxu0
      %4974 = vmatprep.mubr.f32.mxu0 0.0
      %4975 = vmatmul.mubr.f32.gmra.mxu0 %v4793
      %v4976 = vpop.f32.mrf.mxu0
      %v4977 = vadd.f32 %v4757, %v4976
      %v4978 = vpop.f32.mrf.mxu0
      %4979 = vmatprep.mubr.f32.mxu0 0.0
      %4980 = vmatmul.mubr.f32.gmra.mxu0 %v4796
      %v4981 = vpop.f32.mrf.mxu0
      %v4982 = vadd.f32 %v4757, %v4981
      %v4983 = vpop.f32.mrf.mxu0
      %4984 = vmatprep.mubr.f32.mxu0 0.0
      %4985 = vmatmul.mubr.f32.gmra.mxu0 %v4799
      %v4986 = vpop.f32.mrf.mxu0
      %v4987 = vadd.f32 %v4757, %v4986
      %v4988 = vpop.f32.mrf.mxu0
      %4989 = vmatprep.mubr.f32.mxu0 0.0
      %4990 = vmatmul.mubr.f32.gmra.mxu0 %v4802
      %v4991 = vpop.f32.mrf.mxu0
      %v4992 = vadd.f32 %v4757, %v4991
      %v4993 = vpop.f32.mrf.mxu0
      %4994 = vmatprep.mubr.f32.mxu0 0.0
      %4995 = vmatmul.mubr.f32.gmra.mxu0 %v4805
      %v4996 = vpop.f32.mrf.mxu0
      %v4997 = vadd.f32 %v4757, %v4996
      %v4998 = vpop.f32.mrf.mxu0
      %4999 = vmatprep.mubr.f32.mxu0 0.0
      %5000 = vmatmul.mubr.f32.gmra.mxu0 %v4808
      %v5001 = vpop.f32.mrf.mxu0
      %v5002 = vadd.f32 %v4757, %v5001
      %v5003 = vpop.f32.mrf.mxu0
      %5004 = vmatprep.mubr.f32.mxu0 0.0
      %5005 = vmatmul.mubr.f32.gmra.mxu0 %v4811
      %v5006 = vpop.f32.mrf.mxu0
      %v5007 = vadd.f32 %v4757, %v5006
      %v5008 = vpop.f32.mrf.mxu0
      %5009 = vmatprep.mubr.f32.mxu0 0.0
      %5010 = vmatmul.mubr.f32.gmra.mxu0 %v4814
      %v5011 = vpop.f32.mrf.mxu0
      %v5012 = vadd.f32 %v4757, %v5011
      %v5013 = vpop.f32.mrf.mxu0
      %5014 = vmatprep.mubr.f32.mxu0 0.0
      %5015 = vmatmul.mubr.f32.gmra.mxu0 %v4817
      %v5016 = vpop.f32.mrf.mxu0
      %v5017 = vadd.f32 %v4757, %v5016
      %v5018 = vpop.f32.mrf.mxu0
      %5019 = vmatprep.mubr.f32.mxu0 0.0
      %5020 = vmatmul.mubr.f32.gmra.mxu0 %v4820
      %v5021 = vpop.f32.mrf.mxu0
      %v5022 = vadd.f32 %v4757, %v5021
      %v5023 = vpop.f32.mrf.mxu0
      %5024 = vmatprep.mubr.f32.mxu0 0.0
      %5025 = vmatmul.mubr.f32.gmra.mxu0 %v4823
      %v5026 = vpop.f32.mrf.mxu0
      %v5027 = vadd.f32 %v4757, %v5026
      %v5028 = vpop.f32.mrf.mxu0
      %5029 = vmatprep.mubr.f32.mxu0 0.0
      %5030 = vmatmul.mubr.f32.gmra.mxu0 %v4826
      %v5031 = vpop.f32.mrf.mxu0
      %v5032 = vadd.f32 %v4757, %v5031
      %v5033 = vpop.f32.mrf.mxu0
      %5034 = vmatprep.mubr.f32.mxu0 0.0
      %5035 = vmatmul.mubr.f32.gmra.mxu0 %v4829
      %v5036 = vpop.f32.mrf.mxu0
      %v5037 = vadd.f32 %v4757, %v5036
      %v5038 = vpop.f32.mrf.mxu0
      %5039 = vmatprep.mubr.f32.mxu0 0.0
      %5040 = vmatmul.mubr.f32.gmra.mxu0 %v4832
      %v5041 = vpop.f32.mrf.mxu0
      %v5042 = vadd.f32 %v4757, %v5041
      %v5043 = vpop.f32.mrf.mxu0
      %5044 = vmatprep.mubr.f32.mxu0 0.0
      %5045 = vmatmul.mubr.f32.gmra.mxu0 %v4835
      %v5046 = vpop.f32.mrf.mxu0
      %v5047 = vadd.f32 %v4757, %v5046
      %v5048 = vpop.f32.mrf.mxu0
      %5049 = vmatprep.mubr.f32.mxu0 0.0
      %5050 = vmatmul.mubr.f32.gmra.mxu0 %v4838
      %v5051 = vpop.f32.mrf.mxu0
      %v5052 = vadd.f32 %v4757, %v5051
      %v5053 = vpop.f32.mrf.mxu0
      %5054 = vmatprep.mubr.f32.mxu0 0.0
      %5055 = vmatmul.mubr.f32.gmra.mxu0 %v4841
      %v5056 = vpop.f32.mrf.mxu0
      %v5057 = vadd.f32 %v4757, %v5056
      %v5058 = vpop.f32.mrf.mxu0
      %5059 = vmatprep.mubr.f32.mxu0 0.0
      %5060 = vmatmul.mubr.f32.gmra.mxu0 %v4844
      %v5061 = vpop.f32.mrf.mxu0
      %v5062 = vadd.f32 %v4757, %v5061
      %v5063 = vpop.f32.mrf.mxu0
      %5064 = vmatprep.mubr.f32.mxu0 0.0
      %5065 = vmatmul.mubr.f32.gmra.mxu0 %v4847
      %v5066 = vpop.f32.mrf.mxu0
      %v5067 = vadd.f32 %v4757, %v5066
      %v5068 = vpop.f32.mrf.mxu0
      %5069 = vmatprep.mubr.f32.mxu0 0.0
      %5070 = vmatmul.mubr.f32.gmra.mxu0 %v4850
      %v5071 = vpop.f32.mrf.mxu0
      %v5072 = vadd.f32 %v4757, %v5071
      %v5073 = vpop.f32.mrf.mxu0
      %5074 = vmatprep.mubr.f32.mxu0 0.0
      %5075 = vmatmul.mubr.f32.gmra.mxu0 %v4853
      %v5076 = vpop.f32.mrf.mxu0
      %v5077 = vadd.f32 %v4757, %v5076
      %v5078 = vpop.f32.mrf.mxu0
      %5079 = vdwg.mxu0
      %v5080 = vmul.f32 %v4922, 0.5
      %v5081 = vmul.f32 %v4927, 0.5
      %v5082 = vmul.f32 %v4932, 0.5
      %v5083 = vmul.f32 %v4937, 0.5
      %v5084 = vmul.f32 %v4942, 0.5
      %v5085 = vmul.f32 %v4947, 0.5
      %v5086 = vmul.f32 %v4952, 0.5
      %v5087 = vmul.f32 %v4957, 0.5
      %v5088 = vmul.f32 %v4962, 0.5
      %v5089 = vmul.f32 %v4967, 0.5
      %v5090 = vmul.f32 %v4972, 0.5
      %v5091 = vmul.f32 %v4977, 0.5
      %v5092 = vmul.f32 %v4982, 0.5
      %v5093 = vmul.f32 %v4987, 0.5
      %v5094 = vmul.f32 %v4992, 0.5
      %v5095 = vmul.f32 %v4997, 0.5
      %v5096 = vmul.f32 %v5002, 0.5
      %v5097 = vmul.f32 %v5007, 0.5
      %v5098 = vmul.f32 %v5012, 0.5
      %v5099 = vmul.f32 %v5017, 0.5
      %v5100 = vmul.f32 %v5022, 0.5
      %v5101 = vmul.f32 %v5027, 0.5
      %v5102 = vmul.f32 %v5032, 0.5
      %v5103 = vmul.f32 %v5037, 0.5
      %v5104 = vmul.f32 %v5042, 0.5
      %v5105 = vmul.f32 %v5047, 0.5
      %v5106 = vmul.f32 %v5052, 0.5
      %v5107 = vmul.f32 %v5057, 0.5
      %v5108 = vmul.f32 %v5062, 0.5
      %v5109 = vmul.f32 %v5067, 0.5
      %v5110 = vmul.f32 %v5072, 0.5
      %v5111 = vmul.f32 %v5077, 0.5
      %v5112 = vtanh.pop %v5080
      %v5113 = vtanh.pop %v5081
      %v5114 = vtanh.pop %v5082
      %v5115 = vtanh.pop %v5083
      %v5116 = vtanh.pop %v5084
      %v5117 = vtanh.pop %v5085
      %v5118 = vtanh.pop %v5086
      %v5119 = vtanh.pop %v5087
      %v5120 = vtanh.pop %v5088
      %v5121 = vtanh.pop %v5089
      %v5122 = vtanh.pop %v5090
      %v5123 = vtanh.pop %v5091
      %v5124 = vtanh.pop %v5092
      %v5125 = vtanh.pop %v5093
      %v5126 = vtanh.pop %v5094
      %v5127 = vtanh.pop %v5095
      %v5128 = vtanh.pop %v5096
      %v5129 = vtanh.pop %v5097
      %v5130 = vtanh.pop %v5098
      %v5131 = vtanh.pop %v5099
      %v5132 = vtanh.pop %v5100
      %v5133 = vtanh.pop %v5101
      %v5134 = vtanh.pop %v5102
      %v5135 = vtanh.pop %v5103
      %v5136 = vtanh.pop %v5104
      %v5137 = vtanh.pop %v5105
      %v5138 = vtanh.pop %v5106
      %v5139 = vtanh.pop %v5107
      %v5140 = vtanh.pop %v5108
      %v5141 = vtanh.pop %v5109
      %v5142 = vtanh.pop %v5110
      %v5143 = vtanh.pop %v5111
      %v5144 = vmul.f32 %v5112, 0.5
      %v5145 = vmul.f32 %v5113, 0.5
      %v5146 = vmul.f32 %v5114, 0.5
      %v5147 = vmul.f32 %v5115, 0.5
      %v5148 = vmul.f32 %v5116, 0.5
      %v5149 = vmul.f32 %v5117, 0.5
      %v5150 = vmul.f32 %v5118, 0.5
      %v5151 = vmul.f32 %v5119, 0.5
      %v5152 = vmul.f32 %v5120, 0.5
      %v5153 = vmul.f32 %v5121, 0.5
      %v5154 = vmul.f32 %v5122, 0.5
      %v5155 = vmul.f32 %v5123, 0.5
      %v5156 = vmul.f32 %v5124, 0.5
      %v5157 = vmul.f32 %v5125, 0.5
      %v5158 = vmul.f32 %v5126, 0.5
      %v5159 = vmul.f32 %v5127, 0.5
      %v5160 = vmul.f32 %v5128, 0.5
      %v5161 = vmul.f32 %v5129, 0.5
      %v5162 = vmul.f32 %v5130, 0.5
      %v5163 = vmul.f32 %v5131, 0.5
      %v5164 = vmul.f32 %v5132, 0.5
      %v5165 = vmul.f32 %v5133, 0.5
      %v5166 = vmul.f32 %v5134, 0.5
      %v5167 = vmul.f32 %v5135, 0.5
      %v5168 = vmul.f32 %v5136, 0.5
      %v5169 = vmul.f32 %v5137, 0.5
      %v5170 = vmul.f32 %v5138, 0.5
      %v5171 = vmul.f32 %v5139, 0.5
      %v5172 = vmul.f32 %v5140, 0.5
      %v5173 = vmul.f32 %v5141, 0.5
      %v5174 = vmul.f32 %v5142, 0.5
      %v5175 = vmul.f32 %v5143, 0.5
      %v5176 = vadd.f32 %v5144, 0.5
      %v5177 = vadd.f32 %v5145, 0.5
      %v5178 = vadd.f32 %v5146, 0.5
      %v5179 = vadd.f32 %v5147, 0.5
      %v5180 = vadd.f32 %v5148, 0.5
      %v5181 = vadd.f32 %v5149, 0.5
      %v5182 = vadd.f32 %v5150, 0.5
      %v5183 = vadd.f32 %v5151, 0.5
      %v5184 = vadd.f32 %v5152, 0.5
      %v5185 = vadd.f32 %v5153, 0.5
      %v5186 = vadd.f32 %v5154, 0.5
      %v5187 = vadd.f32 %v5155, 0.5
      %v5188 = vadd.f32 %v5156, 0.5
      %v5189 = vadd.f32 %v5157, 0.5
      %v5190 = vadd.f32 %v5158, 0.5
      %v5191 = vadd.f32 %v5159, 0.5
      %v5192 = vadd.f32 %v5160, 0.5
      %v5193 = vadd.f32 %v5161, 0.5
      %v5194 = vadd.f32 %v5162, 0.5
      %v5195 = vadd.f32 %v5163, 0.5
      %v5196 = vadd.f32 %v5164, 0.5
      %v5197 = vadd.f32 %v5165, 0.5
      %v5198 = vadd.f32 %v5166, 0.5
      %v5199 = vadd.f32 %v5167, 0.5
      %v5200 = vadd.f32 %v5168, 0.5
      %v5201 = vadd.f32 %v5169, 0.5
      %v5202 = vadd.f32 %v5170, 0.5
      %v5203 = vadd.f32 %v5171, 0.5
      %v5204 = vadd.f32 %v5172, 0.5
      %v5205 = vadd.f32 %v5173, 0.5
      %v5206 = vadd.f32 %v5174, 0.5
      %v5207 = vadd.f32 %v5175, 0.5
      %v5208 = vmul.f32 %v4922, %v5176
      %v5209 = vmul.f32 %v4927, %v5177
      %v5210 = vmul.f32 %v4932, %v5178
      %v5211 = vmul.f32 %v4937, %v5179
      %v5212 = vmul.f32 %v4942, %v5180
      %v5213 = vmul.f32 %v4947, %v5181
      %v5214 = vmul.f32 %v4952, %v5182
      %v5215 = vmul.f32 %v4957, %v5183
      %v5216 = vmul.f32 %v4962, %v5184
      %v5217 = vmul.f32 %v4967, %v5185
      %v5218 = vmul.f32 %v4972, %v5186
      %v5219 = vmul.f32 %v4977, %v5187
      %v5220 = vmul.f32 %v4982, %v5188
      %v5221 = vmul.f32 %v4987, %v5189
      %v5222 = vmul.f32 %v4992, %v5190
      %v5223 = vmul.f32 %v4997, %v5191
      %v5224 = vmul.f32 %v5002, %v5192
      %v5225 = vmul.f32 %v5007, %v5193
      %v5226 = vmul.f32 %v5012, %v5194
      %v5227 = vmul.f32 %v5017, %v5195
      %v5228 = vmul.f32 %v5022, %v5196
      %v5229 = vmul.f32 %v5027, %v5197
      %v5230 = vmul.f32 %v5032, %v5198
      %v5231 = vmul.f32 %v5037, %v5199
      %v5232 = vmul.f32 %v5042, %v5200
      %v5233 = vmul.f32 %v5047, %v5201
      %v5234 = vmul.f32 %v5052, %v5202
      %v5235 = vmul.f32 %v5057, %v5203
      %v5236 = vmul.f32 %v5062, %v5204
      %v5237 = vmul.f32 %v5067, %v5205
      %v5238 = vmul.f32 %v5072, %v5206
      %v5239 = vmul.f32 %v5077, %v5207
      %v5240 = vld [vmem:[%s7] sm:$0xff]
      %v5241 = vld [vmem:[%s7 + $0x8] sm:$0xff]
      %v5242 = vld [vmem:[%s7 + $0x10] sm:$0xff]
      %v5243 = vld [vmem:[%s7 + $0x18] sm:$0xff]
      %v5244 = vld [vmem:[%s8 + $0xa] sm:$0x1]
      %v5245 = vlaneseq
      %v5246 = vshrl.u32 %v5245, 7
      %v5247 = vsub.s32 0, %v5246
      %v5248 = vrot.slane %v5244, %v5247
      %vm5249 = vcmask 261120
      %v5251 = vsel %vm5249, %v5208, 0
      %v5254 = vsel %vm5249, %v5209, 0
      %v5257 = vsel %vm5249, %v5210, 0
      %v5260 = vsel %vm5249, %v5211, 0
      %v5263 = vsel %vm5249, %v5212, 0
      %v5266 = vsel %vm5249, %v5213, 0
      %v5269 = vsel %vm5249, %v5214, 0
      %v5272 = vsel %vm5249, %v5215, 0
      %v5275 = vsel %vm5249, %v5216, 0
      %v5278 = vsel %vm5249, %v5217, 0
      %v5281 = vsel %vm5249, %v5218, 0
      %v5284 = vsel %vm5249, %v5219, 0
      %v5287 = vsel %vm5249, %v5220, 0
      %v5290 = vsel %vm5249, %v5221, 0
      %v5293 = vsel %vm5249, %v5222, 0
      %v5296 = vsel %vm5249, %v5223, 0
      %v5299 = vsel %vm5249, %v5224, 0
      %v5302 = vsel %vm5249, %v5225, 0
      %v5305 = vsel %vm5249, %v5226, 0
      %v5308 = vsel %vm5249, %v5227, 0
      %v5311 = vsel %vm5249, %v5228, 0
      %v5314 = vsel %vm5249, %v5229, 0
      %v5317 = vsel %vm5249, %v5230, 0
      %v5320 = vsel %vm5249, %v5231, 0
      %v5323 = vsel %vm5249, %v5232, 0
      %v5326 = vsel %vm5249, %v5233, 0
      %v5329 = vsel %vm5249, %v5234, 0
      %v5332 = vsel %vm5249, %v5235, 0
      %v5335 = vsel %vm5249, %v5236, 0
      %v5338 = vsel %vm5249, %v5237, 0
      %v5341 = vsel %vm5249, %v5238, 0
      %v5344 = vsel %vm5249, %v5239, 0
      %5346 = vmatprep.subr.mxu0 0.0
      %5347 = vmatpush1.msra.mxu0 0.0
      %5348 = vmatprep.subr.mxu0 0.0
      %5349 = vmatpush1.msra.mxu0 0.0
      %5350 = vmatprep.subr.mxu0 0.0
      %5351 = vmatpush1.msra.mxu0 0.0
      %5352 = vmatprep.subr.mxu0 0.0
      %5353 = vmatpush1.msra.mxu0 0.0
      %5354 = vmatprep.subr.mxu0 0.0
      %5355 = vmatpush1.msra.mxu0 0.0
      %5356 = vmatprep.subr.mxu0 0.0
      %5357 = vmatpush1.msra.mxu0 0.0
      %5358 = vmatprep.subr.mxu0 0.0
      %5359 = vmatpush1.msra.mxu0 0.0
      %5360 = vmatprep.subr.mxu0 0.0
      %5361 = vmatpush1.msra.mxu0 0.0
      %5362 = vmatprep.subr.mxu0 0.0
      %5363 = vmatpush1.msra.mxu0 0.0
      %5364 = vmatprep.subr.mxu0 0.0
      %5365 = vmatpush1.msra.mxu0 0.0
      %5366 = vmatprep.subr.mxu0 0.0
      %5367 = vmatpush1.msra.mxu0 0.0
      %5368 = vmatprep.subr.mxu0 0.0
      %5369 = vmatpush1.msra.mxu0 0.0
      %5370 = vmatprep.subr.mxu0 0.0
      %5371 = vmatpush1.msra.mxu0 %v5243
      %5372 = vmatprep.subr.mxu0 0.0
      %5373 = vmatpush1.msra.mxu0 %v5242
      %5374 = vmatprep.subr.mxu0 0.0
      %5375 = vmatpush1.msra.mxu0 %v5241
      %5376 = vmatprep.subr.mxu0 0.0
      %5377 = vmatpush1.msra.mxu0 %v5240
      %5378 = vmatprep.subr.mxu0 0.0
      %5379 = vmatpush2.msra.mxu0 0.0
      %5380 = vmatprep.subr.mxu0 0.0
      %5381 = vmatpush2.msra.mxu0 0.0
      %5382 = vmatprep.subr.mxu0 0.0
      %5383 = vmatpush2.msra.mxu0 0.0
      %5384 = vmatprep.subr.mxu0 0.0
      %5385 = vmatpush2.msra.mxu0 0.0
      %5386 = vmatprep.subr.mxu0 0.0
      %5387 = vmatpush2.msra.mxu0 0.0
      %5388 = vmatprep.subr.mxu0 0.0
      %5389 = vmatpush2.msra.mxu0 0.0
      %5390 = vmatprep.subr.mxu0 0.0
      %5391 = vmatpush2.msra.mxu0 0.0
      %5392 = vmatprep.subr.mxu0 0.0
      %5393 = vmatpush2.msra.mxu0 0.0
      %5394 = vmatprep.subr.mxu0 0.0
      %5395 = vmatpush2.msra.mxu0 0.0
      %5396 = vmatprep.subr.mxu0 0.0
      %5397 = vmatpush2.msra.mxu0 0.0
      %5398 = vmatprep.subr.mxu0 0.0
      %5399 = vmatpush2.msra.mxu0 0.0
      %5400 = vmatprep.subr.mxu0 0.0
      %5401 = vmatpush2.msra.mxu0 0.0
      %5402 = vmatprep.subr.mxu0 0.0
      %5403 = vmatpush2.msra.mxu0 0.0
      %5404 = vmatprep.subr.mxu0 0.0
      %5405 = vmatpush2.msra.mxu0 0.0
      %5406 = vmatprep.subr.mxu0 0.0
      %5407 = vmatpush2.msra.mxu0 0.0
      %5408 = vmatprep.subr.mxu0 0.0
      %5409 = vmatpush2.msra.mxu0 0.0
      %5410 = vmatprep.mubr.f32.mxu0 0.0
      %5411 = vmatmul.mubr.f32.gmra.mxu0 %v5251
      %v5412 = vpop.f32.mrf.mxu0
      %v5413 = vadd.f32 %v5248, %v5412
      %v5414 = vpop.f32.mrf.mxu0
      %5415 = vmatprep.mubr.f32.mxu0 0.0
      %5416 = vmatmul.mubr.f32.gmra.mxu0 %v5254
      %v5417 = vpop.f32.mrf.mxu0
      %v5418 = vadd.f32 %v5248, %v5417
      %v5419 = vpop.f32.mrf.mxu0
      %5420 = vmatprep.mubr.f32.mxu0 0.0
      %5421 = vmatmul.mubr.f32.gmra.mxu0 %v5257
      %v5422 = vpop.f32.mrf.mxu0
      %v5423 = vadd.f32 %v5248, %v5422
      %v5424 = vpop.f32.mrf.mxu0
      %5425 = vmatprep.mubr.f32.mxu0 0.0
      %5426 = vmatmul.mubr.f32.gmra.mxu0 %v5260
      %v5427 = vpop.f32.mrf.mxu0
      %v5428 = vadd.f32 %v5248, %v5427
      %v5429 = vpop.f32.mrf.mxu0
      %5430 = vmatprep.mubr.f32.mxu0 0.0
      %5431 = vmatmul.mubr.f32.gmra.mxu0 %v5263
      %v5432 = vpop.f32.mrf.mxu0
      %v5433 = vadd.f32 %v5248, %v5432
      %v5434 = vpop.f32.mrf.mxu0
      %5435 = vmatprep.mubr.f32.mxu0 0.0
      %5436 = vmatmul.mubr.f32.gmra.mxu0 %v5266
      %v5437 = vpop.f32.mrf.mxu0
      %v5438 = vadd.f32 %v5248, %v5437
      %v5439 = vpop.f32.mrf.mxu0
      %5440 = vmatprep.mubr.f32.mxu0 0.0
      %5441 = vmatmul.mubr.f32.gmra.mxu0 %v5269
      %v5442 = vpop.f32.mrf.mxu0
      %v5443 = vadd.f32 %v5248, %v5442
      %v5444 = vpop.f32.mrf.mxu0
      %5445 = vmatprep.mubr.f32.mxu0 0.0
      %5446 = vmatmul.mubr.f32.gmra.mxu0 %v5272
      %v5447 = vpop.f32.mrf.mxu0
      %v5448 = vadd.f32 %v5248, %v5447
      %v5449 = vpop.f32.mrf.mxu0
      %5450 = vmatprep.mubr.f32.mxu0 0.0
      %5451 = vmatmul.mubr.f32.gmra.mxu0 %v5275
      %v5452 = vpop.f32.mrf.mxu0
      %v5453 = vadd.f32 %v5248, %v5452
      %v5454 = vpop.f32.mrf.mxu0
      %5455 = vmatprep.mubr.f32.mxu0 0.0
      %5456 = vmatmul.mubr.f32.gmra.mxu0 %v5278
      %v5457 = vpop.f32.mrf.mxu0
      %v5458 = vadd.f32 %v5248, %v5457
      %v5459 = vpop.f32.mrf.mxu0
      %5460 = vmatprep.mubr.f32.mxu0 0.0
      %5461 = vmatmul.mubr.f32.gmra.mxu0 %v5281
      %v5462 = vpop.f32.mrf.mxu0
      %v5463 = vadd.f32 %v5248, %v5462
      %v5464 = vpop.f32.mrf.mxu0
      %5465 = vmatprep.mubr.f32.mxu0 0.0
      %5466 = vmatmul.mubr.f32.gmra.mxu0 %v5284
      %v5467 = vpop.f32.mrf.mxu0
      %v5468 = vadd.f32 %v5248, %v5467
      %v5469 = vpop.f32.mrf.mxu0
      %5470 = vmatprep.mubr.f32.mxu0 0.0
      %5471 = vmatmul.mubr.f32.gmra.mxu0 %v5287
      %v5472 = vpop.f32.mrf.mxu0
      %v5473 = vadd.f32 %v5248, %v5472
      %v5474 = vpop.f32.mrf.mxu0
      %5475 = vmatprep.mubr.f32.mxu0 0.0
      %5476 = vmatmul.mubr.f32.gmra.mxu0 %v5290
      %v5477 = vpop.f32.mrf.mxu0
      %v5478 = vadd.f32 %v5248, %v5477
      %v5479 = vpop.f32.mrf.mxu0
      %5480 = vmatprep.mubr.f32.mxu0 0.0
      %5481 = vmatmul.mubr.f32.gmra.mxu0 %v5293
      %v5482 = vpop.f32.mrf.mxu0
      %v5483 = vadd.f32 %v5248, %v5482
      %v5484 = vpop.f32.mrf.mxu0
      %5485 = vmatprep.mubr.f32.mxu0 0.0
      %5486 = vmatmul.mubr.f32.gmra.mxu0 %v5296
      %v5487 = vpop.f32.mrf.mxu0
      %v5488 = vadd.f32 %v5248, %v5487
      %v5489 = vpop.f32.mrf.mxu0
      %5490 = vmatprep.mubr.f32.mxu0 0.0
      %5491 = vmatmul.mubr.f32.gmra.mxu0 %v5299
      %v5492 = vpop.f32.mrf.mxu0
      %v5493 = vadd.f32 %v5248, %v5492
      %v5494 = vpop.f32.mrf.mxu0
      %5495 = vmatprep.mubr.f32.mxu0 0.0
      %5496 = vmatmul.mubr.f32.gmra.mxu0 %v5302
      %v5497 = vpop.f32.mrf.mxu0
      %v5498 = vadd.f32 %v5248, %v5497
      %v5499 = vpop.f32.mrf.mxu0
      %5500 = vmatprep.mubr.f32.mxu0 0.0
      %5501 = vmatmul.mubr.f32.gmra.mxu0 %v5305
      %v5502 = vpop.f32.mrf.mxu0
      %v5503 = vadd.f32 %v5248, %v5502
      %v5504 = vpop.f32.mrf.mxu0
      %5505 = vmatprep.mubr.f32.mxu0 0.0
      %5506 = vmatmul.mubr.f32.gmra.mxu0 %v5308
      %v5507 = vpop.f32.mrf.mxu0
      %v5508 = vadd.f32 %v5248, %v5507
      %v5509 = vpop.f32.mrf.mxu0
      %5510 = vmatprep.mubr.f32.mxu0 0.0
      %5511 = vmatmul.mubr.f32.gmra.mxu0 %v5311
      %v5512 = vpop.f32.mrf.mxu0
      %v5513 = vadd.f32 %v5248, %v5512
      %v5514 = vpop.f32.mrf.mxu0
      %5515 = vmatprep.mubr.f32.mxu0 0.0
      %5516 = vmatmul.mubr.f32.gmra.mxu0 %v5314
      %v5517 = vpop.f32.mrf.mxu0
      %v5518 = vadd.f32 %v5248, %v5517
      %v5519 = vpop.f32.mrf.mxu0
      %5520 = vmatprep.mubr.f32.mxu0 0.0
      %5521 = vmatmul.mubr.f32.gmra.mxu0 %v5317
      %v5522 = vpop.f32.mrf.mxu0
      %v5523 = vadd.f32 %v5248, %v5522
      %v5524 = vpop.f32.mrf.mxu0
      %5525 = vmatprep.mubr.f32.mxu0 0.0
      %5526 = vmatmul.mubr.f32.gmra.mxu0 %v5320
      %v5527 = vpop.f32.mrf.mxu0
      %v5528 = vadd.f32 %v5248, %v5527
      %v5529 = vpop.f32.mrf.mxu0
      %5530 = vmatprep.mubr.f32.mxu0 0.0
      %5531 = vmatmul.mubr.f32.gmra.mxu0 %v5323
      %v5532 = vpop.f32.mrf.mxu0
      %v5533 = vadd.f32 %v5248, %v5532
      %v5534 = vpop.f32.mrf.mxu0
      %5535 = vmatprep.mubr.f32.mxu0 0.0
      %5536 = vmatmul.mubr.f32.gmra.mxu0 %v5326
      %v5537 = vpop.f32.mrf.mxu0
      %v5538 = vadd.f32 %v5248, %v5537
      %v5539 = vpop.f32.mrf.mxu0
      %5540 = vmatprep.mubr.f32.mxu0 0.0
      %5541 = vmatmul.mubr.f32.gmra.mxu0 %v5329
      %v5542 = vpop.f32.mrf.mxu0
      %v5543 = vadd.f32 %v5248, %v5542
      %v5544 = vpop.f32.mrf.mxu0
      %5545 = vmatprep.mubr.f32.mxu0 0.0
      %5546 = vmatmul.mubr.f32.gmra.mxu0 %v5332
      %v5547 = vpop.f32.mrf.mxu0
      %v5548 = vadd.f32 %v5248, %v5547
      %v5549 = vpop.f32.mrf.mxu0
      %5550 = vmatprep.mubr.f32.mxu0 0.0
      %5551 = vmatmul.mubr.f32.gmra.mxu0 %v5335
      %v5552 = vpop.f32.mrf.mxu0
      %v5553 = vadd.f32 %v5248, %v5552
      %v5554 = vpop.f32.mrf.mxu0
      %5555 = vmatprep.mubr.f32.mxu0 0.0
      %5556 = vmatmul.mubr.f32.gmra.mxu0 %v5338
      %v5557 = vpop.f32.mrf.mxu0
      %v5558 = vadd.f32 %v5248, %v5557
      %v5559 = vpop.f32.mrf.mxu0
      %5560 = vmatprep.mubr.f32.mxu0 0.0
      %5561 = vmatmul.mubr.f32.gmra.mxu0 %v5341
      %v5562 = vpop.f32.mrf.mxu0
      %v5563 = vadd.f32 %v5248, %v5562
      %v5564 = vpop.f32.mrf.mxu0
      %5565 = vmatprep.mubr.f32.mxu0 0.0
      %5566 = vmatmul.mubr.f32.gmra.mxu0 %v5344
      %v5567 = vpop.f32.mrf.mxu0
      %v5568 = vadd.f32 %v5248, %v5567
      %v5569 = vpop.f32.mrf.mxu0
      %5570 = vdwg.mxu0
      %v5571 = vadd.f32 %v2539, %v5413
      %v5572 = vadd.f32 %v2540, %v5418
      %v5573 = vadd.f32 %v2541, %v5423
      %v5574 = vadd.f32 %v2542, %v5428
      %v5575 = vadd.f32 %v2543, %v5433
      %v5576 = vadd.f32 %v2544, %v5438
      %v5577 = vadd.f32 %v2545, %v5443
      %v5578 = vadd.f32 %v2546, %v5448
      %v5579 = vadd.f32 %v2547, %v5453
      %v5580 = vadd.f32 %v2548, %v5458
      %v5581 = vadd.f32 %v2549, %v5463
      %v5582 = vadd.f32 %v2550, %v5468
      %v5583 = vadd.f32 %v2551, %v5473
      %v5584 = vadd.f32 %v2552, %v5478
      %v5585 = vadd.f32 %v2553, %v5483
      %v5586 = vadd.f32 %v2554, %v5488
      %v5587 = vadd.f32 %v2555, %v5493
      %v5588 = vadd.f32 %v2556, %v5498
      %v5589 = vadd.f32 %v2557, %v5503
      %v5590 = vadd.f32 %v2558, %v5508
      %v5591 = vadd.f32 %v2559, %v5513
      %v5592 = vadd.f32 %v2560, %v5518
      %v5593 = vadd.f32 %v2561, %v5523
      %v5594 = vadd.f32 %v2562, %v5528
      %v5595 = vadd.f32 %v2563, %v5533
      %v5596 = vadd.f32 %v2564, %v5538
      %v5597 = vadd.f32 %v2565, %v5543
      %v5598 = vadd.f32 %v2566, %v5548
      %v5599 = vadd.f32 %v2567, %v5553
      %v5600 = vadd.f32 %v2568, %v5558
      %v5601 = vadd.f32 %v2569, %v5563
      %v5602 = vadd.f32 %v2570, %v5568
      %5603 = vst.msk [vmem:[%s389] sm:$0xff] %vm1528, %v5571
      %5604 = vst.msk [vmem:[%s389 + $0x8] sm:$0xff] %vm1528, %v5572
      %5605 = vst.msk [vmem:[%s389 + $0x10] sm:$0xff] %vm1528, %v5573
      %5606 = vst.msk [vmem:[%s389 + $0x18] sm:$0xff] %vm1528, %v5574
      %5607 = vst.msk [vmem:[%s389 + $0x20] sm:$0xff] %vm1528, %v5575
      %5608 = vst.msk [vmem:[%s389 + $0x28] sm:$0xff] %vm1528, %v5576
      %5609 = vst.msk [vmem:[%s389 + $0x30] sm:$0xff] %vm1528, %v5577
      %5610 = vst.msk [vmem:[%s389 + $0x38] sm:$0xff] %vm1528, %v5578
      %5611 = vst.msk [vmem:[%s389 + $0x40] sm:$0xff] %vm1528, %v5579
      %5612 = vst.msk [vmem:[%s389 + $0x48] sm:$0xff] %vm1528, %v5580
      %5613 = vst.msk [vmem:[%s389 + $0x50] sm:$0xff] %vm1528, %v5581
      %5614 = vst.msk [vmem:[%s389 + $0x58] sm:$0xff] %vm1528, %v5582
      %5615 = vst.msk [vmem:[%s389 + $0x60] sm:$0xff] %vm1528, %v5583
      %5616 = vst.msk [vmem:[%s389 + $0x68] sm:$0xff] %vm1528, %v5584
      %5617 = vst.msk [vmem:[%s389 + $0x70] sm:$0xff] %vm1528, %v5585
      %5618 = vst.msk [vmem:[%s389 + $0x78] sm:$0xff] %vm1528, %v5586
      %5619 = vst.msk [vmem:[%s389 + $0x80] sm:$0xff] %vm1528, %v5587
      %5620 = vst.msk [vmem:[%s389 + $0x88] sm:$0xff] %vm1528, %v5588
      %5621 = vst.msk [vmem:[%s389 + $0x90] sm:$0xff] %vm1528, %v5589
      %5622 = vst.msk [vmem:[%s389 + $0x98] sm:$0xff] %vm1528, %v5590
      %5623 = vst.msk [vmem:[%s389 + $0xa0] sm:$0xff] %vm1528, %v5591
      %5624 = vst.msk [vmem:[%s389 + $0xa8] sm:$0xff] %vm1528, %v5592
      %5625 = vst.msk [vmem:[%s389 + $0xb0] sm:$0xff] %vm1528, %v5593
      %5626 = vst.msk [vmem:[%s389 + $0xb8] sm:$0xff] %vm1528, %v5594
      %5627 = vst.msk [vmem:[%s389 + $0xc0] sm:$0xff] %vm1528, %v5595
      %5628 = vst.msk [vmem:[%s389 + $0xc8] sm:$0xff] %vm1528, %v5596
      %5629 = vst.msk [vmem:[%s389 + $0xd0] sm:$0xff] %vm1528, %v5597
      %5630 = vst.msk [vmem:[%s389 + $0xd8] sm:$0xff] %vm1528, %v5598
      %5631 = vst.msk [vmem:[%s389 + $0xe0] sm:$0xff] %vm1528, %v5599
      %5632 = vst.msk [vmem:[%s389 + $0xe8] sm:$0xff] %vm1528, %v5600
      %5633 = vst.msk [vmem:[%s389 + $0xf0] sm:$0xff] %vm1528, %v5601
      %5634 = vst.msk [vmem:[%s389 + $0xf8] sm:$0xff] %vm1528, %v5602
      %5667 = vrot.lane.b32.xlu0 %v2348, 8
      %v5668 = vpop.permute.xlu0 %5667
      %5669 = vrot.lane.b32.xlu0 %v2353, 8
      %v5670 = vpop.permute.xlu0 %5669
      %5671 = vrot.lane.b32.xlu0 %v2358, 8
      %v5672 = vpop.permute.xlu0 %5671
      %5673 = vrot.lane.b32.xlu0 %v2363, 8
      %v5674 = vpop.permute.xlu0 %5673
      %5675 = vrot.lane.b32.xlu0 %v2368, 8
      %v5676 = vpop.permute.xlu0 %5675
      %5677 = vrot.lane.b32.xlu0 %v2373, 8
      %v5678 = vpop.permute.xlu0 %5677
      %5679 = vrot.lane.b32.xlu0 %v2378, 8
      %v5680 = vpop.permute.xlu0 %5679
      %5681 = vrot.lane.b32.xlu0 %v2383, 8
      %v5682 = vpop.permute.xlu0 %5681
      %5683 = vrot.lane.b32.xlu0 %v2388, 8
      %v5684 = vpop.permute.xlu0 %5683
      %5685 = vrot.lane.b32.xlu0 %v2393, 8
      %v5686 = vpop.permute.xlu0 %5685
      %5687 = vrot.lane.b32.xlu0 %v2398, 8
      %v5688 = vpop.permute.xlu0 %5687
      %5689 = vrot.lane.b32.xlu0 %v2403, 8
      %v5690 = vpop.permute.xlu0 %5689
      %5691 = vrot.lane.b32.xlu0 %v2408, 8
      %v5692 = vpop.permute.xlu0 %5691
      %5693 = vrot.lane.b32.xlu0 %v2413, 8
      %v5694 = vpop.permute.xlu0 %5693
      %5695 = vrot.lane.b32.xlu0 %v2418, 8
      %v5696 = vpop.permute.xlu0 %5695
      %5697 = vrot.lane.b32.xlu0 %v2423, 8
      %v5698 = vpop.permute.xlu0 %5697
      %5699 = vrot.lane.b32.xlu0 %v2428, 8
      %v5700 = vpop.permute.xlu0 %5699
      %5701 = vrot.lane.b32.xlu0 %v2433, 8
      %v5702 = vpop.permute.xlu0 %5701
      %5703 = vrot.lane.b32.xlu0 %v2438, 8
      %v5704 = vpop.permute.xlu0 %5703
      %5705 = vrot.lane.b32.xlu0 %v2443, 8
      %v5706 = vpop.permute.xlu0 %5705
      %5707 = vrot.lane.b32.xlu0 %v2448, 8
      %v5708 = vpop.permute.xlu0 %5707
      %5709 = vrot.lane.b32.xlu0 %v2453, 8
      %v5710 = vpop.permute.xlu0 %5709
      %5711 = vrot.lane.b32.xlu0 %v2458, 8
      %v5712 = vpop.permute.xlu0 %5711
      %5713 = vrot.lane.b32.xlu0 %v2463, 8
      %v5714 = vpop.permute.xlu0 %5713
      %5715 = vrot.lane.b32.xlu0 %v2468, 8
      %v5716 = vpop.permute.xlu0 %5715
      %5717 = vrot.lane.b32.xlu0 %v2473, 8
      %v5718 = vpop.permute.xlu0 %5717
      %5719 = vrot.lane.b32.xlu0 %v2478, 8
      %v5720 = vpop.permute.xlu0 %5719
      %5721 = vrot.lane.b32.xlu0 %v2483, 8
      %v5722 = vpop.permute.xlu0 %5721
      %5723 = vrot.lane.b32.xlu0 %v2488, 8
      %v5724 = vpop.permute.xlu0 %5723
      %5725 = vrot.lane.b32.xlu0 %v2493, 8
      %v5726 = vpop.permute.xlu0 %5725
      %5727 = vrot.lane.b32.xlu0 %v2498, 8
      %v5728 = vpop.permute.xlu0 %5727
      %5729 = vrot.lane.b32.xlu0 %v2503, 8
      %v5730 = vpop.permute.xlu0 %5729
      %vm5763 = vcmask 130112
      %5764 = vst.msk [vmem:[%s389] sm:$0xff] %vm5763, %v5668
      %5765 = vst.msk [vmem:[%s389 + $0x8] sm:$0xff] %vm5763, %v5670
      %5766 = vst.msk [vmem:[%s389 + $0x10] sm:$0xff] %vm5763, %v5672
      %5767 = vst.msk [vmem:[%s389 + $0x18] sm:$0xff] %vm5763, %v5674
      %5768 = vst.msk [vmem:[%s389 + $0x20] sm:$0xff] %vm5763, %v5676
      %5769 = vst.msk [vmem:[%s389 + $0x28] sm:$0xff] %vm5763, %v5678
      %5770 = vst.msk [vmem:[%s389 + $0x30] sm:$0xff] %vm5763, %v5680
      %5771 = vst.msk [vmem:[%s389 + $0x38] sm:$0xff] %vm5763, %v5682
      %5772 = vst.msk [vmem:[%s389 + $0x40] sm:$0xff] %vm5763, %v5684
      %5773 = vst.msk [vmem:[%s389 + $0x48] sm:$0xff] %vm5763, %v5686
      %5774 = vst.msk [vmem:[%s389 + $0x50] sm:$0xff] %vm5763, %v5688
      %5775 = vst.msk [vmem:[%s389 + $0x58] sm:$0xff] %vm5763, %v5690
      %5776 = vst.msk [vmem:[%s389 + $0x60] sm:$0xff] %vm5763, %v5692
      %5777 = vst.msk [vmem:[%s389 + $0x68] sm:$0xff] %vm5763, %v5694
      %5778 = vst.msk [vmem:[%s389 + $0x70] sm:$0xff] %vm5763, %v5696
      %5779 = vst.msk [vmem:[%s389 + $0x78] sm:$0xff] %vm5763, %v5698
      %5780 = vst.msk [vmem:[%s389 + $0x80] sm:$0xff] %vm5763, %v5700
      %5781 = vst.msk [vmem:[%s389 + $0x88] sm:$0xff] %vm5763, %v5702
      %5782 = vst.msk [vmem:[%s389 + $0x90] sm:$0xff] %vm5763, %v5704
      %5783 = vst.msk [vmem:[%s389 + $0x98] sm:$0xff] %vm5763, %v5706
      %5784 = vst.msk [vmem:[%s389 + $0xa0] sm:$0xff] %vm5763, %v5708
      %5785 = vst.msk [vmem:[%s389 + $0xa8] sm:$0xff] %vm5763, %v5710
      %5786 = vst.msk [vmem:[%s389 + $0xb0] sm:$0xff] %vm5763, %v5712
      %5787 = vst.msk [vmem:[%s389 + $0xb8] sm:$0xff] %vm5763, %v5714
      %5788 = vst.msk [vmem:[%s389 + $0xc0] sm:$0xff] %vm5763, %v5716
      %5789 = vst.msk [vmem:[%s389 + $0xc8] sm:$0xff] %vm5763, %v5718
      %5790 = vst.msk [vmem:[%s389 + $0xd0] sm:$0xff] %vm5763, %v5720
      %5791 = vst.msk [vmem:[%s389 + $0xd8] sm:$0xff] %vm5763, %v5722
      %5792 = vst.msk [vmem:[%s389 + $0xe0] sm:$0xff] %vm5763, %v5724
      %5793 = vst.msk [vmem:[%s389 + $0xe8] sm:$0xff] %vm5763, %v5726
      %5794 = vst.msk [vmem:[%s389 + $0xf0] sm:$0xff] %vm5763, %v5728
      %5795 = vst.msk [vmem:[%s389 + $0xf8] sm:$0xff] %vm5763, %v5730
      %s5796 = smul.u32 32, %s21
      %p5797 = scmp.lt.s32.totalorder %s5796, 63
      %s5798 = scalar_select %p5797, %s5796, 63
      %s5799 = smul.addr %s5798, 8
      %s5800 = scalar_lea.vmem %s10, %s5799
      // Predicated region
      $region61: #{tpu_custom_call.1} parent=59 // pred_check
        %p5801 = pneg %p259
      $region62: #{tpu_custom_call.1} parent=59 // pred_check_branch
        %5803 = sbr.rel (%p5801) target = $region64
      $region63: #{tpu_custom_call.1} parent=59 // pred_region
        %s5804 = smul.u32 32, %s21
      $region64: #{tpu_custom_call.1} parent=59 // pred_fallthru
        _
    $region60: #{tpu_custom_call.1} parent=5 // pred_fallthru
      _
    %p5805 = scmp.le.s32.totalorder 2, %s16
    // Predicated region
    $region65: #{tpu_custom_call.1} parent=5 // pred_check
      %p5806 = pneg %p5805
    $region66: #{tpu_custom_call.1} parent=5 // pred_check_branch
      %5808 = sbr.rel (%p5806) target = $region68
    $region67: #{tpu_custom_call.1} parent=5 // pred_region
      %s5809 = ssub.s32 %s16, 2
      // Predicated region
      $region69: #{tpu_custom_call.1} parent=67 // pred_check
        %p5810 = pneg %p265
      $region70: #{tpu_custom_call.1} parent=67 // pred_check_branch
        %5812 = sbr.rel (%p5810) target = $region72
      $region71: #{tpu_custom_call.1} parent=67 // pred_region
        %s5813 = smul.u32 32, %s22
        %p5814 = scmp.lt.s32.totalorder %s5813, 63
        %s5815 = scalar_select %p5814, %s5813, 63
        %s5816 = smul.addr %s5815, 8
        %s5817 = scalar_lea.vmem %s10, %s5816
      $region72: #{tpu_custom_call.1} parent=67 // pred_fallthru
        _
    $region68: #{tpu_custom_call.1} parent=5 // pred_fallthru
      _
  $region6: #{tpu_custom_call.1} parent=0 // loop_footer
    %s20 = sadd.s32 1, %s16
  $region7: #{tpu_custom_call.1} parent=0 // loop_footer_branch
    %15 = sbr.rel target = $region3
  $region8: #{tpu_custom_call.1} parent=0 // loop_exit
    _

</llo_original>
